<compile_context>
chip_gen: v6e
topology: v6e:2x2x1
jax: 0.10.0
libtpu: 0.0.40
codegen_flags: <defaults>
</compile_context>

<pallas_src>
import jax
import jax.numpy as jnp
from jax.experimental import pallas as pl
from jax.experimental.pallas import tpu as pltpu

IGNORE_INDEX = -100
PAD_ID = 0
BOS_ID = 0
EOS_ID = 1

# ---- tiny synthetic flan-t5 config (lane-dense trailing dims) ----
VOCAB = 128
D_MODEL = 128
N_HEADS = 4
D_HEAD = 32
HDH = N_HEADS * D_HEAD          # 128
D_FF = 256
NUM_BUCKETS = 32
MAX_DISTANCE = 128
MAX_TXT_LEN = 4
MAX_NEW_TOKENS = 4              # unused in forward(); kept for parity with args

EPS = 1e-6
NEG = -1e9


# ----------------------------------------------------------------------------
# Pallas kernels (one per transformer sub-block)
# ----------------------------------------------------------------------------
def _rms(x, w):
    # T5LayerNorm: RMS norm, no mean subtraction, no bias (f32 elementwise).
    var = jnp.mean(x * x, axis=-1, keepdims=True)
    return x * jax.lax.rsqrt(var + EPS) * w


def _self_attn_kernel(x_ref, ln_ref, wqkv_ref, wo_ref, bias_ref, mask_ref, o_ref):
    """x -> x + SelfAttention(RMSNorm(x)) for one batch element."""
    x = x_ref[0]                                       # (T, D) f32 residual stream
    h = _rms(x, ln_ref[...])
    # fused QKV projection: bf16 MXU operands, f32 accumulation
    qkv = jnp.dot(h.astype(jnp.bfloat16), wqkv_ref[...],
                  preferred_element_type=jnp.float32)  # (T, 3*HDH)
    bias = bias_ref[...][0]                            # (H, T, T) shared rel-pos(+causal) bias
    mask = mask_ref[...][0, 0]                         # (1, T)   additive key-padding mask
    outs = []
    for hh in range(N_HEADS):                          # static unroll; heads split in-kernel
        lo = hh * D_HEAD
        q_h = qkv[:, lo:lo + D_HEAD].astype(jnp.bfloat16)
        k_h = qkv[:, HDH + lo:HDH + lo + D_HEAD].astype(jnp.bfloat16)
        v_h = qkv[:, 2 * HDH + lo:2 * HDH + lo + D_HEAD].astype(jnp.bfloat16)
        # T5 convention: NO 1/sqrt(d_head) scaling
        s = jax.lax.dot_general(q_h, k_h, (((1,), (1,)), ((), ())),
                                preferred_element_type=jnp.float32)      # (T, T)
        s = s + bias[hh] + mask
        m = jnp.max(s, axis=-1, keepdims=True)
        p = jnp.exp(s - m)                                               # f32 softmax math
        p = p * pl.reciprocal(jnp.sum(p, axis=-1, keepdims=True), approx=True)
        outs.append(jnp.dot(p.astype(jnp.bfloat16), v_h,
                            preferred_element_type=jnp.float32))         # (T, dh)
    o = jnp.concatenate(outs, axis=1)                  # (T, HDH) lane-dense
    # output projection + fused residual add
    o_ref[0] = x + jnp.dot(o.astype(jnp.bfloat16), wo_ref[...],
                           preferred_element_type=jnp.float32)


def _cross_attn_kernel(y_ref, enc_ref, enc_ln_ref, ln_ref, wq_ref, wkv_ref,
                       wo_ref, mask_ref, o_ref):
    """y -> y + CrossAttention(RMSNorm(y), RMSNorm_final(enc)) for one batch element.
    The encoder's final RMSNorm is fused here (its only consumer in a 1-layer model)."""
    y = y_ref[0]                                       # (Td, D)
    e = _rms(enc_ref[0], enc_ln_ref[...])              # fused encoder final RMSNorm
    h = _rms(y, ln_ref[...])
    q = jnp.dot(h.astype(jnp.bfloat16), wq_ref[...],
                preferred_element_type=jnp.float32)    # (Td, HDH)
    kv = jnp.dot(e.astype(jnp.bfloat16), wkv_ref[...],
                 preferred_element_type=jnp.float32)   # (Te, 2*HDH) fused K/V
    mask = mask_ref[...][0, 0]                         # (1, Te)
    outs = []
    for hh in range(N_HEADS):
        lo = hh * D_HEAD
        q_h = q[:, lo:lo + D_HEAD].astype(jnp.bfloat16)
        k_h = kv[:, lo:lo + D_HEAD].astype(jnp.bfloat16)
        v_h = kv[:, HDH + lo:HDH + lo + D_HEAD].astype(jnp.bfloat16)
        s = jax.lax.dot_general(q_h, k_h, (((1,), (1,)), ((), ())),
                                preferred_element_type=jnp.float32)      # (Td, Te)
        s = s + mask                                   # T5 cross-attn: no rel-pos bias
        m = jnp.max(s, axis=-1, keepdims=True)
        p = jnp.exp(s - m)
        p = p * pl.reciprocal(jnp.sum(p, axis=-1, keepdims=True), approx=True)
        outs.append(jnp.dot(p.astype(jnp.bfloat16), v_h,
                            preferred_element_type=jnp.float32))
    o = jnp.concatenate(outs, axis=1)
    o_ref[0] = y + jnp.dot(o.astype(jnp.bfloat16), wo_ref[...],
                           preferred_element_type=jnp.float32)


def _ffn_kernel(x_ref, ln_ref, wi_ref, wo_ref, o_ref):
    """x -> x + GatedGeluFFN(RMSNorm(x)); wi packs [wi0 | wi1] into one matmul."""
    x = x_ref[...]                                     # (TM, D)
    h = _rms(x, ln_ref[...])
    hi = jnp.dot(h.astype(jnp.bfloat16), wi_ref[...],
                 preferred_element_type=jnp.float32)   # (TM, 2*D_FF)
    hg = jax.nn.gelu(hi[:, :D_FF])                     # gelu_new (tanh approx), f32
    hl = hi[:, D_FF:]
    o_ref[...] = x + jnp.dot((hg * hl).astype(jnp.bfloat16), wo_ref[...],
                             preferred_element_type=jnp.float32)


def _lm_loss_kernel(y_ref, ln_ref, wlm_ref, labels_ref, nll_ref, cnt_ref):
    """final RMSNorm + lm_head + masked cross-entropy, reduced in-kernel to scalars."""
    y = y_ref[...]                                     # (N, D)
    h = _rms(y, ln_ref[...])
    # flan-t5 (v1.1): untied lm_head, no d_model**-0.5 rescale; keep f32 logits.
    logits = jnp.dot(h.astype(jnp.bfloat16), wlm_ref[...],
                     preferred_element_type=jnp.float32)                 # (N, V)
    labels = labels_ref[...]                           # (N, 1) int32
    m = jnp.max(logits, axis=-1, keepdims=True)
    lse = jnp.log(jnp.sum(jnp.exp(logits - m), axis=-1, keepdims=True)) + m
    iota = jax.lax.broadcasted_iota(jnp.int32, logits.shape, 1)
    tgt = jnp.sum(jnp.where(iota == labels, logits, 0.0), axis=-1, keepdims=True)
    valid = (labels != IGNORE_INDEX).astype(jnp.float32)
    nll_ref[...] = jnp.sum((lse - tgt) * valid, axis=0, keepdims=True)   # (1,1)
    cnt_ref[...] = jnp.sum(valid, axis=0, keepdims=True)                 # (1,1)


# ----------------------------------------------------------------------------
# pallas_call wrappers
# ----------------------------------------------------------------------------
def self_attn_sublayer(x, ln_w, wqkv, wo, bias, mask):
    B, T, D = x.shape
    return pl.pallas_call(
        _self_attn_kernel,
        out_shape=jax.ShapeDtypeStruct((B, T, D), jnp.float32),
        grid=(B,),
        in_specs=[
            pl.BlockSpec((1, T, D), lambda b: (b, 0, 0)),
            pl.BlockSpec((1, D), lambda b: (0, 0)),
            pl.BlockSpec((D, 3 * HDH), lambda b: (0, 0)),
            pl.BlockSpec((HDH, D), lambda b: (0, 0)),
            # rel-pos bias is shared across the batch -> never broadcast in HBM
            pl.BlockSpec((1, N_HEADS, T, T), lambda b: (0, 0, 0, 0)),
            pl.BlockSpec((1, 1, 1, T), lambda b: (b, 0, 0, 0)),
        ],
        out_specs=pl.BlockSpec((1, T, D), lambda b: (b, 0, 0)),
        compiler_params=pltpu.CompilerParams(dimension_semantics=("parallel",)),
    )(x, ln_w, wqkv, wo, bias, mask)


def cross_attn_sublayer(y, enc, enc_ln_w, ln_w, wq, wkv, wo, mask):
    B, Td, D = y.shape
    Te = enc.shape[1]
    return pl.pallas_call(
        _cross_attn_kernel,
        out_shape=jax.ShapeDtypeStruct((B, Td, D), jnp.float32),
        grid=(B,),
        in_specs=[
            pl.BlockSpec((1, Td, D), lambda b: (b, 0, 0)),
            pl.BlockSpec((1, Te, D), lambda b: (b, 0, 0)),
            pl.BlockSpec((1, D), lambda b: (0, 0)),
            pl.BlockSpec((1, D), lambda b: (0, 0)),
            pl.BlockSpec((D, HDH), lambda b: (0, 0)),
            pl.BlockSpec((D, 2 * HDH), lambda b: (0, 0)),
            pl.BlockSpec((HDH, D), lambda b: (0, 0)),
            pl.BlockSpec((1, 1, 1, Te), lambda b: (b, 0, 0, 0)),
        ],
        out_specs=pl.BlockSpec((1, Td, D), lambda b: (b, 0, 0)),
        compiler_params=pltpu.CompilerParams(dimension_semantics=("parallel",)),
    )(y, enc, enc_ln_w, ln_w, wq, wkv, wo, mask)


def ffn_sublayer(x, ln_w, wi, wo):
    B, T, D = x.shape
    M = B * T
    TM = min(M, 256)                    # M-tiled, 'parallel' grid (trivially 1 tile here)
    out = pl.pallas_call(
        _ffn_kernel,
        out_shape=jax.ShapeDtypeStruct((M, D), jnp.float32),
        grid=(pl.cdiv(M, TM),),
        in_specs=[
            pl.BlockSpec((TM, D), lambda i: (i, 0)),
            pl.BlockSpec((1, D), lambda i: (0, 0)),
            pl.BlockSpec((D, 2 * D_FF), lambda i: (0, 0)),
            pl.BlockSpec((D_FF, D), lambda i: (0, 0)),
        ],
        out_specs=pl.BlockSpec((TM, D), lambda i: (i, 0)),
        compiler_params=pltpu.CompilerParams(dimension_semantics=("parallel",)),
    )(x.reshape(M, D), ln_w, wi, wo)
    return out.reshape(B, T, D)


def fused_lm_loss(y, ln_w, w_lm, labels):
    # mean CE over tokens whose label != -100 (torch CrossEntropyLoss semantics).
    # TODO(synk): at real vocab (32128) tile V with a grid reduction / online logsumexp.
    B, Td, D = y.shape
    N = B * Td
    V = w_lm.shape[1]
    nll_sum, valid_cnt = pl.pallas_call(
        _lm_loss_kernel,
        out_shape=(jax.ShapeDtypeStruct((1, 1), jnp.float32),
                   jax.ShapeDtypeStruct((1, 1), jnp.float32)),
        in_specs=[
            pl.BlockSpec((N, D), lambda: (0, 0)),
            pl.BlockSpec((1, D), lambda: (0, 0)),
            pl.BlockSpec((D, V), lambda: (0, 0)),
            pl.BlockSpec((N, 1), lambda: (0, 0)),
        ],
        out_specs=(pl.BlockSpec((1, 1), lambda: (0, 0)),
                   pl.BlockSpec((1, 1), lambda: (0, 0))),
    )(y.reshape(N, D), ln_w, w_lm, labels.reshape(N, 1).astype(jnp.int32))
    return nll_sum[0, 0] / valid_cnt[0, 0]


# ----------------------------------------------------------------------------
# T5 glue (relative position bias, model, forward)
# ----------------------------------------------------------------------------
def _relative_position_bucket(relative_position, bidirectional,
                              num_buckets=NUM_BUCKETS, max_distance=MAX_DISTANCE):
    relative_buckets = jnp.zeros_like(relative_position)
    if bidirectional:
        num_buckets //= 2
        relative_buckets = relative_buckets + (relative_position > 0).astype(jnp.int32) * num_buckets
        relative_position = jnp.abs(relative_position)
    else:
        relative_position = -jnp.minimum(relative_position, 0)
    max_exact = num_buckets // 2
    is_small = relative_position < max_exact
    rel_if_large = max_exact + (
        jnp.log(jnp.maximum(relative_position, 1).astype(jnp.float32) / max_exact)
        / jnp.log(max_distance / max_exact)
        * (num_buckets - max_exact)
    ).astype(jnp.int32)
    rel_if_large = jnp.minimum(rel_if_large, num_buckets - 1)
    return relative_buckets + jnp.where(is_small, relative_position, rel_if_large)


def rel_pos_bias(tq, tk, table, bidirectional):
    ctx = jnp.arange(tq)[:, None]
    mem = jnp.arange(tk)[None, :]
    buckets = _relative_position_bucket(mem - ctx, bidirectional)
    values = table[buckets]                          # (Tq, Tk, H)
    return jnp.transpose(values, (2, 0, 1))[None]    # (1, H, Tq, Tk)


@jax.jit
def t5_model_loss(params, inputs_embeds, attention_mask, labels):
    B, Te, _ = inputs_embeds.shape
    _, Td = labels.shape

    enc_key_mask = (1.0 - attention_mask)[:, None, None, :] * NEG        # (B,1,1,Te)

    # ---------------- encoder (1 pre-norm layer) ----------------
    enc_bias = rel_pos_bias(Te, Te, params['enc_rel_bias'], bidirectional=True)
    x = inputs_embeds
    x = self_attn_sublayer(x, params['enc_ln_attn'], params['enc_self_wqkv'],
                           params['enc_self_wo'], enc_bias, enc_key_mask)
    x = ffn_sublayer(x, params['enc_ln_ff'], params['enc_wi'], params['enc_wo'])
    # (encoder final RMSNorm is fused into the cross-attention kernel below)

    # ---------------- decoder (1 layer) ----------------
    # HF T5 shift-right: decoder_start_token_id=0, -100 -> pad
    shifted = jnp.concatenate([jnp.zeros((B, 1), jnp.int32), labels[:, :-1]], axis=1)
    decoder_input_ids = jnp.where(shifted == IGNORE_INDEX, PAD_ID, shifted)
    y = params['shared'][decoder_input_ids]                               # (B,Td,D)

    dec_bias = rel_pos_bias(Td, Td, params['dec_rel_bias'], bidirectional=False)
    causal = jnp.where(jnp.arange(Td)[None, :] <= jnp.arange(Td)[:, None], 0.0, NEG)
    dec_self_bias = dec_bias + causal[None, None]                         # (1,H,Td,Td)
    dec_zero_mask = jnp.zeros((B, 1, 1, Td), jnp.float32)                 # HF: no dec mask

    y = self_attn_sublayer(y, params['dec_ln_self'], params['dec_self_wqkv'],
                           params['dec_self_wo'], dec_self_bias, dec_zero_mask)
    y = cross_attn_sublayer(y, x, params['enc_ln_final'], params['dec_ln_cross'],
                            params['dec_cross_wq'], params['dec_cross_wkv'],
                            params['dec_cross_wo'], enc_key_mask)
    y = ffn_sublayer(y, params['dec_ln_ff'], params['dec_wi'], params['dec_wo'])

    # final decoder RMSNorm + lm_head + masked cross-entropy in one kernel
    return fused_lm_loss(y, params['dec_ln_final'], params['lm_head'], labels)


def t5_forward(params, desc_ids, question_ids, label_ids, max_txt_len=MAX_TXT_LEN):
    """Mirrors T5.forward(): build bos+desc[:max_txt_len]+question embeddings,
    left-pad with pad-embeddings, left-pad labels with -100, run model, loss."""
    emb = params['shared']
    pad_embeds = emb[PAD_ID][None, :]
    bos_embeds = emb[BOS_ID][None, :]

    batch_size = len(desc_ids)
    batch_inputs_embeds, batch_attention_mask, batch_label_input_ids = [], [], []
    for i in range(batch_size):
        input_ids = desc_ids[i][:max_txt_len] + question_ids[i]
        inputs_embeds = emb[jnp.asarray(input_ids, dtype=jnp.int32)]
        inputs_embeds = jnp.concatenate([bos_embeds, inputs_embeds], axis=0)
        label_input_ids = label_ids[i] + [EOS_ID]
        batch_inputs_embeds.append(inputs_embeds)
        batch_attention_mask.append([1] * inputs_embeds.shape[0])
        batch_label_input_ids.append(label_input_ids)

    max_length = max(x.shape[0] for x in batch_inputs_embeds)
    # pad encoder length up to a multiple of 8 (sublane alignment); the extra
    # left-pads are attention-masked, so the loss is unchanged.
    max_length = ((max_length + 7) // 8) * 8
    for i in range(batch_size):
        pad_length = max_length - batch_inputs_embeds[i].shape[0]
        batch_inputs_embeds[i] = jnp.concatenate(
            [jnp.tile(pad_embeds, (pad_length, 1)), batch_inputs_embeds[i]], axis=0)
        batch_attention_mask[i] = [0] * pad_length + batch_attention_mask[i]

    max_label = max(len(x) for x in batch_label_input_ids)
    for i in range(batch_size):
        pad_length = max_label - len(batch_label_input_ids[i])
        batch_label_input_ids[i] = [IGNORE_INDEX] * pad_length + batch_label_input_ids[i]

    inputs_embeds = jnp.stack(batch_inputs_embeds, axis=0)
    attention_mask = jnp.asarray(batch_attention_mask, dtype=jnp.float32)
    labels = jnp.asarray(batch_label_input_ids, dtype=jnp.int32)

    # TODO(synk): torch.cuda.amp.autocast(bfloat16) is approximated as bf16 weights /
    # bf16 MXU operands with f32 accumulation and f32 elementwise math.
    return t5_model_loss(params, inputs_embeds, attention_mask, labels)


# ----------------------------------------------------------------------------
# Deterministic parameter init (fused weight layouts)
# ----------------------------------------------------------------------------
def init_params(key):
    def nrm(k, shape, scale=0.02, dtype=jnp.float32):
        return (jax.random.normal(k, shape, dtype=jnp.float32) * scale).astype(dtype)

    keys = iter(jax.random.split(key, 32))
    p = {}
    p['shared'] = nrm(next(keys), (VOCAB, D_MODEL))                       # f32 embeddings
    p['lm_head'] = nrm(next(keys), (D_MODEL, VOCAB), dtype=jnp.bfloat16)  # untied head
    p['enc_rel_bias'] = nrm(next(keys), (NUM_BUCKETS, N_HEADS))
    p['dec_rel_bias'] = nrm(next(keys), (NUM_BUCKETS, N_HEADS))
    for prefix in ['enc_self', 'dec_self']:
        p[prefix + '_wqkv'] = nrm(next(keys), (D_MODEL, 3 * HDH), dtype=jnp.bfloat16)
        p[prefix + '_wo'] = nrm(next(keys), (HDH, D_MODEL), dtype=jnp.bfloat16)
    p['dec_cross_wq'] = nrm(next(keys), (D_MODEL, HDH), dtype=jnp.bfloat16)
    p['dec_cross_wkv'] = nrm(next(keys), (D_MODEL, 2 * HDH), dtype=jnp.bfloat16)
    p['dec_cross_wo'] = nrm(next(keys), (HDH, D_MODEL), dtype=jnp.bfloat16)
    for prefix in ['enc', 'dec']:
        p[prefix + '_wi'] = nrm(next(keys), (D_MODEL, 2 * D_FF), dtype=jnp.bfloat16)  # [wi0|wi1]
        p[prefix + '_wo'] = nrm(next(keys), (D_FF, D_MODEL), dtype=jnp.bfloat16)
    for name in ['enc_ln_attn', 'enc_ln_ff', 'enc_ln_final',
                 'dec_ln_self', 'dec_ln_cross', 'dec_ln_ff', 'dec_ln_final']:
        p[name] = jnp.ones((1, D_MODEL), jnp.float32)
    return p


# ----------------------------------------------------------------------------
if __name__ == "__main__":
    key = jax.random.PRNGKey(0)
    kp, kd, kq, kl = jax.random.split(key, 4)
    params = init_params(kp)

    # deterministic "tokenized" samples (variable lengths exercise the padding path)
    batch = 2
    desc_lens = [5, 2]
    question_lens = [2, 3]
    label_lens = [2, 1]
    desc_ids = [[int(v) for v in jax.random.randint(jax.random.fold_in(kd, i),
                                                    (desc_lens[i],), 2, VOCAB)]
                for i in range(batch)]
    question_ids = [[int(v) for v in jax.random.randint(jax.random.fold_in(kq, i),
                                                        (question_lens[i],), 2, VOCAB)]
                    for i in range(batch)]
    label_ids = [[int(v) for v in jax.random.randint(jax.random.fold_in(kl, i),
                                                     (label_lens[i],), 2, VOCAB)]
                 for i in range(batch)]

    loss = t5_forward(params, desc_ids, question_ids, label_ids)
    loss = jax.block_until_ready(loss)
    assert loss.shape == () and bool(jnp.isfinite(loss)), f"bad loss: {loss}"
    print("KERNEL_OK")
</pallas_src>

<mosaic_0001>
module attributes {stable_mosaic.version = 11 : i64} {
  func.func @_self_attn_kernel(%arg0: i32, %arg1: memref<1x8x128xf32, #tpu.memory_space<vmem>>, %arg2: memref<1x128xf32, #tpu.memory_space<vmem>>, %arg3: memref<128x384xbf16, #tpu.memory_space<vmem>>, %arg4: memref<128x128xbf16, #tpu.memory_space<vmem>>, %arg5: memref<1x4x8x8xf32, #tpu.memory_space<vmem>>, %arg6: memref<1x1x1x8xf32, #tpu.memory_space<vmem>>, %arg7: memref<1x8x128xf32, #tpu.memory_space<vmem>>) attributes {dimension_semantics = [#tpu.dimension_semantics<parallel>], iteration_bounds = array<i64: 2>, scalar_prefetch = 0 : i64, scratch_operands = 0 : i64, tpu.core_type = #tpu.core_type<tc>, window_params = [{transform_indices = @transform_0, window_bounds = array<i64: 1, 8, 128>}, {pipeline_mode = #tpu.pipeline_mode<synchronous>, transform_indices = @transform_1, window_bounds = array<i64: 1, 128>}, {pipeline_mode = #tpu.pipeline_mode<synchronous>, transform_indices = @transform_2, window_bounds = array<i64: 128, 384>}, {pipeline_mode = #tpu.pipeline_mode<synchronous>, transform_indices = @transform_3, window_bounds = array<i64: 128, 128>}, {pipeline_mode = #tpu.pipeline_mode<synchronous>, transform_indices = @transform_4, window_bounds = array<i64: 1, 4, 8, 8>}, {transform_indices = @transform_5, window_bounds = array<i64: 1, 1, 1, 8>}, {transform_indices = @transform_6, window_bounds = array<i64: 1, 8, 128>}]} {
    %c0 = arith.constant 0 : index
    %c0_0 = arith.constant 0 : index
    %c0_1 = arith.constant 0 : index
    %0 = vector.load %arg1[%c0, %c0_0, %c0_1] : memref<1x8x128xf32, #tpu.memory_space<vmem>>, vector<1x8x128xf32>
    %1 = vector.shape_cast %0 : vector<1x8x128xf32> to vector<8x128xf32>
    %c0_2 = arith.constant 0 : index
    %c0_3 = arith.constant 0 : index
    %2 = vector.load %arg2[%c0_2, %c0_3] : memref<1x128xf32, #tpu.memory_space<vmem>>, vector<1x128xf32>
    %3 = arith.mulf %1, %1 : vector<8x128xf32>
    %cst = arith.constant dense<0.000000e+00> : vector<8xf32>
    %4 = vector.multi_reduction <add>, %3, %cst [1] : vector<8x128xf32> to vector<8xf32>
    %5 = vector.shape_cast %4 : vector<8xf32> to vector<8x1xf32>
    %cst_4 = arith.constant 1.280000e+02 : f32
    %6 = vector.broadcast %cst_4 : f32 to vector<8x1xf32>
    %7 = arith.divf %5, %6 : vector<8x1xf32>
    %cst_5 = arith.constant 9.99999997E-7 : f32
    %8 = vector.broadcast %cst_5 : f32 to vector<8x1xf32>
    %9 = arith.addf %7, %8 : vector<8x1xf32>
    %10 = math.rsqrt %9 : vector<8x1xf32>
    %11 = vector.broadcast %10 : vector<8x1xf32> to vector<8x128xf32>
    %12 = arith.mulf %1, %11 : vector<8x128xf32>
    %13 = vector.broadcast %2 : vector<1x128xf32> to vector<8x128xf32>
    %14 = arith.mulf %12, %13 : vector<8x128xf32>
    %15 = arith.truncf %14 : vector<8x128xf32> to vector<8x128xbf16>
    %c0_6 = arith.constant 0 : index
    %c0_7 = arith.constant 0 : index
    %16 = vector.load %arg3[%c0_6, %c0_7] : memref<128x384xbf16, #tpu.memory_space<vmem>>, vector<128x384xbf16>
    %cst_8 = arith.constant dense<0.000000e+00> : vector<8x384xf32>
    %17 = tpu.matmul %15, %16, %cst_8 {dimension_numbers = #tpu.dot_dimension_numbers<[1], [0], [0], [1], [0, 0, 1, 1], [], []>} : vector<8x128xbf16>, vector<128x384xbf16>, vector<8x384xf32> -> vector<8x384xf32>
    %c0_9 = arith.constant 0 : index
    %c0_10 = arith.constant 0 : index
    %c0_11 = arith.constant 0 : index
    %c0_12 = arith.constant 0 : index
    %18 = vector.load %arg5[%c0_9, %c0_10, %c0_11, %c0_12] : memref<1x4x8x8xf32, #tpu.memory_space<vmem>>, vector<1x4x8x8xf32>
    %19 = vector.shape_cast %18 : vector<1x4x8x8xf32> to vector<4x8x8xf32>
    %c0_13 = arith.constant 0 : index
    %c0_14 = arith.constant 0 : index
    %c0_15 = arith.constant 0 : index
    %c0_16 = arith.constant 0 : index
    %20 = vector.load %arg6[%c0_13, %c0_14, %c0_15, %c0_16] : memref<1x1x1x8xf32, #tpu.memory_space<vmem>>, vector<1x1x1x8xf32>
    %21 = vector.shape_cast %20 : vector<1x1x1x8xf32> to vector<1x8xf32>
    %22 = vector.extract_strided_slice %17 {offsets = [0, 0], sizes = [8, 32], strides = [1, 1]} : vector<8x384xf32> to vector<8x32xf32>
    %23 = arith.truncf %22 : vector<8x32xf32> to vector<8x32xbf16>
    %24 = vector.extract_strided_slice %17 {offsets = [0, 128], sizes = [8, 32], strides = [1, 1]} : vector<8x384xf32> to vector<8x32xf32>
    %25 = arith.truncf %24 : vector<8x32xf32> to vector<8x32xbf16>
    %26 = vector.extract_strided_slice %17 {offsets = [0, 256], sizes = [8, 32], strides = [1, 1]} : vector<8x384xf32> to vector<8x32xf32>
    %27 = arith.truncf %26 : vector<8x32xf32> to vector<8x32xbf16>
    %cst_17 = arith.constant dense<0.000000e+00> : vector<8x8xf32>
    %28 = tpu.matmul %23, %25, %cst_17 {dimension_numbers = #tpu.dot_dimension_numbers<[1], [1], [0], [0], [0, 0, 1, 0], [], []>} : vector<8x32xbf16>, vector<8x32xbf16>, vector<8x8xf32> -> vector<8x8xf32>
    %29 = vector.extract_strided_slice %19 {offsets = [0, 0, 0], sizes = [1, 8, 8], strides = [1, 1, 1]} : vector<4x8x8xf32> to vector<1x8x8xf32>
    %30 = vector.shape_cast %29 : vector<1x8x8xf32> to vector<8x8xf32>
    %31 = arith.addf %28, %30 : vector<8x8xf32>
    %32 = vector.broadcast %21 : vector<1x8xf32> to vector<8x8xf32>
    %33 = arith.addf %31, %32 : vector<8x8xf32>
    %cst_18 = arith.constant dense<0xFF800000> : vector<8xf32>
    %34 = vector.multi_reduction <maximumf>, %33, %cst_18 [1] : vector<8x8xf32> to vector<8xf32>
    %35 = vector.shape_cast %34 : vector<8xf32> to vector<8x1xf32>
    %36 = vector.broadcast %35 : vector<8x1xf32> to vector<8x8xf32>
    %37 = arith.subf %33, %36 : vector<8x8xf32>
    %38 = math.exp %37 : vector<8x8xf32>
    %cst_19 = arith.constant dense<0.000000e+00> : vector<8xf32>
    %39 = vector.multi_reduction <add>, %38, %cst_19 [1] : vector<8x8xf32> to vector<8xf32>
    %40 = vector.shape_cast %39 : vector<8xf32> to vector<8x1xf32>
    %41 = tpu.reciprocal %40 {approx = true} : vector<8x1xf32> -> vector<8x1xf32>
    %42 = vector.broadcast %41 : vector<8x1xf32> to vector<8x8xf32>
    %43 = arith.mulf %38, %42 : vector<8x8xf32>
    %44 = arith.truncf %43 : vector<8x8xf32> to vector<8x8xbf16>
    %cst_20 = arith.constant dense<0.000000e+00> : vector<8x32xf32>
    %45 = tpu.matmul %44, %27, %cst_20 {dimension_numbers = #tpu.dot_dimension_numbers<[1], [0], [0], [1], [0, 0, 1, 1], [], []>} : vector<8x8xbf16>, vector<8x32xbf16>, vector<8x32xf32> -> vector<8x32xf32>
    %46 = vector.extract_strided_slice %17 {offsets = [0, 32], sizes = [8, 32], strides = [1, 1]} : vector<8x384xf32> to vector<8x32xf32>
    %47 = arith.truncf %46 : vector<8x32xf32> to vector<8x32xbf16>
    %48 = vector.extract_strided_slice %17 {offsets = [0, 160], sizes = [8, 32], strides = [1, 1]} : vector<8x384xf32> to vector<8x32xf32>
    %49 = arith.truncf %48 : vector<8x32xf32> to vector<8x32xbf16>
    %50 = vector.extract_strided_slice %17 {offsets = [0, 288], sizes = [8, 32], strides = [1, 1]} : vector<8x384xf32> to vector<8x32xf32>
    %51 = arith.truncf %50 : vector<8x32xf32> to vector<8x32xbf16>
    %cst_21 = arith.constant dense<0.000000e+00> : vector<8x8xf32>
    %52 = tpu.matmul %47, %49, %cst_21 {dimension_numbers = #tpu.dot_dimension_numbers<[1], [1], [0], [0], [0, 0, 1, 0], [], []>} : vector<8x32xbf16>, vector<8x32xbf16>, vector<8x8xf32> -> vector<8x8xf32>
    %53 = vector.extract_strided_slice %19 {offsets = [1, 0, 0], sizes = [1, 8, 8], strides = [1, 1, 1]} : vector<4x8x8xf32> to vector<1x8x8xf32>
    %54 = vector.shape_cast %53 : vector<1x8x8xf32> to vector<8x8xf32>
    %55 = arith.addf %52, %54 : vector<8x8xf32>
    %56 = vector.broadcast %21 : vector<1x8xf32> to vector<8x8xf32>
    %57 = arith.addf %55, %56 : vector<8x8xf32>
    %cst_22 = arith.constant dense<0xFF800000> : vector<8xf32>
    %58 = vector.multi_reduction <maximumf>, %57, %cst_22 [1] : vector<8x8xf32> to vector<8xf32>
    %59 = vector.shape_cast %58 : vector<8xf32> to vector<8x1xf32>
    %60 = vector.broadcast %59 : vector<8x1xf32> to vector<8x8xf32>
    %61 = arith.subf %57, %60 : vector<8x8xf32>
    %62 = math.exp %61 : vector<8x8xf32>
    %cst_23 = arith.constant dense<0.000000e+00> : vector<8xf32>
    %63 = vector.multi_reduction <add>, %62, %cst_23 [1] : vector<8x8xf32> to vector<8xf32>
    %64 = vector.shape_cast %63 : vector<8xf32> to vector<8x1xf32>
    %65 = tpu.reciprocal %64 {approx = true} : vector<8x1xf32> -> vector<8x1xf32>
    %66 = vector.broadcast %65 : vector<8x1xf32> to vector<8x8xf32>
    %67 = arith.mulf %62, %66 : vector<8x8xf32>
    %68 = arith.truncf %67 : vector<8x8xf32> to vector<8x8xbf16>
    %cst_24 = arith.constant dense<0.000000e+00> : vector<8x32xf32>
    %69 = tpu.matmul %68, %51, %cst_24 {dimension_numbers = #tpu.dot_dimension_numbers<[1], [0], [0], [1], [0, 0, 1, 1], [], []>} : vector<8x8xbf16>, vector<8x32xbf16>, vector<8x32xf32> -> vector<8x32xf32>
    %70 = vector.extract_strided_slice %17 {offsets = [0, 64], sizes = [8, 32], strides = [1, 1]} : vector<8x384xf32> to vector<8x32xf32>
    %71 = arith.truncf %70 : vector<8x32xf32> to vector<8x32xbf16>
    %72 = vector.extract_strided_slice %17 {offsets = [0, 192], sizes = [8, 32], strides = [1, 1]} : vector<8x384xf32> to vector<8x32xf32>
    %73 = arith.truncf %72 : vector<8x32xf32> to vector<8x32xbf16>
    %74 = vector.extract_strided_slice %17 {offsets = [0, 320], sizes = [8, 32], strides = [1, 1]} : vector<8x384xf32> to vector<8x32xf32>
    %75 = arith.truncf %74 : vector<8x32xf32> to vector<8x32xbf16>
    %cst_25 = arith.constant dense<0.000000e+00> : vector<8x8xf32>
    %76 = tpu.matmul %71, %73, %cst_25 {dimension_numbers = #tpu.dot_dimension_numbers<[1], [1], [0], [0], [0, 0, 1, 0], [], []>} : vector<8x32xbf16>, vector<8x32xbf16>, vector<8x8xf32> -> vector<8x8xf32>
    %77 = vector.extract_strided_slice %19 {offsets = [2, 0, 0], sizes = [1, 8, 8], strides = [1, 1, 1]} : vector<4x8x8xf32> to vector<1x8x8xf32>
    %78 = vector.shape_cast %77 : vector<1x8x8xf32> to vector<8x8xf32>
    %79 = arith.addf %76, %78 : vector<8x8xf32>
    %80 = vector.broadcast %21 : vector<1x8xf32> to vector<8x8xf32>
    %81 = arith.addf %79, %80 : vector<8x8xf32>
    %cst_26 = arith.constant dense<0xFF800000> : vector<8xf32>
    %82 = vector.multi_reduction <maximumf>, %81, %cst_26 [1] : vector<8x8xf32> to vector<8xf32>
    %83 = vector.shape_cast %82 : vector<8xf32> to vector<8x1xf32>
    %84 = vector.broadcast %83 : vector<8x1xf32> to vector<8x8xf32>
    %85 = arith.subf %81, %84 : vector<8x8xf32>
    %86 = math.exp %85 : vector<8x8xf32>
    %cst_27 = arith.constant dense<0.000000e+00> : vector<8xf32>
    %87 = vector.multi_reduction <add>, %86, %cst_27 [1] : vector<8x8xf32> to vector<8xf32>
    %88 = vector.shape_cast %87 : vector<8xf32> to vector<8x1xf32>
    %89 = tpu.reciprocal %88 {approx = true} : vector<8x1xf32> -> vector<8x1xf32>
    %90 = vector.broadcast %89 : vector<8x1xf32> to vector<8x8xf32>
    %91 = arith.mulf %86, %90 : vector<8x8xf32>
    %92 = arith.truncf %91 : vector<8x8xf32> to vector<8x8xbf16>
    %cst_28 = arith.constant dense<0.000000e+00> : vector<8x32xf32>
    %93 = tpu.matmul %92, %75, %cst_28 {dimension_numbers = #tpu.dot_dimension_numbers<[1], [0], [0], [1], [0, 0, 1, 1], [], []>} : vector<8x8xbf16>, vector<8x32xbf16>, vector<8x32xf32> -> vector<8x32xf32>
    %94 = vector.extract_strided_slice %17 {offsets = [0, 96], sizes = [8, 32], strides = [1, 1]} : vector<8x384xf32> to vector<8x32xf32>
    %95 = arith.truncf %94 : vector<8x32xf32> to vector<8x32xbf16>
    %96 = vector.extract_strided_slice %17 {offsets = [0, 224], sizes = [8, 32], strides = [1, 1]} : vector<8x384xf32> to vector<8x32xf32>
    %97 = arith.truncf %96 : vector<8x32xf32> to vector<8x32xbf16>
    %98 = vector.extract_strided_slice %17 {offsets = [0, 352], sizes = [8, 32], strides = [1, 1]} : vector<8x384xf32> to vector<8x32xf32>
    %99 = arith.truncf %98 : vector<8x32xf32> to vector<8x32xbf16>
    %cst_29 = arith.constant dense<0.000000e+00> : vector<8x8xf32>
    %100 = tpu.matmul %95, %97, %cst_29 {dimension_numbers = #tpu.dot_dimension_numbers<[1], [1], [0], [0], [0, 0, 1, 0], [], []>} : vector<8x32xbf16>, vector<8x32xbf16>, vector<8x8xf32> -> vector<8x8xf32>
    %101 = vector.extract_strided_slice %19 {offsets = [3, 0, 0], sizes = [1, 8, 8], strides = [1, 1, 1]} : vector<4x8x8xf32> to vector<1x8x8xf32>
    %102 = vector.shape_cast %101 : vector<1x8x8xf32> to vector<8x8xf32>
    %103 = arith.addf %100, %102 : vector<8x8xf32>
    %104 = vector.broadcast %21 : vector<1x8xf32> to vector<8x8xf32>
    %105 = arith.addf %103, %104 : vector<8x8xf32>
    %cst_30 = arith.constant dense<0xFF800000> : vector<8xf32>
    %106 = vector.multi_reduction <maximumf>, %105, %cst_30 [1] : vector<8x8xf32> to vector<8xf32>
    %107 = vector.shape_cast %106 : vector<8xf32> to vector<8x1xf32>
    %108 = vector.broadcast %107 : vector<8x1xf32> to vector<8x8xf32>
    %109 = arith.subf %105, %108 : vector<8x8xf32>
    %110 = math.exp %109 : vector<8x8xf32>
    %cst_31 = arith.constant dense<0.000000e+00> : vector<8xf32>
    %111 = vector.multi_reduction <add>, %110, %cst_31 [1] : vector<8x8xf32> to vector<8xf32>
    %112 = vector.shape_cast %111 : vector<8xf32> to vector<8x1xf32>
    %113 = tpu.reciprocal %112 {approx = true} : vector<8x1xf32> -> vector<8x1xf32>
    %114 = vector.broadcast %113 : vector<8x1xf32> to vector<8x8xf32>
    %115 = arith.mulf %110, %114 : vector<8x8xf32>
    %116 = arith.truncf %115 : vector<8x8xf32> to vector<8x8xbf16>
    %cst_32 = arith.constant dense<0.000000e+00> : vector<8x32xf32>
    %117 = tpu.matmul %116, %99, %cst_32 {dimension_numbers = #tpu.dot_dimension_numbers<[1], [0], [0], [1], [0, 0, 1, 1], [], []>} : vector<8x8xbf16>, vector<8x32xbf16>, vector<8x32xf32> -> vector<8x32xf32>
    %118 = tpu.concatenate %45, %69, %93, %117 in 1 : vector<8x32xf32>, vector<8x32xf32>, vector<8x32xf32>, vector<8x32xf32> -> vector<8x128xf32>
    %119 = arith.truncf %118 : vector<8x128xf32> to vector<8x128xbf16>
    %c0_33 = arith.constant 0 : index
    %c0_34 = arith.constant 0 : index
    %120 = vector.load %arg4[%c0_33, %c0_34] : memref<128x128xbf16, #tpu.memory_space<vmem>>, vector<128x128xbf16>
    %cst_35 = arith.constant dense<0.000000e+00> : vector<8x128xf32>
    %121 = tpu.matmul %119, %120, %cst_35 {dimension_numbers = #tpu.dot_dimension_numbers<[1], [0], [0], [1], [0, 0, 1, 1], [], []>} : vector<8x128xbf16>, vector<128x128xbf16>, vector<8x128xf32> -> vector<8x128xf32>
    %122 = arith.addf %1, %121 : vector<8x128xf32>
    %c0_36 = arith.constant 0 : index
    %c0_37 = arith.constant 0 : index
    %c0_38 = arith.constant 0 : index
    %123 = vector.load %arg7[%c0_36, %c0_37, %c0_38] : memref<1x8x128xf32, #tpu.memory_space<vmem>>, vector<1x8x128xf32>
    %124 = vector.shape_cast %123 : vector<1x8x128xf32> to vector<8x128xf32>
    %125 = vector.shape_cast %122 : vector<8x128xf32> to vector<1x8x128xf32>
    tpu.vector_store %arg7[%c0_36, %c0_37, %c0_38], %125 {strides = array<i32>} : memref<1x8x128xf32, #tpu.memory_space<vmem>>, vector<1x8x128xf32>,
    return
  }
  func.func @transform_0(%arg0: i32) -> (i32, i32, i32) {
    %c0_i32 = arith.constant 0 : i32
    %c0_i32_0 = arith.constant 0 : i32
    %c0_i32_1 = arith.constant 0 : i32
    return %arg0, %c0_i32, %c0_i32_0 : i32, i32, i32
  }
  func.func @transform_1(%arg0: i32) -> (i32, i32) {
    %c0_i32 = arith.constant 0 : i32
    %c0_i32_0 = arith.constant 0 : i32
    %c0_i32_1 = arith.constant 0 : i32
    return %c0_i32, %c0_i32_0 : i32, i32
  }
  func.func @transform_2(%arg0: i32) -> (i32, i32) {
    %c0_i32 = arith.constant 0 : i32
    %c0_i32_0 = arith.constant 0 : i32
    %c0_i32_1 = arith.constant 0 : i32
    return %c0_i32, %c0_i32_0 : i32, i32
  }
  func.func @transform_3(%arg0: i32) -> (i32, i32) {
    %c0_i32 = arith.constant 0 : i32
    %c0_i32_0 = arith.constant 0 : i32
    %c0_i32_1 = arith.constant 0 : i32
    return %c0_i32, %c0_i32_0 : i32, i32
  }
  func.func @transform_4(%arg0: i32) -> (i32, i32, i32, i32) {
    %c0_i32 = arith.constant 0 : i32
    %c0_i32_0 = arith.constant 0 : i32
    %c0_i32_1 = arith.constant 0 : i32
    %c0_i32_2 = arith.constant 0 : i32
    %c0_i32_3 = arith.constant 0 : i32
    return %c0_i32, %c0_i32_0, %c0_i32_1, %c0_i32_2 : i32, i32, i32, i32
  }
  func.func @transform_5(%arg0: i32) -> (i32, i32, i32, i32) {
    %c0_i32 = arith.constant 0 : i32
    %c0_i32_0 = arith.constant 0 : i32
    %c0_i32_1 = arith.constant 0 : i32
    %c0_i32_2 = arith.constant 0 : i32
    return %arg0, %c0_i32, %c0_i32_0, %c0_i32_1 : i32, i32, i32, i32
  }
  func.func @transform_6(%arg0: i32) -> (i32, i32, i32) {
    %c0_i32 = arith.constant 0 : i32
    %c0_i32_0 = arith.constant 0 : i32
    %c0_i32_1 = arith.constant 0 : i32
    return %arg0, %c0_i32, %c0_i32_0 : i32, i32, i32
  }
}

module attributes {stable_mosaic.version = 11 : i64} {
  func.func @_ffn_kernel(%arg0: i32, %arg1: memref<16x128xf32, #tpu.memory_space<vmem>>, %arg2: memref<1x128xf32, #tpu.memory_space<vmem>>, %arg3: memref<128x512xbf16, #tpu.memory_space<vmem>>, %arg4: memref<256x128xbf16, #tpu.memory_space<vmem>>, %arg5: memref<16x128xf32, #tpu.memory_space<vmem>>) attributes {dimension_semantics = [#tpu.dimension_semantics<parallel>], iteration_bounds = array<i64: 1>, scalar_prefetch = 0 : i64, scratch_operands = 0 : i64, tpu.core_type = #tpu.core_type<tc>, window_params = [{transform_indices = @transform_0, window_bounds = array<i64: 16, 128>}, {pipeline_mode = #tpu.pipeline_mode<synchronous>, transform_indices = @transform_1, window_bounds = array<i64: 1, 128>}, {pipeline_mode = #tpu.pipeline_mode<synchronous>, transform_indices = @transform_2, window_bounds = array<i64: 128, 512>}, {pipeline_mode = #tpu.pipeline_mode<synchronous>, transform_indices = @transform_3, window_bounds = array<i64: 256, 128>}, {transform_indices = @transform_4, window_bounds = array<i64: 16, 128>}]} {
    %c0 = arith.constant 0 : index
    %c0_0 = arith.constant 0 : index
    %0 = vector.load %arg1[%c0, %c0_0] : memref<16x128xf32, #tpu.memory_space<vmem>>, vector<16x128xf32>
    %c0_1 = arith.constant 0 : index
    %c0_2 = arith.constant 0 : index
    %1 = vector.load %arg2[%c0_1, %c0_2] : memref<1x128xf32, #tpu.memory_space<vmem>>, vector<1x128xf32>
    %2 = arith.mulf %0, %0 : vector<16x128xf32>
    %cst = arith.constant dense<0.000000e+00> : vector<16xf32>
    %3 = vector.multi_reduction <add>, %2, %cst [1] : vector<16x128xf32> to vector<16xf32>
    %4 = vector.shape_cast %3 : vector<16xf32> to vector<16x1xf32>
    %cst_3 = arith.constant 1.280000e+02 : f32
    %5 = vector.broadcast %cst_3 : f32 to vector<16x1xf32>
    %6 = arith.divf %4, %5 : vector<16x1xf32>
    %cst_4 = arith.constant 9.99999997E-7 : f32
    %7 = vector.broadcast %cst_4 : f32 to vector<16x1xf32>
    %8 = arith.addf %6, %7 : vector<16x1xf32>
    %9 = math.rsqrt %8 : vector<16x1xf32>
    %10 = vector.broadcast %9 : vector<16x1xf32> to vector<16x128xf32>
    %11 = arith.mulf %0, %10 : vector<16x128xf32>
    %12 = vector.broadcast %1 : vector<1x128xf32> to vector<16x128xf32>
    %13 = arith.mulf %11, %12 : vector<16x128xf32>
    %14 = arith.truncf %13 : vector<16x128xf32> to vector<16x128xbf16>
    %c0_5 = arith.constant 0 : index
    %c0_6 = arith.constant 0 : index
    %15 = vector.load %arg3[%c0_5, %c0_6] : memref<128x512xbf16, #tpu.memory_space<vmem>>, vector<128x512xbf16>
    %cst_7 = arith.constant dense<0.000000e+00> : vector<16x512xf32>
    %16 = tpu.matmul %14, %15, %cst_7 {dimension_numbers = #tpu.dot_dimension_numbers<[1], [0], [0], [1], [0, 0, 1, 1], [], []>} : vector<16x128xbf16>, vector<128x512xbf16>, vector<16x512xf32> -> vector<16x512xf32>
    %17 = vector.extract_strided_slice %16 {offsets = [0, 0], sizes = [16, 256], strides = [1, 1]} : vector<16x512xf32> to vector<16x256xf32>
    %18 = arith.mulf %17, %17 : vector<16x256xf32>
    %19 = arith.mulf %17, %18 : vector<16x256xf32>
    %cst_8 = arith.constant 4.471500e-02 : f32
    %20 = vector.broadcast %cst_8 : f32 to vector<16x256xf32>
    %21 = arith.mulf %20, %19 : vector<16x256xf32>
    %22 = arith.addf %17, %21 : vector<16x256xf32>
    %cst_9 = arith.constant 0.797884583 : f32
    %23 = vector.broadcast %cst_9 : f32 to vector<16x256xf32>
    %24 = arith.mulf %23, %22 : vector<16x256xf32>
    %25 = math.tanh %24 : vector<16x256xf32>
    %cst_10 = arith.constant 1.000000e+00 : f32
    %26 = vector.broadcast %cst_10 : f32 to vector<16x256xf32>
    %27 = arith.addf %26, %25 : vector<16x256xf32>
    %cst_11 = arith.constant 5.000000e-01 : f32
    %28 = vector.broadcast %cst_11 : f32 to vector<16x256xf32>
    %29 = arith.mulf %28, %27 : vector<16x256xf32>
    %30 = arith.mulf %17, %29 : vector<16x256xf32>
    %31 = vector.extract_strided_slice %16 {offsets = [0, 256], sizes = [16, 256], strides = [1, 1]} : vector<16x512xf32> to vector<16x256xf32>
    %32 = arith.mulf %30, %31 : vector<16x256xf32>
    %33 = arith.truncf %32 : vector<16x256xf32> to vector<16x256xbf16>
    %c0_12 = arith.constant 0 : index
    %c0_13 = arith.constant 0 : index
    %34 = vector.load %arg4[%c0_12, %c0_13] : memref<256x128xbf16, #tpu.memory_space<vmem>>, vector<256x128xbf16>
    %cst_14 = arith.constant dense<0.000000e+00> : vector<16x128xf32>
    %35 = tpu.matmul %33, %34, %cst_14 {dimension_numbers = #tpu.dot_dimension_numbers<[1], [0], [0], [1], [0, 0, 1, 1], [], []>} : vector<16x256xbf16>, vector<256x128xbf16>, vector<16x128xf32> -> vector<16x128xf32>
    %36 = arith.addf %0, %35 : vector<16x128xf32>
    %c0_15 = arith.constant 0 : index
    %c0_16 = arith.constant 0 : index
    %37 = vector.load %arg5[%c0_15, %c0_16] : memref<16x128xf32, #tpu.memory_space<vmem>>, vector<16x128xf32>
    tpu.vector_store %arg5[%c0_15, %c0_16], %36 {strides = array<i32>} : memref<16x128xf32, #tpu.memory_space<vmem>>, vector<16x128xf32>,
    return
  }
  func.func @transform_0(%arg0: i32) -> (i32, i32) {
    %c0_i32 = arith.constant 0 : i32
    %c0_i32_0 = arith.constant 0 : i32
    return %arg0, %c0_i32 : i32, i32
  }
  func.func @transform_1(%arg0: i32) -> (i32, i32) {
    %c0_i32 = arith.constant 0 : i32
    %c0_i32_0 = arith.constant 0 : i32
    %c0_i32_1 = arith.constant 0 : i32
    return %c0_i32, %c0_i32_0 : i32, i32
  }
  func.func @transform_2(%arg0: i32) -> (i32, i32) {
    %c0_i32 = arith.constant 0 : i32
    %c0_i32_0 = arith.constant 0 : i32
    %c0_i32_1 = arith.constant 0 : i32
    return %c0_i32, %c0_i32_0 : i32, i32
  }
  func.func @transform_3(%arg0: i32) -> (i32, i32) {
    %c0_i32 = arith.constant 0 : i32
    %c0_i32_0 = arith.constant 0 : i32
    %c0_i32_1 = arith.constant 0 : i32
    return %c0_i32, %c0_i32_0 : i32, i32
  }
  func.func @transform_4(%arg0: i32) -> (i32, i32) {
    %c0_i32 = arith.constant 0 : i32
    %c0_i32_0 = arith.constant 0 : i32
    return %arg0, %c0_i32 : i32, i32
  }
}

module attributes {stable_mosaic.version = 11 : i64} {
  func.func @_self_attn_kernel(%arg0: i32, %arg1: memref<1x3x128xf32, #tpu.memory_space<vmem>>, %arg2: memref<1x128xf32, #tpu.memory_space<vmem>>, %arg3: memref<128x384xbf16, #tpu.memory_space<vmem>>, %arg4: memref<128x128xbf16, #tpu.memory_space<vmem>>, %arg5: memref<1x4x3x3xf32, #tpu.memory_space<vmem>>, %arg6: memref<1x1x1x3xf32, #tpu.memory_space<vmem>>, %arg7: memref<1x3x128xf32, #tpu.memory_space<vmem>>) attributes {dimension_semantics = [#tpu.dimension_semantics<parallel>], iteration_bounds = array<i64: 2>, scalar_prefetch = 0 : i64, scratch_operands = 0 : i64, tpu.core_type = #tpu.core_type<tc>, window_params = [{transform_indices = @transform_0, window_bounds = array<i64: 1, 3, 128>}, {pipeline_mode = #tpu.pipeline_mode<synchronous>, transform_indices = @transform_1, window_bounds = array<i64: 1, 128>}, {pipeline_mode = #tpu.pipeline_mode<synchronous>, transform_indices = @transform_2, window_bounds = array<i64: 128, 384>}, {pipeline_mode = #tpu.pipeline_mode<synchronous>, transform_indices = @transform_3, window_bounds = array<i64: 128, 128>}, {pipeline_mode = #tpu.pipeline_mode<synchronous>, transform_indices = @transform_4, window_bounds = array<i64: 1, 4, 3, 3>}, {transform_indices = @transform_5, window_bounds = array<i64: 1, 1, 1, 3>}, {transform_indices = @transform_6, window_bounds = array<i64: 1, 3, 128>}]} {
    %c0 = arith.constant 0 : index
    %c0_0 = arith.constant 0 : index
    %c0_1 = arith.constant 0 : index
    %0 = vector.load %arg1[%c0, %c0_0, %c0_1] : memref<1x3x128xf32, #tpu.memory_space<vmem>>, vector<1x3x128xf32>
    %1 = vector.shape_cast %0 : vector<1x3x128xf32> to vector<3x128xf32>
    %c0_2 = arith.constant 0 : index
    %c0_3 = arith.constant 0 : index
    %2 = vector.load %arg2[%c0_2, %c0_3] : memref<1x128xf32, #tpu.memory_space<vmem>>, vector<1x128xf32>
    %3 = arith.mulf %1, %1 : vector<3x128xf32>
    %cst = arith.constant dense<0.000000e+00> : vector<3xf32>
    %4 = vector.multi_reduction <add>, %3, %cst [1] : vector<3x128xf32> to vector<3xf32>
    %5 = vector.shape_cast %4 : vector<3xf32> to vector<3x1xf32>
    %cst_4 = arith.constant 1.280000e+02 : f32
    %6 = vector.broadcast %cst_4 : f32 to vector<3x1xf32>
    %7 = arith.divf %5, %6 : vector<3x1xf32>
    %cst_5 = arith.constant 9.99999997E-7 : f32
    %8 = vector.broadcast %cst_5 : f32 to vector<3x1xf32>
    %9 = arith.addf %7, %8 : vector<3x1xf32>
    %10 = math.rsqrt %9 : vector<3x1xf32>
    %11 = vector.broadcast %10 : vector<3x1xf32> to vector<3x128xf32>
    %12 = arith.mulf %1, %11 : vector<3x128xf32>
    %13 = vector.broadcast %2 : vector<1x128xf32> to vector<3x128xf32>
    %14 = arith.mulf %12, %13 : vector<3x128xf32>
    %15 = arith.truncf %14 : vector<3x128xf32> to vector<3x128xbf16>
    %c0_6 = arith.constant 0 : index
    %c0_7 = arith.constant 0 : index
    %16 = vector.load %arg3[%c0_6, %c0_7] : memref<128x384xbf16, #tpu.memory_space<vmem>>, vector<128x384xbf16>
    %cst_8 = arith.constant dense<0.000000e+00> : vector<3x384xf32>
    %17 = tpu.matmul %15, %16, %cst_8 {dimension_numbers = #tpu.dot_dimension_numbers<[1], [0], [0], [1], [0, 0, 1, 1], [], []>} : vector<3x128xbf16>, vector<128x384xbf16>, vector<3x384xf32> -> vector<3x384xf32>
    %c0_9 = arith.constant 0 : index
    %c0_10 = arith.constant 0 : index
    %c0_11 = arith.constant 0 : index
    %c0_12 = arith.constant 0 : index
    %18 = vector.load %arg5[%c0_9, %c0_10, %c0_11, %c0_12] : memref<1x4x3x3xf32, #tpu.memory_space<vmem>>, vector<1x4x3x3xf32>
    %19 = vector.shape_cast %18 : vector<1x4x3x3xf32> to vector<4x3x3xf32>
    %c0_13 = arith.constant 0 : index
    %c0_14 = arith.constant 0 : index
    %c0_15 = arith.constant 0 : index
    %c0_16 = arith.constant 0 : index
    %20 = vector.load %arg6[%c0_13, %c0_14, %c0_15, %c0_16] : memref<1x1x1x3xf32, #tpu.memory_space<vmem>>, vector<1x1x1x3xf32>
    %21 = vector.shape_cast %20 : vector<1x1x1x3xf32> to vector<1x3xf32>
    %22 = vector.extract_strided_slice %17 {offsets = [0, 0], sizes = [3, 32], strides = [1, 1]} : vector<3x384xf32> to vector<3x32xf32>
    %23 = arith.truncf %22 : vector<3x32xf32> to vector<3x32xbf16>
    %24 = vector.extract_strided_slice %17 {offsets = [0, 128], sizes = [3, 32], strides = [1, 1]} : vector<3x384xf32> to vector<3x32xf32>
    %25 = arith.truncf %24 : vector<3x32xf32> to vector<3x32xbf16>
    %26 = vector.extract_strided_slice %17 {offsets = [0, 256], sizes = [3, 32], strides = [1, 1]} : vector<3x384xf32> to vector<3x32xf32>
    %27 = arith.truncf %26 : vector<3x32xf32> to vector<3x32xbf16>
    %cst_17 = arith.constant dense<0.000000e+00> : vector<3x3xf32>
    %28 = tpu.matmul %23, %25, %cst_17 {dimension_numbers = #tpu.dot_dimension_numbers<[1], [1], [0], [0], [0, 0, 1, 0], [], []>} : vector<3x32xbf16>, vector<3x32xbf16>, vector<3x3xf32> -> vector<3x3xf32>
    %29 = vector.extract_strided_slice %19 {offsets = [0, 0, 0], sizes = [1, 3, 3], strides = [1, 1, 1]} : vector<4x3x3xf32> to vector<1x3x3xf32>
    %30 = vector.shape_cast %29 : vector<1x3x3xf32> to vector<3x3xf32>
    %31 = arith.addf %28, %30 : vector<3x3xf32>
    %32 = vector.broadcast %21 : vector<1x3xf32> to vector<3x3xf32>
    %33 = arith.addf %31, %32 : vector<3x3xf32>
    %cst_18 = arith.constant dense<0xFF800000> : vector<3xf32>
    %34 = vector.multi_reduction <maximumf>, %33, %cst_18 [1] : vector<3x3xf32> to vector<3xf32>
    %35 = vector.shape_cast %34 : vector<3xf32> to vector<3x1xf32>
    %36 = vector.broadcast %35 : vector<3x1xf32> to vector<3x3xf32>
    %37 = arith.subf %33, %36 : vector<3x3xf32>
    %38 = math.exp %37 : vector<3x3xf32>
    %cst_19 = arith.constant dense<0.000000e+00> : vector<3xf32>
    %39 = vector.multi_reduction <add>, %38, %cst_19 [1] : vector<3x3xf32> to vector<3xf32>
    %40 = vector.shape_cast %39 : vector<3xf32> to vector<3x1xf32>
    %41 = tpu.reciprocal %40 {approx = true} : vector<3x1xf32> -> vector<3x1xf32>
    %42 = vector.broadcast %41 : vector<3x1xf32> to vector<3x3xf32>
    %43 = arith.mulf %38, %42 : vector<3x3xf32>
    %44 = arith.truncf %43 : vector<3x3xf32> to vector<3x3xbf16>
    %cst_20 = arith.constant dense<0.000000e+00> : vector<3x32xf32>
    %45 = tpu.matmul %44, %27, %cst_20 {dimension_numbers = #tpu.dot_dimension_numbers<[1], [0], [0], [1], [0, 0, 1, 1], [], []>} : vector<3x3xbf16>, vector<3x32xbf16>, vector<3x32xf32> -> vector<3x32xf32>
    %46 = vector.extract_strided_slice %17 {offsets = [0, 32], sizes = [3, 32], strides = [1, 1]} : vector<3x384xf32> to vector<3x32xf32>
    %47 = arith.truncf %46 : vector<3x32xf32> to vector<3x32xbf16>
    %48 = vector.extract_strided_slice %17 {offsets = [0, 160], sizes = [3, 32], strides = [1, 1]} : vector<3x384xf32> to vector<3x32xf32>
    %49 = arith.truncf %48 : vector<3x32xf32> to vector<3x32xbf16>
    %50 = vector.extract_strided_slice %17 {offsets = [0, 288], sizes = [3, 32], strides = [1, 1]} : vector<3x384xf32> to vector<3x32xf32>
    %51 = arith.truncf %50 : vector<3x32xf32> to vector<3x32xbf16>
    %cst_21 = arith.constant dense<0.000000e+00> : vector<3x3xf32>
    %52 = tpu.matmul %47, %49, %cst_21 {dimension_numbers = #tpu.dot_dimension_numbers<[1], [1], [0], [0], [0, 0, 1, 0], [], []>} : vector<3x32xbf16>, vector<3x32xbf16>, vector<3x3xf32> -> vector<3x3xf32>
    %53 = vector.extract_strided_slice %19 {offsets = [1, 0, 0], sizes = [1, 3, 3], strides = [1, 1, 1]} : vector<4x3x3xf32> to vector<1x3x3xf32>
    %54 = vector.shape_cast %53 : vector<1x3x3xf32> to vector<3x3xf32>
    %55 = arith.addf %52, %54 : vector<3x3xf32>
    %56 = vector.broadcast %21 : vector<1x3xf32> to vector<3x3xf32>
    %57 = arith.addf %55, %56 : vector<3x3xf32>
    %cst_22 = arith.constant dense<0xFF800000> : vector<3xf32>
    %58 = vector.multi_reduction <maximumf>, %57, %cst_22 [1] : vector<3x3xf32> to vector<3xf32>
    %59 = vector.shape_cast %58 : vector<3xf32> to vector<3x1xf32>
    %60 = vector.broadcast %59 : vector<3x1xf32> to vector<3x3xf32>
    %61 = arith.subf %57, %60 : vector<3x3xf32>
    %62 = math.exp %61 : vector<3x3xf32>
    %cst_23 = arith.constant dense<0.000000e+00> : vector<3xf32>
    %63 = vector.multi_reduction <add>, %62, %cst_23 [1] : vector<3x3xf32> to vector<3xf32>
    %64 = vector.shape_cast %63 : vector<3xf32> to vector<3x1xf32>
    %65 = tpu.reciprocal %64 {approx = true} : vector<3x1xf32> -> vector<3x1xf32>
    %66 = vector.broadcast %65 : vector<3x1xf32> to vector<3x3xf32>
    %67 = arith.mulf %62, %66 : vector<3x3xf32>
    %68 = arith.truncf %67 : vector<3x3xf32> to vector<3x3xbf16>
    %cst_24 = arith.constant dense<0.000000e+00> : vector<3x32xf32>
    %69 = tpu.matmul %68, %51, %cst_24 {dimension_numbers = #tpu.dot_dimension_numbers<[1], [0], [0], [1], [0, 0, 1, 1], [], []>} : vector<3x3xbf16>, vector<3x32xbf16>, vector<3x32xf32> -> vector<3x32xf32>
    %70 = vector.extract_strided_slice %17 {offsets = [0, 64], sizes = [3, 32], strides = [1, 1]} : vector<3x384xf32> to vector<3x32xf32>
    %71 = arith.truncf %70 : vector<3x32xf32> to vector<3x32xbf16>
    %72 = vector.extract_strided_slice %17 {offsets = [0, 192], sizes = [3, 32], strides = [1, 1]} : vector<3x384xf32> to vector<3x32xf32>
    %73 = arith.truncf %72 : vector<3x32xf32> to vector<3x32xbf16>
    %74 = vector.extract_strided_slice %17 {offsets = [0, 320], sizes = [3, 32], strides = [1, 1]} : vector<3x384xf32> to vector<3x32xf32>
    %75 = arith.truncf %74 : vector<3x32xf32> to vector<3x32xbf16>
    %cst_25 = arith.constant dense<0.000000e+00> : vector<3x3xf32>
    %76 = tpu.matmul %71, %73, %cst_25 {dimension_numbers = #tpu.dot_dimension_numbers<[1], [1], [0], [0], [0, 0, 1, 0], [], []>} : vector<3x32xbf16>, vector<3x32xbf16>, vector<3x3xf32> -> vector<3x3xf32>
    %77 = vector.extract_strided_slice %19 {offsets = [2, 0, 0], sizes = [1, 3, 3], strides = [1, 1, 1]} : vector<4x3x3xf32> to vector<1x3x3xf32>
    %78 = vector.shape_cast %77 : vector<1x3x3xf32> to vector<3x3xf32>
    %79 = arith.addf %76, %78 : vector<3x3xf32>
    %80 = vector.broadcast %21 : vector<1x3xf32> to vector<3x3xf32>
    %81 = arith.addf %79, %80 : vector<3x3xf32>
    %cst_26 = arith.constant dense<0xFF800000> : vector<3xf32>
    %82 = vector.multi_reduction <maximumf>, %81, %cst_26 [1] : vector<3x3xf32> to vector<3xf32>
    %83 = vector.shape_cast %82 : vector<3xf32> to vector<3x1xf32>
    %84 = vector.broadcast %83 : vector<3x1xf32> to vector<3x3xf32>
    %85 = arith.subf %81, %84 : vector<3x3xf32>
    %86 = math.exp %85 : vector<3x3xf32>
    %cst_27 = arith.constant dense<0.000000e+00> : vector<3xf32>
    %87 = vector.multi_reduction <add>, %86, %cst_27 [1] : vector<3x3xf32> to vector<3xf32>
    %88 = vector.shape_cast %87 : vector<3xf32> to vector<3x1xf32>
    %89 = tpu.reciprocal %88 {approx = true} : vector<3x1xf32> -> vector<3x1xf32>
    %90 = vector.broadcast %89 : vector<3x1xf32> to vector<3x3xf32>
    %91 = arith.mulf %86, %90 : vector<3x3xf32>
    %92 = arith.truncf %91 : vector<3x3xf32> to vector<3x3xbf16>
    %cst_28 = arith.constant dense<0.000000e+00> : vector<3x32xf32>
    %93 = tpu.matmul %92, %75, %cst_28 {dimension_numbers = #tpu.dot_dimension_numbers<[1], [0], [0], [1], [0, 0, 1, 1], [], []>} : vector<3x3xbf16>, vector<3x32xbf16>, vector<3x32xf32> -> vector<3x32xf32>
    %94 = vector.extract_strided_slice %17 {offsets = [0, 96], sizes = [3, 32], strides = [1, 1]} : vector<3x384xf32> to vector<3x32xf32>
    %95 = arith.truncf %94 : vector<3x32xf32> to vector<3x32xbf16>
    %96 = vector.extract_strided_slice %17 {offsets = [0, 224], sizes = [3, 32], strides = [1, 1]} : vector<3x384xf32> to vector<3x32xf32>
    %97 = arith.truncf %96 : vector<3x32xf32> to vector<3x32xbf16>
    %98 = vector.extract_strided_slice %17 {offsets = [0, 352], sizes = [3, 32], strides = [1, 1]} : vector<3x384xf32> to vector<3x32xf32>
    %99 = arith.truncf %98 : vector<3x32xf32> to vector<3x32xbf16>
    %cst_29 = arith.constant dense<0.000000e+00> : vector<3x3xf32>
    %100 = tpu.matmul %95, %97, %cst_29 {dimension_numbers = #tpu.dot_dimension_numbers<[1], [1], [0], [0], [0, 0, 1, 0], [], []>} : vector<3x32xbf16>, vector<3x32xbf16>, vector<3x3xf32> -> vector<3x3xf32>
    %101 = vector.extract_strided_slice %19 {offsets = [3, 0, 0], sizes = [1, 3, 3], strides = [1, 1, 1]} : vector<4x3x3xf32> to vector<1x3x3xf32>
    %102 = vector.shape_cast %101 : vector<1x3x3xf32> to vector<3x3xf32>
    %103 = arith.addf %100, %102 : vector<3x3xf32>
    %104 = vector.broadcast %21 : vector<1x3xf32> to vector<3x3xf32>
    %105 = arith.addf %103, %104 : vector<3x3xf32>
    %cst_30 = arith.constant dense<0xFF800000> : vector<3xf32>
    %106 = vector.multi_reduction <maximumf>, %105, %cst_30 [1] : vector<3x3xf32> to vector<3xf32>
    %107 = vector.shape_cast %106 : vector<3xf32> to vector<3x1xf32>
    %108 = vector.broadcast %107 : vector<3x1xf32> to vector<3x3xf32>
    %109 = arith.subf %105, %108 : vector<3x3xf32>
    %110 = math.exp %109 : vector<3x3xf32>
    %cst_31 = arith.constant dense<0.000000e+00> : vector<3xf32>
    %111 = vector.multi_reduction <add>, %110, %cst_31 [1] : vector<3x3xf32> to vector<3xf32>
    %112 = vector.shape_cast %111 : vector<3xf32> to vector<3x1xf32>
    %113 = tpu.reciprocal %112 {approx = true} : vector<3x1xf32> -> vector<3x1xf32>
    %114 = vector.broadcast %113 : vector<3x1xf32> to vector<3x3xf32>
    %115 = arith.mulf %110, %114 : vector<3x3xf32>
    %116 = arith.truncf %115 : vector<3x3xf32> to vector<3x3xbf16>
    %cst_32 = arith.constant dense<0.000000e+00> : vector<3x32xf32>
    %117 = tpu.matmul %116, %99, %cst_32 {dimension_numbers = #tpu.dot_dimension_numbers<[1], [0], [0], [1], [0, 0, 1, 1], [], []>} : vector<3x3xbf16>, vector<3x32xbf16>, vector<3x32xf32> -> vector<3x32xf32>
    %118 = tpu.concatenate %45, %69, %93, %117 in 1 : vector<3x32xf32>, vector<3x32xf32>, vector<3x32xf32>, vector<3x32xf32> -> vector<3x128xf32>
    %119 = arith.truncf %118 : vector<3x128xf32> to vector<3x128xbf16>
    %c0_33 = arith.constant 0 : index
    %c0_34 = arith.constant 0 : index
    %120 = vector.load %arg4[%c0_33, %c0_34] : memref<128x128xbf16, #tpu.memory_space<vmem>>, vector<128x128xbf16>
    %cst_35 = arith.constant dense<0.000000e+00> : vector<3x128xf32>
    %121 = tpu.matmul %119, %120, %cst_35 {dimension_numbers = #tpu.dot_dimension_numbers<[1], [0], [0], [1], [0, 0, 1, 1], [], []>} : vector<3x128xbf16>, vector<128x128xbf16>, vector<3x128xf32> -> vector<3x128xf32>
    %122 = arith.addf %1, %121 : vector<3x128xf32>
    %c0_36 = arith.constant 0 : index
    %c0_37 = arith.constant 0 : index
    %c0_38 = arith.constant 0 : index
    %123 = vector.load %arg7[%c0_36, %c0_37, %c0_38] : memref<1x3x128xf32, #tpu.memory_space<vmem>>, vector<1x3x128xf32>
    %124 = vector.shape_cast %123 : vector<1x3x128xf32> to vector<3x128xf32>
    %125 = vector.shape_cast %122 : vector<3x128xf32> to vector<1x3x128xf32>
    tpu.vector_store %arg7[%c0_36, %c0_37, %c0_38], %125 {strides = array<i32>} : memref<1x3x128xf32, #tpu.memory_space<vmem>>, vector<1x3x128xf32>,
    return
  }
  func.func @transform_0(%arg0: i32) -> (i32, i32, i32) {
    %c0_i32 = arith.constant 0 : i32
    %c0_i32_0 = arith.constant 0 : i32
    %c0_i32_1 = arith.constant 0 : i32
    return %arg0, %c0_i32, %c0_i32_0 : i32, i32, i32
  }
  func.func @transform_1(%arg0: i32) -> (i32, i32) {
    %c0_i32 = arith.constant 0 : i32
    %c0_i32_0 = arith.constant 0 : i32
    %c0_i32_1 = arith.constant 0 : i32
    return %c0_i32, %c0_i32_0 : i32, i32
  }
  func.func @transform_2(%arg0: i32) -> (i32, i32) {
    %c0_i32 = arith.constant 0 : i32
    %c0_i32_0 = arith.constant 0 : i32
    %c0_i32_1 = arith.constant 0 : i32
    return %c0_i32, %c0_i32_0 : i32, i32
  }
  func.func @transform_3(%arg0: i32) -> (i32, i32) {
    %c0_i32 = arith.constant 0 : i32
    %c0_i32_0 = arith.constant 0 : i32
    %c0_i32_1 = arith.constant 0 : i32
    return %c0_i32, %c0_i32_0 : i32, i32
  }
  func.func @transform_4(%arg0: i32) -> (i32, i32, i32, i32) {
    %c0_i32 = arith.constant 0 : i32
    %c0_i32_0 = arith.constant 0 : i32
    %c0_i32_1 = arith.constant 0 : i32
    %c0_i32_2 = arith.constant 0 : i32
    %c0_i32_3 = arith.constant 0 : i32
    return %c0_i32, %c0_i32_0, %c0_i32_1, %c0_i32_2 : i32, i32, i32, i32
  }
  func.func @transform_5(%arg0: i32) -> (i32, i32, i32, i32) {
    %c0_i32 = arith.constant 0 : i32
    %c0_i32_0 = arith.constant 0 : i32
    %c0_i32_1 = arith.constant 0 : i32
    %c0_i32_2 = arith.constant 0 : i32
    return %arg0, %c0_i32, %c0_i32_0, %c0_i32_1 : i32, i32, i32, i32
  }
  func.func @transform_6(%arg0: i32) -> (i32, i32, i32) {
    %c0_i32 = arith.constant 0 : i32
    %c0_i32_0 = arith.constant 0 : i32
    %c0_i32_1 = arith.constant 0 : i32
    return %arg0, %c0_i32, %c0_i32_0 : i32, i32, i32
  }
}

module attributes {stable_mosaic.version = 11 : i64} {
  func.func @_cross_attn_kernel(%arg0: i32, %arg1: memref<1x3x128xf32, #tpu.memory_space<vmem>>, %arg2: memref<1x8x128xf32, #tpu.memory_space<vmem>>, %arg3: memref<1x128xf32, #tpu.memory_space<vmem>>, %arg4: memref<1x128xf32, #tpu.memory_space<vmem>>, %arg5: memref<128x128xbf16, #tpu.memory_space<vmem>>, %arg6: memref<128x256xbf16, #tpu.memory_space<vmem>>, %arg7: memref<128x128xbf16, #tpu.memory_space<vmem>>, %arg8: memref<1x1x1x8xf32, #tpu.memory_space<vmem>>, %arg9: memref<1x3x128xf32, #tpu.memory_space<vmem>>) attributes {dimension_semantics = [#tpu.dimension_semantics<parallel>], iteration_bounds = array<i64: 2>, scalar_prefetch = 0 : i64, scratch_operands = 0 : i64, tpu.core_type = #tpu.core_type<tc>, window_params = [{transform_indices = @transform_0, window_bounds = array<i64: 1, 3, 128>}, {transform_indices = @transform_1, window_bounds = array<i64: 1, 8, 128>}, {pipeline_mode = #tpu.pipeline_mode<synchronous>, transform_indices = @transform_2, window_bounds = array<i64: 1, 128>}, {pipeline_mode = #tpu.pipeline_mode<synchronous>, transform_indices = @transform_3, window_bounds = array<i64: 1, 128>}, {pipeline_mode = #tpu.pipeline_mode<synchronous>, transform_indices = @transform_4, window_bounds = array<i64: 128, 128>}, {pipeline_mode = #tpu.pipeline_mode<synchronous>, transform_indices = @transform_5, window_bounds = array<i64: 128, 256>}, {pipeline_mode = #tpu.pipeline_mode<synchronous>, transform_indices = @transform_6, window_bounds = array<i64: 128, 128>}, {transform_indices = @transform_7, window_bounds = array<i64: 1, 1, 1, 8>}, {transform_indices = @transform_8, window_bounds = array<i64: 1, 3, 128>}]} {
    %c0 = arith.constant 0 : index
    %c0_0 = arith.constant 0 : index
    %c0_1 = arith.constant 0 : index
    %0 = vector.load %arg1[%c0, %c0_0, %c0_1] : memref<1x3x128xf32, #tpu.memory_space<vmem>>, vector<1x3x128xf32>
    %1 = vector.shape_cast %0 : vector<1x3x128xf32> to vector<3x128xf32>
    %c0_2 = arith.constant 0 : index
    %c0_3 = arith.constant 0 : index
    %c0_4 = arith.constant 0 : index
    %2 = vector.load %arg2[%c0_2, %c0_3, %c0_4] : memref<1x8x128xf32, #tpu.memory_space<vmem>>, vector<1x8x128xf32>
    %3 = vector.shape_cast %2 : vector<1x8x128xf32> to vector<8x128xf32>
    %c0_5 = arith.constant 0 : index
    %c0_6 = arith.constant 0 : index
    %4 = vector.load %arg3[%c0_5, %c0_6] : memref<1x128xf32, #tpu.memory_space<vmem>>, vector<1x128xf32>
    %5 = arith.mulf %3, %3 : vector<8x128xf32>
    %cst = arith.constant dense<0.000000e+00> : vector<8xf32>
    %6 = vector.multi_reduction <add>, %5, %cst [1] : vector<8x128xf32> to vector<8xf32>
    %7 = vector.shape_cast %6 : vector<8xf32> to vector<8x1xf32>
    %cst_7 = arith.constant 1.280000e+02 : f32
    %8 = vector.broadcast %cst_7 : f32 to vector<8x1xf32>
    %9 = arith.divf %7, %8 : vector<8x1xf32>
    %cst_8 = arith.constant 9.99999997E-7 : f32
    %10 = vector.broadcast %cst_8 : f32 to vector<8x1xf32>
    %11 = arith.addf %9, %10 : vector<8x1xf32>
    %12 = math.rsqrt %11 : vector<8x1xf32>
    %13 = vector.broadcast %12 : vector<8x1xf32> to vector<8x128xf32>
    %14 = arith.mulf %3, %13 : vector<8x128xf32>
    %15 = vector.broadcast %4 : vector<1x128xf32> to vector<8x128xf32>
    %16 = arith.mulf %14, %15 : vector<8x128xf32>
    %c0_9 = arith.constant 0 : index
    %c0_10 = arith.constant 0 : index
    %17 = vector.load %arg4[%c0_9, %c0_10] : memref<1x128xf32, #tpu.memory_space<vmem>>, vector<1x128xf32>
    %18 = arith.mulf %1, %1 : vector<3x128xf32>
    %cst_11 = arith.constant dense<0.000000e+00> : vector<3xf32>
    %19 = vector.multi_reduction <add>, %18, %cst_11 [1] : vector<3x128xf32> to vector<3xf32>
    %20 = vector.shape_cast %19 : vector<3xf32> to vector<3x1xf32>
    %cst_12 = arith.constant 1.280000e+02 : f32
    %21 = vector.broadcast %cst_12 : f32 to vector<3x1xf32>
    %22 = arith.divf %20, %21 : vector<3x1xf32>
    %cst_13 = arith.constant 9.99999997E-7 : f32
    %23 = vector.broadcast %cst_13 : f32 to vector<3x1xf32>
    %24 = arith.addf %22, %23 : vector<3x1xf32>
    %25 = math.rsqrt %24 : vector<3x1xf32>
    %26 = vector.broadcast %25 : vector<3x1xf32> to vector<3x128xf32>
    %27 = arith.mulf %1, %26 : vector<3x128xf32>
    %28 = vector.broadcast %17 : vector<1x128xf32> to vector<3x128xf32>
    %29 = arith.mulf %27, %28 : vector<3x128xf32>
    %30 = arith.truncf %29 : vector<3x128xf32> to vector<3x128xbf16>
    %c0_14 = arith.constant 0 : index
    %c0_15 = arith.constant 0 : index
    %31 = vector.load %arg5[%c0_14, %c0_15] : memref<128x128xbf16, #tpu.memory_space<vmem>>, vector<128x128xbf16>
    %cst_16 = arith.constant dense<0.000000e+00> : vector<3x128xf32>
    %32 = tpu.matmul %30, %31, %cst_16 {dimension_numbers = #tpu.dot_dimension_numbers<[1], [0], [0], [1], [0, 0, 1, 1], [], []>} : vector<3x128xbf16>, vector<128x128xbf16>, vector<3x128xf32> -> vector<3x128xf32>
    %33 = arith.truncf %16 : vector<8x128xf32> to vector<8x128xbf16>
    %c0_17 = arith.constant 0 : index
    %c0_18 = arith.constant 0 : index
    %34 = vector.load %arg6[%c0_17, %c0_18] : memref<128x256xbf16, #tpu.memory_space<vmem>>, vector<128x256xbf16>
    %cst_19 = arith.constant dense<0.000000e+00> : vector<8x256xf32>
    %35 = tpu.matmul %33, %34, %cst_19 {dimension_numbers = #tpu.dot_dimension_numbers<[1], [0], [0], [1], [0, 0, 1, 1], [], []>} : vector<8x128xbf16>, vector<128x256xbf16>, vector<8x256xf32> -> vector<8x256xf32>
    %c0_20 = arith.constant 0 : index
    %c0_21 = arith.constant 0 : index
    %c0_22 = arith.constant 0 : index
    %c0_23 = arith.constant 0 : index
    %36 = vector.load %arg8[%c0_20, %c0_21, %c0_22, %c0_23] : memref<1x1x1x8xf32, #tpu.memory_space<vmem>>, vector<1x1x1x8xf32>
    %37 = vector.shape_cast %36 : vector<1x1x1x8xf32> to vector<1x8xf32>
    %38 = vector.extract_strided_slice %32 {offsets = [0, 0], sizes = [3, 32], strides = [1, 1]} : vector<3x128xf32> to vector<3x32xf32>
    %39 = arith.truncf %38 : vector<3x32xf32> to vector<3x32xbf16>
    %40 = vector.extract_strided_slice %35 {offsets = [0, 0], sizes = [8, 32], strides = [1, 1]} : vector<8x256xf32> to vector<8x32xf32>
    %41 = arith.truncf %40 : vector<8x32xf32> to vector<8x32xbf16>
    %42 = vector.extract_strided_slice %35 {offsets = [0, 128], sizes = [8, 32], strides = [1, 1]} : vector<8x256xf32> to vector<8x32xf32>
    %43 = arith.truncf %42 : vector<8x32xf32> to vector<8x32xbf16>
    %cst_24 = arith.constant dense<0.000000e+00> : vector<3x8xf32>
    %44 = tpu.matmul %39, %41, %cst_24 {dimension_numbers = #tpu.dot_dimension_numbers<[1], [1], [0], [0], [0, 0, 1, 0], [], []>} : vector<3x32xbf16>, vector<8x32xbf16>, vector<3x8xf32> -> vector<3x8xf32>
    %45 = vector.broadcast %37 : vector<1x8xf32> to vector<3x8xf32>
    %46 = arith.addf %44, %45 : vector<3x8xf32>
    %cst_25 = arith.constant dense<0xFF800000> : vector<3xf32>
    %47 = vector.multi_reduction <maximumf>, %46, %cst_25 [1] : vector<3x8xf32> to vector<3xf32>
    %48 = vector.shape_cast %47 : vector<3xf32> to vector<3x1xf32>
    %49 = vector.broadcast %48 : vector<3x1xf32> to vector<3x8xf32>
    %50 = arith.subf %46, %49 : vector<3x8xf32>
    %51 = math.exp %50 : vector<3x8xf32>
    %cst_26 = arith.constant dense<0.000000e+00> : vector<3xf32>
    %52 = vector.multi_reduction <add>, %51, %cst_26 [1] : vector<3x8xf32> to vector<3xf32>
    %53 = vector.shape_cast %52 : vector<3xf32> to vector<3x1xf32>
    %54 = tpu.reciprocal %53 {approx = true} : vector<3x1xf32> -> vector<3x1xf32>
    %55 = vector.broadcast %54 : vector<3x1xf32> to vector<3x8xf32>
    %56 = arith.mulf %51, %55 : vector<3x8xf32>
    %57 = arith.truncf %56 : vector<3x8xf32> to vector<3x8xbf16>
    %cst_27 = arith.constant dense<0.000000e+00> : vector<3x32xf32>
    %58 = tpu.matmul %57, %43, %cst_27 {dimension_numbers = #tpu.dot_dimension_numbers<[1], [0], [0], [1], [0, 0, 1, 1], [], []>} : vector<3x8xbf16>, vector<8x32xbf16>, vector<3x32xf32> -> vector<3x32xf32>
    %59 = vector.extract_strided_slice %32 {offsets = [0, 32], sizes = [3, 32], strides = [1, 1]} : vector<3x128xf32> to vector<3x32xf32>
    %60 = arith.truncf %59 : vector<3x32xf32> to vector<3x32xbf16>
    %61 = vector.extract_strided_slice %35 {offsets = [0, 32], sizes = [8, 32], strides = [1, 1]} : vector<8x256xf32> to vector<8x32xf32>
    %62 = arith.truncf %61 : vector<8x32xf32> to vector<8x32xbf16>
    %63 = vector.extract_strided_slice %35 {offsets = [0, 160], sizes = [8, 32], strides = [1, 1]} : vector<8x256xf32> to vector<8x32xf32>
    %64 = arith.truncf %63 : vector<8x32xf32> to vector<8x32xbf16>
    %cst_28 = arith.constant dense<0.000000e+00> : vector<3x8xf32>
    %65 = tpu.matmul %60, %62, %cst_28 {dimension_numbers = #tpu.dot_dimension_numbers<[1], [1], [0], [0], [0, 0, 1, 0], [], []>} : vector<3x32xbf16>, vector<8x32xbf16>, vector<3x8xf32> -> vector<3x8xf32>
    %66 = vector.broadcast %37 : vector<1x8xf32> to vector<3x8xf32>
    %67 = arith.addf %65, %66 : vector<3x8xf32>
    %cst_29 = arith.constant dense<0xFF800000> : vector<3xf32>
    %68 = vector.multi_reduction <maximumf>, %67, %cst_29 [1] : vector<3x8xf32> to vector<3xf32>
    %69 = vector.shape_cast %68 : vector<3xf32> to vector<3x1xf32>
    %70 = vector.broadcast %69 : vector<3x1xf32> to vector<3x8xf32>
    %71 = arith.subf %67, %70 : vector<3x8xf32>
    %72 = math.exp %71 : vector<3x8xf32>
    %cst_30 = arith.constant dense<0.000000e+00> : vector<3xf32>
    %73 = vector.multi_reduction <add>, %72, %cst_30 [1] : vector<3x8xf32> to vector<3xf32>
    %74 = vector.shape_cast %73 : vector<3xf32> to vector<3x1xf32>
    %75 = tpu.reciprocal %74 {approx = true} : vector<3x1xf32> -> vector<3x1xf32>
    %76 = vector.broadcast %75 : vector<3x1xf32> to vector<3x8xf32>
    %77 = arith.mulf %72, %76 : vector<3x8xf32>
    %78 = arith.truncf %77 : vector<3x8xf32> to vector<3x8xbf16>
    %cst_31 = arith.constant dense<0.000000e+00> : vector<3x32xf32>
    %79 = tpu.matmul %78, %64, %cst_31 {dimension_numbers = #tpu.dot_dimension_numbers<[1], [0], [0], [1], [0, 0, 1, 1], [], []>} : vector<3x8xbf16>, vector<8x32xbf16>, vector<3x32xf32> -> vector<3x32xf32>
    %80 = vector.extract_strided_slice %32 {offsets = [0, 64], sizes = [3, 32], strides = [1, 1]} : vector<3x128xf32> to vector<3x32xf32>
    %81 = arith.truncf %80 : vector<3x32xf32> to vector<3x32xbf16>
    %82 = vector.extract_strided_slice %35 {offsets = [0, 64], sizes = [8, 32], strides = [1, 1]} : vector<8x256xf32> to vector<8x32xf32>
    %83 = arith.truncf %82 : vector<8x32xf32> to vector<8x32xbf16>
    %84 = vector.extract_strided_slice %35 {offsets = [0, 192], sizes = [8, 32], strides = [1, 1]} : vector<8x256xf32> to vector<8x32xf32>
    %85 = arith.truncf %84 : vector<8x32xf32> to vector<8x32xbf16>
    %cst_32 = arith.constant dense<0.000000e+00> : vector<3x8xf32>
    %86 = tpu.matmul %81, %83, %cst_32 {dimension_numbers = #tpu.dot_dimension_numbers<[1], [1], [0], [0], [0, 0, 1, 0], [], []>} : vector<3x32xbf16>, vector<8x32xbf16>, vector<3x8xf32> -> vector<3x8xf32>
    %87 = vector.broadcast %37 : vector<1x8xf32> to vector<3x8xf32>
    %88 = arith.addf %86, %87 : vector<3x8xf32>
    %cst_33 = arith.constant dense<0xFF800000> : vector<3xf32>
    %89 = vector.multi_reduction <maximumf>, %88, %cst_33 [1] : vector<3x8xf32> to vector<3xf32>
    %90 = vector.shape_cast %89 : vector<3xf32> to vector<3x1xf32>
    %91 = vector.broadcast %90 : vector<3x1xf32> to vector<3x8xf32>
    %92 = arith.subf %88, %91 : vector<3x8xf32>
    %93 = math.exp %92 : vector<3x8xf32>
    %cst_34 = arith.constant dense<0.000000e+00> : vector<3xf32>
    %94 = vector.multi_reduction <add>, %93, %cst_34 [1] : vector<3x8xf32> to vector<3xf32>
    %95 = vector.shape_cast %94 : vector<3xf32> to vector<3x1xf32>
    %96 = tpu.reciprocal %95 {approx = true} : vector<3x1xf32> -> vector<3x1xf32>
    %97 = vector.broadcast %96 : vector<3x1xf32> to vector<3x8xf32>
    %98 = arith.mulf %93, %97 : vector<3x8xf32>
    %99 = arith.truncf %98 : vector<3x8xf32> to vector<3x8xbf16>
    %cst_35 = arith.constant dense<0.000000e+00> : vector<3x32xf32>
    %100 = tpu.matmul %99, %85, %cst_35 {dimension_numbers = #tpu.dot_dimension_numbers<[1], [0], [0], [1], [0, 0, 1, 1], [], []>} : vector<3x8xbf16>, vector<8x32xbf16>, vector<3x32xf32> -> vector<3x32xf32>
    %101 = vector.extract_strided_slice %32 {offsets = [0, 96], sizes = [3, 32], strides = [1, 1]} : vector<3x128xf32> to vector<3x32xf32>
    %102 = arith.truncf %101 : vector<3x32xf32> to vector<3x32xbf16>
    %103 = vector.extract_strided_slice %35 {offsets = [0, 96], sizes = [8, 32], strides = [1, 1]} : vector<8x256xf32> to vector<8x32xf32>
    %104 = arith.truncf %103 : vector<8x32xf32> to vector<8x32xbf16>
    %105 = vector.extract_strided_slice %35 {offsets = [0, 224], sizes = [8, 32], strides = [1, 1]} : vector<8x256xf32> to vector<8x32xf32>
    %106 = arith.truncf %105 : vector<8x32xf32> to vector<8x32xbf16>
    %cst_36 = arith.constant dense<0.000000e+00> : vector<3x8xf32>
    %107 = tpu.matmul %102, %104, %cst_36 {dimension_numbers = #tpu.dot_dimension_numbers<[1], [1], [0], [0], [0, 0, 1, 0], [], []>} : vector<3x32xbf16>, vector<8x32xbf16>, vector<3x8xf32> -> vector<3x8xf32>
    %108 = vector.broadcast %37 : vector<1x8xf32> to vector<3x8xf32>
    %109 = arith.addf %107, %108 : vector<3x8xf32>
    %cst_37 = arith.constant dense<0xFF800000> : vector<3xf32>
    %110 = vector.multi_reduction <maximumf>, %109, %cst_37 [1] : vector<3x8xf32> to vector<3xf32>
    %111 = vector.shape_cast %110 : vector<3xf32> to vector<3x1xf32>
    %112 = vector.broadcast %111 : vector<3x1xf32> to vector<3x8xf32>
    %113 = arith.subf %109, %112 : vector<3x8xf32>
    %114 = math.exp %113 : vector<3x8xf32>
    %cst_38 = arith.constant dense<0.000000e+00> : vector<3xf32>
    %115 = vector.multi_reduction <add>, %114, %cst_38 [1] : vector<3x8xf32> to vector<3xf32>
    %116 = vector.shape_cast %115 : vector<3xf32> to vector<3x1xf32>
    %117 = tpu.reciprocal %116 {approx = true} : vector<3x1xf32> -> vector<3x1xf32>
    %118 = vector.broadcast %117 : vector<3x1xf32> to vector<3x8xf32>
    %119 = arith.mulf %114, %118 : vector<3x8xf32>
    %120 = arith.truncf %119 : vector<3x8xf32> to vector<3x8xbf16>
    %cst_39 = arith.constant dense<0.000000e+00> : vector<3x32xf32>
    %121 = tpu.matmul %120, %106, %cst_39 {dimension_numbers = #tpu.dot_dimension_numbers<[1], [0], [0], [1], [0, 0, 1, 1], [], []>} : vector<3x8xbf16>, vector<8x32xbf16>, vector<3x32xf32> -> vector<3x32xf32>
    %122 = tpu.concatenate %58, %79, %100, %121 in 1 : vector<3x32xf32>, vector<3x32xf32>, vector<3x32xf32>, vector<3x32xf32> -> vector<3x128xf32>
    %123 = arith.truncf %122 : vector<3x128xf32> to vector<3x128xbf16>
    %c0_40 = arith.constant 0 : index
    %c0_41 = arith.constant 0 : index
    %124 = vector.load %arg7[%c0_40, %c0_41] : memref<128x128xbf16, #tpu.memory_space<vmem>>, vector<128x128xbf16>
    %cst_42 = arith.constant dense<0.000000e+00> : vector<3x128xf32>
    %125 = tpu.matmul %123, %124, %cst_42 {dimension_numbers = #tpu.dot_dimension_numbers<[1], [0], [0], [1], [0, 0, 1, 1], [], []>} : vector<3x128xbf16>, vector<128x128xbf16>, vector<3x128xf32> -> vector<3x128xf32>
    %126 = arith.addf %1, %125 : vector<3x128xf32>
    %c0_43 = arith.constant 0 : index
    %c0_44 = arith.constant 0 : index
    %c0_45 = arith.constant 0 : index
    %127 = vector.load %arg9[%c0_43, %c0_44, %c0_45] : memref<1x3x128xf32, #tpu.memory_space<vmem>>, vector<1x3x128xf32>
    %128 = vector.shape_cast %127 : vector<1x3x128xf32> to vector<3x128xf32>
    %129 = vector.shape_cast %126 : vector<3x128xf32> to vector<1x3x128xf32>
    tpu.vector_store %arg9[%c0_43, %c0_44, %c0_45], %129 {strides = array<i32>} : memref<1x3x128xf32, #tpu.memory_space<vmem>>, vector<1x3x128xf32>,
    return
  }
  func.func @transform_0(%arg0: i32) -> (i32, i32, i32) {
    %c0_i32 = arith.constant 0 : i32
    %c0_i32_0 = arith.constant 0 : i32
    %c0_i32_1 = arith.constant 0 : i32
    return %arg0, %c0_i32, %c0_i32_0 : i32, i32, i32
  }
  func.func @transform_1(%arg0: i32) -> (i32, i32, i32) {
    %c0_i32 = arith.constant 0 : i32
    %c0_i32_0 = arith.constant 0 : i32
    %c0_i32_1 = arith.constant 0 : i32
    return %arg0, %c0_i32, %c0_i32_0 : i32, i32, i32
  }
  func.func @transform_2(%arg0: i32) -> (i32, i32) {
    %c0_i32 = arith.constant 0 : i32
    %c0_i32_0 = arith.constant 0 : i32
    %c0_i32_1 = arith.constant 0 : i32
    return %c0_i32, %c0_i32_0 : i32, i32
  }
  func.func @transform_3(%arg0: i32) -> (i32, i32) {
    %c0_i32 = arith.constant 0 : i32
    %c0_i32_0 = arith.constant 0 : i32
    %c0_i32_1 = arith.constant 0 : i32
    return %c0_i32, %c0_i32_0 : i32, i32
  }
  func.func @transform_4(%arg0: i32) -> (i32, i32) {
    %c0_i32 = arith.constant 0 : i32
    %c0_i32_0 = arith.constant 0 : i32
    %c0_i32_1 = arith.constant 0 : i32
    return %c0_i32, %c0_i32_0 : i32, i32
  }
  func.func @transform_5(%arg0: i32) -> (i32, i32) {
    %c0_i32 = arith.constant 0 : i32
    %c0_i32_0 = arith.constant 0 : i32
    %c0_i32_1 = arith.constant 0 : i32
    return %c0_i32, %c0_i32_0 : i32, i32
  }
  func.func @transform_6(%arg0: i32) -> (i32, i32) {
    %c0_i32 = arith.constant 0 : i32
    %c0_i32_0 = arith.constant 0 : i32
    %c0_i32_1 = arith.constant 0 : i32
    return %c0_i32, %c0_i32_0 : i32, i32
  }
  func.func @transform_7(%arg0: i32) -> (i32, i32, i32, i32) {
    %c0_i32 = arith.constant 0 : i32
    %c0_i32_0 = arith.constant 0 : i32
    %c0_i32_1 = arith.constant 0 : i32
    %c0_i32_2 = arith.constant 0 : i32
    return %arg0, %c0_i32, %c0_i32_0, %c0_i32_1 : i32, i32, i32, i32
  }
  func.func @transform_8(%arg0: i32) -> (i32, i32, i32) {
    %c0_i32 = arith.constant 0 : i32
    %c0_i32_0 = arith.constant 0 : i32
    %c0_i32_1 = arith.constant 0 : i32
    return %arg0, %c0_i32, %c0_i32_0 : i32, i32, i32
  }
}

module attributes {stable_mosaic.version = 11 : i64} {
  func.func @_ffn_kernel(%arg0: i32, %arg1: memref<6x128xf32, #tpu.memory_space<vmem>>, %arg2: memref<1x128xf32, #tpu.memory_space<vmem>>, %arg3: memref<128x512xbf16, #tpu.memory_space<vmem>>, %arg4: memref<256x128xbf16, #tpu.memory_space<vmem>>, %arg5: memref<6x128xf32, #tpu.memory_space<vmem>>) attributes {dimension_semantics = [#tpu.dimension_semantics<parallel>], iteration_bounds = array<i64: 1>, scalar_prefetch = 0 : i64, scratch_operands = 0 : i64, tpu.core_type = #tpu.core_type<tc>, window_params = [{transform_indices = @transform_0, window_bounds = array<i64: 6, 128>}, {pipeline_mode = #tpu.pipeline_mode<synchronous>, transform_indices = @transform_1, window_bounds = array<i64: 1, 128>}, {pipeline_mode = #tpu.pipeline_mode<synchronous>, transform_indices = @transform_2, window_bounds = array<i64: 128, 512>}, {pipeline_mode = #tpu.pipeline_mode<synchronous>, transform_indices = @transform_3, window_bounds = array<i64: 256, 128>}, {transform_indices = @transform_4, window_bounds = array<i64: 6, 128>}]} {
    %c0 = arith.constant 0 : index
    %c0_0 = arith.constant 0 : index
    %0 = vector.load %arg1[%c0, %c0_0] : memref<6x128xf32, #tpu.memory_space<vmem>>, vector<6x128xf32>
    %c0_1 = arith.constant 0 : index
    %c0_2 = arith.constant 0 : index
    %1 = vector.load %arg2[%c0_1, %c0_2] : memref<1x128xf32, #tpu.memory_space<vmem>>, vector<1x128xf32>
    %2 = arith.mulf %0, %0 : vector<6x128xf32>
    %cst = arith.constant dense<0.000000e+00> : vector<6xf32>
    %3 = vector.multi_reduction <add>, %2, %cst [1] : vector<6x128xf32> to vector<6xf32>
    %4 = vector.shape_cast %3 : vector<6xf32> to vector<6x1xf32>
    %cst_3 = arith.constant 1.280000e+02 : f32
    %5 = vector.broadcast %cst_3 : f32 to vector<6x1xf32>
    %6 = arith.divf %4, %5 : vector<6x1xf32>
    %cst_4 = arith.constant 9.99999997E-7 : f32
    %7 = vector.broadcast %cst_4 : f32 to vector<6x1xf32>
    %8 = arith.addf %6, %7 : vector<6x1xf32>
    %9 = math.rsqrt %8 : vector<6x1xf32>
    %10 = vector.broadcast %9 : vector<6x1xf32> to vector<6x128xf32>
    %11 = arith.mulf %0, %10 : vector<6x128xf32>
    %12 = vector.broadcast %1 : vector<1x128xf32> to vector<6x128xf32>
    %13 = arith.mulf %11, %12 : vector<6x128xf32>
    %14 = arith.truncf %13 : vector<6x128xf32> to vector<6x128xbf16>
    %c0_5 = arith.constant 0 : index
    %c0_6 = arith.constant 0 : index
    %15 = vector.load %arg3[%c0_5, %c0_6] : memref<128x512xbf16, #tpu.memory_space<vmem>>, vector<128x512xbf16>
    %cst_7 = arith.constant dense<0.000000e+00> : vector<6x512xf32>
    %16 = tpu.matmul %14, %15, %cst_7 {dimension_numbers = #tpu.dot_dimension_numbers<[1], [0], [0], [1], [0, 0, 1, 1], [], []>} : vector<6x128xbf16>, vector<128x512xbf16>, vector<6x512xf32> -> vector<6x512xf32>
    %17 = vector.extract_strided_slice %16 {offsets = [0, 0], sizes = [6, 256], strides = [1, 1]} : vector<6x512xf32> to vector<6x256xf32>
    %18 = arith.mulf %17, %17 : vector<6x256xf32>
    %19 = arith.mulf %17, %18 : vector<6x256xf32>
    %cst_8 = arith.constant 4.471500e-02 : f32
    %20 = vector.broadcast %cst_8 : f32 to vector<6x256xf32>
    %21 = arith.mulf %20, %19 : vector<6x256xf32>
    %22 = arith.addf %17, %21 : vector<6x256xf32>
    %cst_9 = arith.constant 0.797884583 : f32
    %23 = vector.broadcast %cst_9 : f32 to vector<6x256xf32>
    %24 = arith.mulf %23, %22 : vector<6x256xf32>
    %25 = math.tanh %24 : vector<6x256xf32>
    %cst_10 = arith.constant 1.000000e+00 : f32
    %26 = vector.broadcast %cst_10 : f32 to vector<6x256xf32>
    %27 = arith.addf %26, %25 : vector<6x256xf32>
    %cst_11 = arith.constant 5.000000e-01 : f32
    %28 = vector.broadcast %cst_11 : f32 to vector<6x256xf32>
    %29 = arith.mulf %28, %27 : vector<6x256xf32>
    %30 = arith.mulf %17, %29 : vector<6x256xf32>
    %31 = vector.extract_strided_slice %16 {offsets = [0, 256], sizes = [6, 256], strides = [1, 1]} : vector<6x512xf32> to vector<6x256xf32>
    %32 = arith.mulf %30, %31 : vector<6x256xf32>
    %33 = arith.truncf %32 : vector<6x256xf32> to vector<6x256xbf16>
    %c0_12 = arith.constant 0 : index
    %c0_13 = arith.constant 0 : index
    %34 = vector.load %arg4[%c0_12, %c0_13] : memref<256x128xbf16, #tpu.memory_space<vmem>>, vector<256x128xbf16>
    %cst_14 = arith.constant dense<0.000000e+00> : vector<6x128xf32>
    %35 = tpu.matmul %33, %34, %cst_14 {dimension_numbers = #tpu.dot_dimension_numbers<[1], [0], [0], [1], [0, 0, 1, 1], [], []>} : vector<6x256xbf16>, vector<256x128xbf16>, vector<6x128xf32> -> vector<6x128xf32>
    %36 = arith.addf %0, %35 : vector<6x128xf32>
    %c0_15 = arith.constant 0 : index
    %c0_16 = arith.constant 0 : index
    %37 = vector.load %arg5[%c0_15, %c0_16] : memref<6x128xf32, #tpu.memory_space<vmem>>, vector<6x128xf32>
    tpu.vector_store %arg5[%c0_15, %c0_16], %36 {strides = array<i32>} : memref<6x128xf32, #tpu.memory_space<vmem>>, vector<6x128xf32>,
    return
  }
  func.func @transform_0(%arg0: i32) -> (i32, i32) {
    %c0_i32 = arith.constant 0 : i32
    %c0_i32_0 = arith.constant 0 : i32
    return %arg0, %c0_i32 : i32, i32
  }
  func.func @transform_1(%arg0: i32) -> (i32, i32) {
    %c0_i32 = arith.constant 0 : i32
    %c0_i32_0 = arith.constant 0 : i32
    %c0_i32_1 = arith.constant 0 : i32
    return %c0_i32, %c0_i32_0 : i32, i32
  }
  func.func @transform_2(%arg0: i32) -> (i32, i32) {
    %c0_i32 = arith.constant 0 : i32
    %c0_i32_0 = arith.constant 0 : i32
    %c0_i32_1 = arith.constant 0 : i32
    return %c0_i32, %c0_i32_0 : i32, i32
  }
  func.func @transform_3(%arg0: i32) -> (i32, i32) {
    %c0_i32 = arith.constant 0 : i32
    %c0_i32_0 = arith.constant 0 : i32
    %c0_i32_1 = arith.constant 0 : i32
    return %c0_i32, %c0_i32_0 : i32, i32
  }
  func.func @transform_4(%arg0: i32) -> (i32, i32) {
    %c0_i32 = arith.constant 0 : i32
    %c0_i32_0 = arith.constant 0 : i32
    return %arg0, %c0_i32 : i32, i32
  }
}

module attributes {stable_mosaic.version = 11 : i64} {
  func.func @_lm_loss_kernel(%arg0: memref<6x128xf32, #tpu.memory_space<vmem>>, %arg1: memref<1x128xf32, #tpu.memory_space<vmem>>, %arg2: memref<128x128xbf16, #tpu.memory_space<vmem>>, %arg3: memref<6x1xi32, #tpu.memory_space<vmem>>, %arg4: memref<1x1xf32, #tpu.memory_space<vmem>>, %arg5: memref<1x1xf32, #tpu.memory_space<vmem>>) attributes {dimension_semantics = [], scalar_prefetch = 0 : i64, scratch_operands = 0 : i64, tpu.core_type = #tpu.core_type<tc>} {
    %c0 = arith.constant 0 : index
    %c0_0 = arith.constant 0 : index
    %0 = vector.load %arg0[%c0, %c0_0] : memref<6x128xf32, #tpu.memory_space<vmem>>, vector<6x128xf32>
    %c0_1 = arith.constant 0 : index
    %c0_2 = arith.constant 0 : index
    %1 = vector.load %arg1[%c0_1, %c0_2] : memref<1x128xf32, #tpu.memory_space<vmem>>, vector<1x128xf32>
    %2 = arith.mulf %0, %0 : vector<6x128xf32>
    %cst = arith.constant dense<0.000000e+00> : vector<6xf32>
    %3 = vector.multi_reduction <add>, %2, %cst [1] : vector<6x128xf32> to vector<6xf32>
    %4 = vector.shape_cast %3 : vector<6xf32> to vector<6x1xf32>
    %cst_3 = arith.constant 1.280000e+02 : f32
    %5 = vector.broadcast %cst_3 : f32 to vector<6x1xf32>
    %6 = arith.divf %4, %5 : vector<6x1xf32>
    %cst_4 = arith.constant 9.99999997E-7 : f32
    %7 = vector.broadcast %cst_4 : f32 to vector<6x1xf32>
    %8 = arith.addf %6, %7 : vector<6x1xf32>
    %9 = math.rsqrt %8 : vector<6x1xf32>
    %10 = vector.broadcast %9 : vector<6x1xf32> to vector<6x128xf32>
    %11 = arith.mulf %0, %10 : vector<6x128xf32>
    %12 = vector.broadcast %1 : vector<1x128xf32> to vector<6x128xf32>
    %13 = arith.mulf %11, %12 : vector<6x128xf32>
    %14 = arith.truncf %13 : vector<6x128xf32> to vector<6x128xbf16>
    %c0_5 = arith.constant 0 : index
    %c0_6 = arith.constant 0 : index
    %15 = vector.load %arg2[%c0_5, %c0_6] : memref<128x128xbf16, #tpu.memory_space<vmem>>, vector<128x128xbf16>
    %cst_7 = arith.constant dense<0.000000e+00> : vector<6x128xf32>
    %16 = tpu.matmul %14, %15, %cst_7 {dimension_numbers = #tpu.dot_dimension_numbers<[1], [0], [0], [1], [0, 0, 1, 1], [], []>} : vector<6x128xbf16>, vector<128x128xbf16>, vector<6x128xf32> -> vector<6x128xf32>
    %c0_8 = arith.constant 0 : index
    %c0_9 = arith.constant 0 : index
    %17 = vector.load %arg3[%c0_8, %c0_9] : memref<6x1xi32, #tpu.memory_space<vmem>>, vector<6x1xi32>
    %cst_10 = arith.constant dense<0xFF800000> : vector<6xf32>
    %18 = vector.multi_reduction <maximumf>, %16, %cst_10 [1] : vector<6x128xf32> to vector<6xf32>
    %19 = vector.shape_cast %18 : vector<6xf32> to vector<6x1xf32>
    %20 = vector.broadcast %19 : vector<6x1xf32> to vector<6x128xf32>
    %21 = arith.subf %16, %20 : vector<6x128xf32>
    %22 = math.exp %21 : vector<6x128xf32>
    %cst_11 = arith.constant dense<0.000000e+00> : vector<6xf32>
    %23 = vector.multi_reduction <add>, %22, %cst_11 [1] : vector<6x128xf32> to vector<6xf32>
    %24 = vector.shape_cast %23 : vector<6xf32> to vector<6x1xf32>
    %25 = math.log %24 : vector<6x1xf32>
    %26 = arith.addf %25, %19 : vector<6x1xf32>
    %27 = tpu.iota {dimensions = array<i32: 1>} : vector<6x128xi32>
    %28 = vector.broadcast %17 : vector<6x1xi32> to vector<6x128xi32>
    %29 = arith.cmpi eq, %27, %28 : vector<6x128xi32>
    %cst_12 = arith.constant 0.000000e+00 : f32
    %30 = vector.broadcast %cst_12 : f32 to vector<6x128xf32>
    %31 = arith.select %29, %16, %30 : vector<6x128xi1>, vector<6x128xf32>
    %cst_13 = arith.constant dense<0.000000e+00> : vector<6xf32>
    %32 = vector.multi_reduction <add>, %31, %cst_13 [1] : vector<6x128xf32> to vector<6xf32>
    %33 = vector.shape_cast %32 : vector<6xf32> to vector<6x1xf32>
    %c-100_i32 = arith.constant -100 : i32
    %34 = vector.broadcast %c-100_i32 : i32 to vector<6x1xi32>
    %35 = arith.cmpi ne, %17, %34 : vector<6x1xi32>
    %36 = arith.extui %35 : vector<6x1xi1> to vector<6x1xi32>
    %37 = arith.sitofp %36 : vector<6x1xi32> to vector<6x1xf32>
    %38 = arith.subf %26, %33 : vector<6x1xf32>
    %39 = arith.mulf %38, %37 : vector<6x1xf32>
    %cst_14 = arith.constant dense<0.000000e+00> : vector<1xf32>
    %40 = vector.multi_reduction <add>, %39, %cst_14 [0] : vector<6x1xf32> to vector<1xf32>
    %41 = vector.shape_cast %40 : vector<1xf32> to vector<1x1xf32>
    %c0_15 = arith.constant 0 : index
    %c0_16 = arith.constant 0 : index
    %42 = vector.load %arg4[%c0_15, %c0_16] : memref<1x1xf32, #tpu.memory_space<vmem>>, vector<1x1xf32>
    tpu.vector_store %arg4[%c0_15, %c0_16], %41 {strides = array<i32>} : memref<1x1xf32, #tpu.memory_space<vmem>>, vector<1x1xf32>,
    %cst_17 = arith.constant dense<0.000000e+00> : vector<1xf32>
    %43 = vector.multi_reduction <add>, %37, %cst_17 [0] : vector<6x1xf32> to vector<1xf32>
    %44 = vector.shape_cast %43 : vector<1xf32> to vector<1x1xf32>
    %c0_18 = arith.constant 0 : index
    %c0_19 = arith.constant 0 : index
    %45 = vector.load %arg5[%c0_18, %c0_19] : memref<1x1xf32, #tpu.memory_space<vmem>>, vector<1x1xf32>
    tpu.vector_store %arg5[%c0_18, %c0_19], %44 {strides = array<i32>} : memref<1x1xf32, #tpu.memory_space<vmem>>, vector<1x1xf32>,
    return
  }
}

</mosaic_0001>

<llo_original>
// kernel: t5_model_loss.7
$region0: #{t5_model_loss.7}
  #allocation0 [shape = 'u32[]', space=smem, size = 0x4, offset = 0x4, fixed_abs, tag = 'smem constant byte address 0x4 - core index']
  #allocation1 [shape = 'u32[144,128]{1,0:T(1,128)}', space=vmem, size = 0x12000, scoped, tag = 'internal scratch']
  %s0 = inlined_call_operand.vmem [shape: f32[16,128], index: 0, kind: input, shape index: {}]
  %s1 = inlined_call_operand.vmem [shape: f32[1,128], index: 1, kind: input, shape index: {}]
  %s2 = inlined_call_operand.vmem [shape: bf16[128,512], index: 2, kind: input, shape index: {}]
  %s3 = inlined_call_operand.vmem [shape: bf16[256,128], index: 3, kind: input, shape index: {}]
  %s4 = inlined_call_operand.vmem [shape: f32[16,128], index: 4, kind: output, shape index: {}]
  %s5 = sld [smem:[#allocation0]]
  $region26: #{t5_model_loss.7} parent=0
    _
  %s7 = ssub.s32 1, %s5
  %s8 = scalar_select 0, %s7, %s5
  // Predicated region
  $region2: #{t5_model_loss.7} parent=0 // pred_check
    _
  $region3: #{t5_model_loss.7} parent=0 // pred_check_branch
    %10 = sbr.rel (0) target = $region5
  $region4: #{t5_model_loss.7} parent=0 // pred_region
    _
  $region5: #{t5_model_loss.7} parent=0 // pred_fallthru
    _
  // Predicated region
  $region6: #{t5_model_loss.7} parent=0 // pred_check
    _
  $region7: #{t5_model_loss.7} parent=0 // pred_check_branch
    %12 = sbr.rel (0) target = $region9
  $region8: #{t5_model_loss.7} parent=0 // pred_region
    _
  $region9: #{t5_model_loss.7} parent=0 // pred_fallthru
    _
  // Predicated region
  $region10: #{t5_model_loss.7} parent=0 // pred_check
    _
  $region11: #{t5_model_loss.7} parent=0 // pred_check_branch
    %14 = sbr.rel (0) target = $region13
  $region12: #{t5_model_loss.7} parent=0 // pred_region
    _
  $region13: #{t5_model_loss.7} parent=0 // pred_fallthru
    _
  // Predicated region
  $region14: #{t5_model_loss.7} parent=0 // pred_check
    _
  $region15: #{t5_model_loss.7} parent=0 // pred_check_branch
    %16 = sbr.rel (0) target = $region17
  $region16: #{t5_model_loss.7} parent=0 // pred_region
    _
  $region17: #{t5_model_loss.7} parent=0 // pred_fallthru
    _
  %v18 = vld [vmem:[%s0] sm:$0xff]
  %v19 = vld [vmem:[%s0 + $0x8] sm:$0xff]
  %v20 = vld [vmem:[%s1] sm:$0x1]
  %v21 = vmul.f32 %v18, %v18
  %v22 = vmul.f32 %v19, %v19
  %23 = vadd.xlane.f32.xlu0 %v21
  %v24 = vpop.xlane.xlu0 %23
  %25 = vadd.xlane.f32.xlu0 %v22
  %v26 = vpop.xlane.xlu0 %25
  %v27 = vrcp.pop 128.0
  %v28 = vmul.f32 %v24, %v27
  %v29 = vmul.f32 %v26, %v27
  %v30 = vadd.f32 %v28, 1e-06
  %v31 = vadd.f32 %v29, 1e-06
  %v32 = vrsqrt.pop %v30
  %v33 = vrsqrt.pop %v31
  %v34 = vmul.f32 %v18, %v32
  %v35 = vmul.f32 %v19, %v33
  %v37 = vlaneseq
  %v38 = vshrl.u32 %v37, 7
  %v39 = vsub.s32 0, %v38
  %v40 = vrot.slane %v20, %v39
  %v42 = vmul.f32 %v34, %v40
  %v43 = vmul.f32 %v35, %v40
  %v44 = vpack.c.bf16 %v43, %v42
  %v45 = vld [vmem:[%s2] sm:$0xff]
  %v46 = vld [vmem:[%s2 + $0x8] sm:$0xff]
  %v47 = vld [vmem:[%s2 + $0x10] sm:$0xff]
  %v48 = vld [vmem:[%s2 + $0x18] sm:$0xff]
  %v49 = vld [vmem:[%s2 + $0x20] sm:$0xff]
  %v50 = vld [vmem:[%s2 + $0x28] sm:$0xff]
  %v51 = vld [vmem:[%s2 + $0x30] sm:$0xff]
  %v52 = vld [vmem:[%s2 + $0x38] sm:$0xff]
  %v53 = vld [vmem:[%s2 + $0x40] sm:$0xff]
  %v54 = vld [vmem:[%s2 + $0x48] sm:$0xff]
  %v55 = vld [vmem:[%s2 + $0x50] sm:$0xff]
  %v56 = vld [vmem:[%s2 + $0x58] sm:$0xff]
  %v57 = vld [vmem:[%s2 + $0x60] sm:$0xff]
  %v58 = vld [vmem:[%s2 + $0x68] sm:$0xff]
  %v59 = vld [vmem:[%s2 + $0x70] sm:$0xff]
  %v60 = vld [vmem:[%s2 + $0x78] sm:$0xff]
  %v61 = vld [vmem:[%s2 + $0x80] sm:$0xff]
  %v62 = vld [vmem:[%s2 + $0x88] sm:$0xff]
  %v63 = vld [vmem:[%s2 + $0x90] sm:$0xff]
  %v64 = vld [vmem:[%s2 + $0x98] sm:$0xff]
  %v65 = vld [vmem:[%s2 + $0xa0] sm:$0xff]
  %v66 = vld [vmem:[%s2 + $0xa8] sm:$0xff]
  %v67 = vld [vmem:[%s2 + $0xb0] sm:$0xff]
  %v68 = vld [vmem:[%s2 + $0xb8] sm:$0xff]
  %v69 = vld [vmem:[%s2 + $0xc0] sm:$0xff]
  %v70 = vld [vmem:[%s2 + $0xc8] sm:$0xff]
  %v71 = vld [vmem:[%s2 + $0xd0] sm:$0xff]
  %v72 = vld [vmem:[%s2 + $0xd8] sm:$0xff]
  %v73 = vld [vmem:[%s2 + $0xe0] sm:$0xff]
  %v74 = vld [vmem:[%s2 + $0xe8] sm:$0xff]
  %v75 = vld [vmem:[%s2 + $0xf0] sm:$0xff]
  %v76 = vld [vmem:[%s2 + $0xf8] sm:$0xff]
  %v109 = vunpack.c.l.b16 %v45
  %v110 = vunpack.c.h.b16 %v45
  %v111 = vunpack.c.l.b16 %v46
  %v112 = vunpack.c.h.b16 %v46
  %v113 = vunpack.c.l.b16 %v47
  %v114 = vunpack.c.h.b16 %v47
  %v115 = vunpack.c.l.b16 %v48
  %v116 = vunpack.c.h.b16 %v48
  %v117 = vunpack.c.l.b16 %v49
  %v118 = vunpack.c.h.b16 %v49
  %v119 = vunpack.c.l.b16 %v50
  %v120 = vunpack.c.h.b16 %v50
  %v121 = vunpack.c.l.b16 %v51
  %v122 = vunpack.c.h.b16 %v51
  %v123 = vunpack.c.l.b16 %v52
  %v124 = vunpack.c.h.b16 %v52
  %v125 = vunpack.c.l.b16 %v53
  %v126 = vunpack.c.h.b16 %v53
  %v127 = vunpack.c.l.b16 %v54
  %v128 = vunpack.c.h.b16 %v54
  %v129 = vunpack.c.l.b16 %v55
  %v130 = vunpack.c.h.b16 %v55
  %v131 = vunpack.c.l.b16 %v56
  %v132 = vunpack.c.h.b16 %v56
  %v133 = vunpack.c.l.b16 %v57
  %v134 = vunpack.c.h.b16 %v57
  %v135 = vunpack.c.l.b16 %v58
  %v136 = vunpack.c.h.b16 %v58
  %v137 = vunpack.c.l.b16 %v59
  %v138 = vunpack.c.h.b16 %v59
  %v139 = vunpack.c.l.b16 %v60
  %v140 = vunpack.c.h.b16 %v60
  %v141 = vunpack.c.l.b16 %v61
  %v142 = vunpack.c.h.b16 %v61
  %v143 = vunpack.c.l.b16 %v62
  %v144 = vunpack.c.h.b16 %v62
  %v145 = vunpack.c.l.b16 %v63
  %v146 = vunpack.c.h.b16 %v63
  %v147 = vunpack.c.l.b16 %v64
  %v148 = vunpack.c.h.b16 %v64
  %v149 = vunpack.c.l.b16 %v65
  %v150 = vunpack.c.h.b16 %v65
  %v151 = vunpack.c.l.b16 %v66
  %v152 = vunpack.c.h.b16 %v66
  %v153 = vunpack.c.l.b16 %v67
  %v154 = vunpack.c.h.b16 %v67
  %v155 = vunpack.c.l.b16 %v68
  %v156 = vunpack.c.h.b16 %v68
  %v157 = vunpack.c.l.b16 %v69
  %v158 = vunpack.c.h.b16 %v69
  %v159 = vunpack.c.l.b16 %v70
  %v160 = vunpack.c.h.b16 %v70
  %v161 = vunpack.c.l.b16 %v71
  %v162 = vunpack.c.h.b16 %v71
  %v163 = vunpack.c.l.b16 %v72
  %v164 = vunpack.c.h.b16 %v72
  %v165 = vunpack.c.l.b16 %v73
  %v166 = vunpack.c.h.b16 %v73
  %v167 = vunpack.c.l.b16 %v74
  %v168 = vunpack.c.h.b16 %v74
  %v169 = vunpack.c.l.b16 %v75
  %v170 = vunpack.c.h.b16 %v75
  %v171 = vunpack.c.l.b16 %v76
  %v172 = vunpack.c.h.b16 %v76
  %v173 = vpack.c.b16 %v113, %v109
  %v174 = vpack.c.b16 %v114, %v110
  %v175 = vpack.c.b16 %v115, %v111
  %v176 = vpack.c.b16 %v116, %v112
  %v177 = vpack.c.b16 %v121, %v117
  %v178 = vpack.c.b16 %v122, %v118
  %v179 = vpack.c.b16 %v123, %v119
  %v180 = vpack.c.b16 %v124, %v120
  %v181 = vpack.c.b16 %v129, %v125
  %v182 = vpack.c.b16 %v130, %v126
  %v183 = vpack.c.b16 %v131, %v127
  %v184 = vpack.c.b16 %v132, %v128
  %v185 = vpack.c.b16 %v137, %v133
  %v186 = vpack.c.b16 %v138, %v134
  %v187 = vpack.c.b16 %v139, %v135
  %v188 = vpack.c.b16 %v140, %v136
  %v189 = vpack.c.b16 %v145, %v141
  %v190 = vpack.c.b16 %v146, %v142
  %v191 = vpack.c.b16 %v147, %v143
  %v192 = vpack.c.b16 %v148, %v144
  %v193 = vpack.c.b16 %v153, %v149
  %v194 = vpack.c.b16 %v154, %v150
  %v195 = vpack.c.b16 %v155, %v151
  %v196 = vpack.c.b16 %v156, %v152
  %v197 = vpack.c.b16 %v161, %v157
  %v198 = vpack.c.b16 %v162, %v158
  %v199 = vpack.c.b16 %v163, %v159
  %v200 = vpack.c.b16 %v164, %v160
  %v201 = vpack.c.b16 %v169, %v165
  %v202 = vpack.c.b16 %v170, %v166
  %v203 = vpack.c.b16 %v171, %v167
  %v204 = vpack.c.b16 %v172, %v168
  %237 = vmatprep.subr.bf16.mxu0 %v202
  %238 = vmatpush1.bf16.msra.mxu0 %v201
  %239 = vmatprep.subr.bf16.mxu0 %v198
  %240 = vmatpush1.bf16.msra.mxu0 %v197
  %241 = vmatprep.subr.bf16.mxu0 %v194
  %242 = vmatpush1.bf16.msra.mxu0 %v193
  %243 = vmatprep.subr.bf16.mxu0 %v190
  %244 = vmatpush1.bf16.msra.mxu0 %v189
  %245 = vmatprep.subr.bf16.mxu0 %v186
  %246 = vmatpush1.bf16.msra.mxu0 %v185
  %247 = vmatprep.subr.bf16.mxu0 %v182
  %248 = vmatpush1.bf16.msra.mxu0 %v181
  %249 = vmatprep.subr.bf16.mxu0 %v178
  %250 = vmatpush1.bf16.msra.mxu0 %v177
  %251 = vmatprep.subr.bf16.mxu0 %v174
  %252 = vmatpush1.bf16.msra.mxu0 %v173
  %253 = vmatprep.subr.bf16.mxu0 0
  %254 = vmatpush2.bf16.msra.mxu0 0
  %255 = vmatprep.subr.bf16.mxu0 0
  %256 = vmatpush2.bf16.msra.mxu0 0
  %257 = vmatprep.subr.bf16.mxu0 0
  %258 = vmatpush2.bf16.msra.mxu0 0
  %259 = vmatprep.subr.bf16.mxu0 0
  %260 = vmatpush2.bf16.msra.mxu0 0
  %261 = vmatprep.subr.bf16.mxu0 0
  %262 = vmatpush2.bf16.msra.mxu0 0
  %263 = vmatprep.subr.bf16.mxu0 0
  %264 = vmatpush2.bf16.msra.mxu0 0
  %265 = vmatprep.subr.bf16.mxu0 0
  %266 = vmatpush2.bf16.msra.mxu0 0
  %267 = vmatprep.subr.bf16.mxu0 0
  %268 = vmatpush2.bf16.msra.mxu0 0
  %269 = vmatprep.mubr.bf16.mxu0 0
  %270 = vmatmul.mubr.bf16.gmra.mxu0 %v44
  %v271 = vpop.f32.mrf.mxu0
  %v272 = vadd.f32 0.0, %v271
  %v273 = vpop.f32.mrf.mxu0
  %v274 = vadd.f32 0.0, %v273
  %v275 = vpop.f32.mrf.mxu0
  %v276 = vadd.f32 0.0, %v275
  %v277 = vpop.f32.mrf.mxu0
  %v278 = vadd.f32 0.0, %v277
  %279 = vdwg.mxu0
  %280 = vmatprep.subr.bf16.mxu0 %v204
  %281 = vmatpush1.bf16.msra.mxu0 %v203
  %282 = vmatprep.subr.bf16.mxu0 %v200
  %283 = vmatpush1.bf16.msra.mxu0 %v199
  %284 = vmatprep.subr.bf16.mxu0 %v196
  %285 = vmatpush1.bf16.msra.mxu0 %v195
  %286 = vmatprep.subr.bf16.mxu0 %v192
  %287 = vmatpush1.bf16.msra.mxu0 %v191
  %288 = vmatprep.subr.bf16.mxu0 %v188
  %289 = vmatpush1.bf16.msra.mxu0 %v187
  %290 = vmatprep.subr.bf16.mxu0 %v184
  %291 = vmatpush1.bf16.msra.mxu0 %v183
  %292 = vmatprep.subr.bf16.mxu0 %v180
  %293 = vmatpush1.bf16.msra.mxu0 %v179
  %294 = vmatprep.subr.bf16.mxu0 %v176
  %295 = vmatpush1.bf16.msra.mxu0 %v175
  %296 = vmatprep.subr.bf16.mxu0 0
  %297 = vmatpush2.bf16.msra.mxu0 0
  %298 = vmatprep.subr.bf16.mxu0 0
  %299 = vmatpush2.bf16.msra.mxu0 0
  %300 = vmatprep.subr.bf16.mxu0 0
  %301 = vmatpush2.bf16.msra.mxu0 0
  %302 = vmatprep.subr.bf16.mxu0 0
  %303 = vmatpush2.bf16.msra.mxu0 0
  %304 = vmatprep.subr.bf16.mxu0 0
  %305 = vmatpush2.bf16.msra.mxu0 0
  %306 = vmatprep.subr.bf16.mxu0 0
  %307 = vmatpush2.bf16.msra.mxu0 0
  %308 = vmatprep.subr.bf16.mxu0 0
  %309 = vmatpush2.bf16.msra.mxu0 0
  %310 = vmatprep.subr.bf16.mxu0 0
  %311 = vmatpush2.bf16.msra.mxu0 0
  %312 = vmatprep.mubr.bf16.mxu0 0
  %313 = vmatmul.mubr.bf16.gmra.mxu0 %v44
  %v314 = vpop.f32.mrf.mxu0
  %v315 = vadd.f32 0.0, %v314
  %v316 = vpop.f32.mrf.mxu0
  %v317 = vadd.f32 0.0, %v316
  %v318 = vpop.f32.mrf.mxu0
  %v319 = vadd.f32 0.0, %v318
  %v320 = vpop.f32.mrf.mxu0
  %v321 = vadd.f32 0.0, %v320
  %322 = vdwg.mxu0
  %v323 = vmul.f32 %v272, %v272
  %v324 = vmul.f32 %v274, %v274
  %v325 = vmul.f32 %v276, %v276
  %v326 = vmul.f32 %v278, %v278
  %v327 = vmul.f32 %v272, %v323
  %v328 = vmul.f32 %v274, %v324
  %v329 = vmul.f32 %v276, %v325
  %v330 = vmul.f32 %v278, %v326
  %v331 = vmul.f32 %v327, 0.044715
  %v332 = vmul.f32 %v328, 0.044715
  %v333 = vmul.f32 %v329, 0.044715
  %v334 = vmul.f32 %v330, 0.044715
  %v335 = vadd.f32 %v272, %v331
  %v336 = vadd.f32 %v274, %v332
  %v337 = vadd.f32 %v276, %v333
  %v338 = vadd.f32 %v278, %v334
  %v339 = vmul.f32 %v335, 0.7978846
  %v340 = vmul.f32 %v336, 0.7978846
  %v341 = vmul.f32 %v337, 0.7978846
  %v342 = vmul.f32 %v338, 0.7978846
  %v343 = vtanh.pop %v339
  %v344 = vtanh.pop %v340
  %v345 = vtanh.pop %v341
  %v346 = vtanh.pop %v342
  %v347 = vadd.f32 %v343, 1.0
  %v348 = vadd.f32 %v344, 1.0
  %v349 = vadd.f32 %v345, 1.0
  %v350 = vadd.f32 %v346, 1.0
  %v351 = vmul.f32 %v347, 0.5
  %v352 = vmul.f32 %v348, 0.5
  %v353 = vmul.f32 %v349, 0.5
  %v354 = vmul.f32 %v350, 0.5
  %v355 = vmul.f32 %v272, %v351
  %v356 = vmul.f32 %v274, %v352
  %v357 = vmul.f32 %v276, %v353
  %v358 = vmul.f32 %v278, %v354
  %v359 = vmul.f32 %v355, %v315
  %v360 = vmul.f32 %v356, %v317
  %v361 = vmul.f32 %v357, %v319
  %v362 = vmul.f32 %v358, %v321
  %v363 = vpack.c.bf16 %v361, %v359
  %v364 = vpack.c.bf16 %v362, %v360
  %v365 = vld [vmem:[%s3] sm:$0xf]
  %v366 = vld [vmem:[%s3 + $0x4] sm:$0xf]
  %v367 = vld [vmem:[%s3 + $0x8] sm:$0xf]
  %v368 = vld [vmem:[%s3 + $0xc] sm:$0xf]
  %v369 = vld [vmem:[%s3 + $0x10] sm:$0xf]
  %v370 = vld [vmem:[%s3 + $0x14] sm:$0xf]
  %v371 = vld [vmem:[%s3 + $0x18] sm:$0xf]
  %v372 = vld [vmem:[%s3 + $0x1c] sm:$0xf]
  %v373 = vld [vmem:[%s3 + $0x20] sm:$0xf]
  %v374 = vld [vmem:[%s3 + $0x24] sm:$0xf]
  %v375 = vld [vmem:[%s3 + $0x28] sm:$0xf]
  %v376 = vld [vmem:[%s3 + $0x2c] sm:$0xf]
  %v377 = vld [vmem:[%s3 + $0x30] sm:$0xf]
  %v378 = vld [vmem:[%s3 + $0x34] sm:$0xf]
  %v379 = vld [vmem:[%s3 + $0x38] sm:$0xf]
  %v380 = vld [vmem:[%s3 + $0x3c] sm:$0xf]
  %v381 = vld [vmem:[%s3 + $0x40] sm:$0xf]
  %v382 = vld [vmem:[%s3 + $0x44] sm:$0xf]
  %v383 = vld [vmem:[%s3 + $0x48] sm:$0xf]
  %v384 = vld [vmem:[%s3 + $0x4c] sm:$0xf]
  %v385 = vld [vmem:[%s3 + $0x50] sm:$0xf]
  %v386 = vld [vmem:[%s3 + $0x54] sm:$0xf]
  %v387 = vld [vmem:[%s3 + $0x58] sm:$0xf]
  %v388 = vld [vmem:[%s3 + $0x5c] sm:$0xf]
  %v389 = vld [vmem:[%s3 + $0x60] sm:$0xf]
  %v390 = vld [vmem:[%s3 + $0x64] sm:$0xf]
  %v391 = vld [vmem:[%s3 + $0x68] sm:$0xf]
  %v392 = vld [vmem:[%s3 + $0x6c] sm:$0xf]
  %v393 = vld [vmem:[%s3 + $0x70] sm:$0xf]
  %v394 = vld [vmem:[%s3 + $0x74] sm:$0xf]
  %v395 = vld [vmem:[%s3 + $0x78] sm:$0xf]
  %v396 = vld [vmem:[%s3 + $0x7c] sm:$0xf]
  %v429 = vunpack.c.l.b16 %v365
  %v430 = vunpack.c.l.b16 %v366
  %v431 = vunpack.c.l.b16 %v367
  %v432 = vunpack.c.l.b16 %v368
  %v433 = vunpack.c.l.b16 %v369
  %v434 = vunpack.c.l.b16 %v370
  %v435 = vunpack.c.l.b16 %v371
  %v436 = vunpack.c.l.b16 %v372
  %v437 = vunpack.c.l.b16 %v373
  %v438 = vunpack.c.l.b16 %v374
  %v439 = vunpack.c.l.b16 %v375
  %v440 = vunpack.c.l.b16 %v376
  %v441 = vunpack.c.l.b16 %v377
  %v442 = vunpack.c.l.b16 %v378
  %v443 = vunpack.c.l.b16 %v379
  %v444 = vunpack.c.l.b16 %v380
  %v445 = vunpack.c.l.b16 %v381
  %v446 = vunpack.c.l.b16 %v382
  %v447 = vunpack.c.l.b16 %v383
  %v448 = vunpack.c.l.b16 %v384
  %v449 = vunpack.c.l.b16 %v385
  %v450 = vunpack.c.l.b16 %v386
  %v451 = vunpack.c.l.b16 %v387
  %v452 = vunpack.c.l.b16 %v388
  %v453 = vunpack.c.l.b16 %v389
  %v454 = vunpack.c.l.b16 %v390
  %v455 = vunpack.c.l.b16 %v391
  %v456 = vunpack.c.l.b16 %v392
  %v457 = vunpack.c.l.b16 %v393
  %v458 = vunpack.c.l.b16 %v394
  %v459 = vunpack.c.l.b16 %v395
  %v460 = vunpack.c.l.b16 %v396
  %v461 = vpack.c.b16 %v430, %v429
  %v462 = vpack.c.b16 %v432, %v431
  %v463 = vpack.c.b16 %v434, %v433
  %v464 = vpack.c.b16 %v436, %v435
  %v465 = vpack.c.b16 %v438, %v437
  %v466 = vpack.c.b16 %v440, %v439
  %v467 = vpack.c.b16 %v442, %v441
  %v468 = vpack.c.b16 %v444, %v443
  %v469 = vpack.c.b16 %v446, %v445
  %v470 = vpack.c.b16 %v448, %v447
  %v471 = vpack.c.b16 %v450, %v449
  %v472 = vpack.c.b16 %v452, %v451
  %v473 = vpack.c.b16 %v454, %v453
  %v474 = vpack.c.b16 %v456, %v455
  %v475 = vpack.c.b16 %v458, %v457
  %v476 = vpack.c.b16 %v460, %v459
  %493 = vmatprep.subr.bf16.mxu0 0
  %494 = vmatpush1.bf16.msra.mxu0 %v468
  %495 = vmatprep.subr.bf16.mxu0 0
  %496 = vmatpush1.bf16.msra.mxu0 %v467
  %497 = vmatprep.subr.bf16.mxu0 0
  %498 = vmatpush1.bf16.msra.mxu0 %v466
  %499 = vmatprep.subr.bf16.mxu0 0
  %500 = vmatpush1.bf16.msra.mxu0 %v465
  %501 = vmatprep.subr.bf16.mxu0 0
  %502 = vmatpush1.bf16.msra.mxu0 %v464
  %503 = vmatprep.subr.bf16.mxu0 0
  %504 = vmatpush1.bf16.msra.mxu0 %v463
  %505 = vmatprep.subr.bf16.mxu0 0
  %506 = vmatpush1.bf16.msra.mxu0 %v462
  %507 = vmatprep.subr.bf16.mxu0 0
  %508 = vmatpush1.bf16.msra.mxu0 %v461
  %509 = vmatprep.subr.bf16.mxu0 0
  %510 = vmatpush2.bf16.msra.mxu0 %v476
  %511 = vmatprep.subr.bf16.mxu0 0
  %512 = vmatpush2.bf16.msra.mxu0 %v475
  %513 = vmatprep.subr.bf16.mxu0 0
  %514 = vmatpush2.bf16.msra.mxu0 %v474
  %515 = vmatprep.subr.bf16.mxu0 0
  %516 = vmatpush2.bf16.msra.mxu0 %v473
  %517 = vmatprep.subr.bf16.mxu0 0
  %518 = vmatpush2.bf16.msra.mxu0 %v472
  %519 = vmatprep.subr.bf16.mxu0 0
  %520 = vmatpush2.bf16.msra.mxu0 %v471
  %521 = vmatprep.subr.bf16.mxu0 0
  %522 = vmatpush2.bf16.msra.mxu0 %v470
  %523 = vmatprep.subr.bf16.mxu0 0
  %524 = vmatpush2.bf16.msra.mxu0 %v469
  %525 = vmatprep.mubr.bf16.mxu0 %v364
  %526 = vmatmul.mubr.bf16.gmra.mxu0 %v363
  %v527 = vpop.f32.mrf.mxu0
  %v528 = vadd.f32 0.0, %v527
  %v529 = vpop.f32.mrf.mxu0
  %v530 = vpop.f32.mrf.mxu0
  %v531 = vadd.f32 0.0, %v530
  %v532 = vpop.f32.mrf.mxu0
  %533 = vdwg.mxu0
  %v534 = vadd.f32 %v18, %v528
  %v535 = vadd.f32 %v19, %v531
  %536 = vst [vmem:[%s4] sm:$0xff] %v534
  %537 = vst [vmem:[%s4 + $0x8] sm:$0xff] %v535
  // Predicated region
  $region18: #{t5_model_loss.7} parent=0 // pred_check
    _
  $region19: #{t5_model_loss.7} parent=0 // pred_check_branch
    %539 = sbr.rel (0) target = $region21
  $region20: #{t5_model_loss.7} parent=0 // pred_region
    _
  $region21: #{t5_model_loss.7} parent=0 // pred_fallthru
    _
  // Predicated region
  $region22: #{t5_model_loss.7} parent=0 // pred_check
    _
  $region23: #{t5_model_loss.7} parent=0 // pred_check_branch
    %541 = sbr.rel (0) target = $region25
  $region24: #{t5_model_loss.7} parent=0 // pred_region
    _
  $region25: #{t5_model_loss.7} parent=0 // pred_fallthru
    _

// kernel: t5_model_loss.6
$region0: #{t5_model_loss.6}
  #allocation0 [shape = 'u32[]', space=smem, size = 0x4, offset = 0x4, fixed_abs, tag = 'smem constant byte address 0x4 - core index']
  #allocation1 [shape = 'u32[144,128]{1,0:T(1,128)}', space=vmem, size = 0x12000, scoped, tag = 'internal scratch']
  %s0 = inlined_call_operand.vmem [shape: f32[2,8,128], index: 0, kind: input, shape index: {}]
  %s1 = inlined_call_operand.vmem [shape: f32[1,128], index: 1, kind: input, shape index: {}]
  %s2 = inlined_call_operand.vmem [shape: bf16[128,384], index: 2, kind: input, shape index: {}]
  %s3 = inlined_call_operand.vmem [shape: bf16[128,128], index: 3, kind: input, shape index: {}]
  %s4 = inlined_call_operand.vmem [shape: f32[1,4,8,8], index: 4, kind: input, shape index: {}]
  %s5 = inlined_call_operand.vmem [shape: f32[2,1,1,8], index: 5, kind: input, shape index: {}]
  %s6 = inlined_call_operand.vmem [shape: f32[2,8,128], index: 6, kind: output, shape index: {}]
  %s7 = sld [smem:[#allocation0]]
  $region57: #{t5_model_loss.6} parent=0
    _
  %s9 = ssub.s32 1, %s7
  %s10 = scalar_select 0, %s9, %s7
  loop: start=0, step=1, limit=4
  $region2: #{t5_model_loss.6} parent=0 // loop_pre_header
    _
  $region3: #{t5_model_loss.6} parent=0 // loop_header
    %s12 = sphi 0, %s16
    %p13 = scmp.ge.s32.totalorder %s12, 4
    %s22 = sphi 0, %s24
    %s25 = sphi 0, %s22
    %s26 = sphi 0, %s25
    %s42 = sphi 0, %s26
    %s46 = sphi 0, %s46
    %s48 = sphi 0, %s46
    %s49 = sphi 0, %s48
    %s63 = sphi 0, %s49
    %s67 = sphi 0, %s67
    %s69 = sphi 0, %s67
    %s70 = sphi 0, %s69
    %s84 = sphi 0, %s70
    %s88 = sphi 0, %s88
    %s90 = sphi 0, %s88
    %s91 = sphi 0, %s90
    %s105 = sphi 0, %s91
    %s109 = sphi 0, %s109
    %s111 = sphi 0, %s109
    %s112 = sphi 0, %s111
    %s126 = sphi 0, %s112
    %s132 = sphi 0, %s134
    %s135 = sphi 0, %s132
    %s136 = sphi 0, %s135
    %s152 = sphi 0, %s136
    %s158 = sphi 0, %s160
    %s161 = sphi 0, %s158
    %s162 = sphi 0, %s161
    %s178 = sphi 0, %s162
  $region4: #{t5_model_loss.6} parent=0 // loop_header_branch
    %15 = sbr.rel (%p13) target = $region8
  $region5: #{t5_model_loss.6} parent=0 // loop_body
    %s17 = ssub.s32 %s12, 1
    %s18 = ssub.s32 %s12, 2
    %s19 = sadd.s32 %s12, 1
    %s20 = ssub.s32 %s12, %s19
    %p21 = scmp.eq.s32.totalorder %s20, 0
    %s23 = sadd.s32 %s22, 1
    %s24 = scalar_select %p21, %s22, %s23
    %p27 = pneg %p21
    %p28 = scmp.eq.s32.totalorder %s12, 1
    %p29 = por %p27, %p28
    %p30 = scmp.ne.s32.totalorder %s22, %s25
    %p31 = scmp.eq.s32.totalorder %s12, 0
    %p32 = por %p30, %p31
    %p33 = scmp.ne.s32.totalorder %s22, %s25
    %p34 = scmp.eq.s32.totalorder %s17, 1
    %p35 = por %p33, %p34
    %p36 = scmp.ne.s32.totalorder %s25, %s26
    %p37 = scmp.eq.s32.totalorder %s17, 0
    %p38 = por %p36, %p37
    %p39 = scmp.ne.s32.totalorder %s25, %s26
    %p40 = scmp.eq.s32.totalorder %s18, 1
    %p41 = por %p39, %p40
    %p43 = scmp.ne.s32.totalorder %s26, %s42
    %p44 = scmp.eq.s32.totalorder %s18, 0
    %p45 = por %p43, %p44
    %s47 = sadd.s32 %s46, 1
    %p50 = scmp.eq.s32.totalorder %s12, 1
    %p51 = scmp.ne.s32.totalorder %s46, %s48
    %p52 = scmp.eq.s32.totalorder %s12, 0
    %p53 = por %p51, %p52
    %p54 = scmp.ne.s32.totalorder %s46, %s48
    %p55 = scmp.eq.s32.totalorder %s17, 1
    %p56 = por %p54, %p55
    %p57 = scmp.ne.s32.totalorder %s48, %s49
    %p58 = scmp.eq.s32.totalorder %s17, 0
    %p59 = por %p57, %p58
    %p60 = scmp.ne.s32.totalorder %s48, %s49
    %p61 = scmp.eq.s32.totalorder %s18, 1
    %p62 = por %p60, %p61
    %p64 = scmp.ne.s32.totalorder %s49, %s63
    %p65 = scmp.eq.s32.totalorder %s18, 0
    %p66 = por %p64, %p65
    %s68 = sadd.s32 %s67, 1
    %p71 = scmp.eq.s32.totalorder %s12, 1
    %p72 = scmp.ne.s32.totalorder %s67, %s69
    %p73 = scmp.eq.s32.totalorder %s12, 0
    %p74 = por %p72, %p73
    %p75 = scmp.ne.s32.totalorder %s67, %s69
    %p76 = scmp.eq.s32.totalorder %s17, 1
    %p77 = por %p75, %p76
    %p78 = scmp.ne.s32.totalorder %s69, %s70
    %p79 = scmp.eq.s32.totalorder %s17, 0
    %p80 = por %p78, %p79
    %p81 = scmp.ne.s32.totalorder %s69, %s70
    %p82 = scmp.eq.s32.totalorder %s18, 1
    %p83 = por %p81, %p82
    %p85 = scmp.ne.s32.totalorder %s70, %s84
    %p86 = scmp.eq.s32.totalorder %s18, 0
    %p87 = por %p85, %p86
    %s89 = sadd.s32 %s88, 1
    %p92 = scmp.eq.s32.totalorder %s12, 1
    %p93 = scmp.ne.s32.totalorder %s88, %s90
    %p94 = scmp.eq.s32.totalorder %s12, 0
    %p95 = por %p93, %p94
    %p96 = scmp.ne.s32.totalorder %s88, %s90
    %p97 = scmp.eq.s32.totalorder %s17, 1
    %p98 = por %p96, %p97
    %p99 = scmp.ne.s32.totalorder %s90, %s91
    %p100 = scmp.eq.s32.totalorder %s17, 0
    %p101 = por %p99, %p100
    %p102 = scmp.ne.s32.totalorder %s90, %s91
    %p103 = scmp.eq.s32.totalorder %s18, 1
    %p104 = por %p102, %p103
    %p106 = scmp.ne.s32.totalorder %s91, %s105
    %p107 = scmp.eq.s32.totalorder %s18, 0
    %p108 = por %p106, %p107
    %s110 = sadd.s32 %s109, 1
    %p113 = scmp.eq.s32.totalorder %s12, 1
    %p114 = scmp.ne.s32.totalorder %s109, %s111
    %p115 = scmp.eq.s32.totalorder %s12, 0
    %p116 = por %p114, %p115
    %p117 = scmp.ne.s32.totalorder %s109, %s111
    %p118 = scmp.eq.s32.totalorder %s17, 1
    %p119 = por %p117, %p118
    %p120 = scmp.ne.s32.totalorder %s111, %s112
    %p121 = scmp.eq.s32.totalorder %s17, 0
    %p122 = por %p120, %p121
    %p123 = scmp.ne.s32.totalorder %s111, %s112
    %p124 = scmp.eq.s32.totalorder %s18, 1
    %p125 = por %p123, %p124
    %p127 = scmp.ne.s32.totalorder %s112, %s126
    %p128 = scmp.eq.s32.totalorder %s18, 0
    %p129 = por %p127, %p128
    %s130 = ssub.s32 %s12, %s19
    %p131 = scmp.eq.s32.totalorder %s130, 0
    %s133 = sadd.s32 %s132, 1
    %s134 = scalar_select %p131, %s132, %s133
    %p137 = pneg %p131
    %p138 = scmp.eq.s32.totalorder %s12, 1
    %p139 = por %p137, %p138
    %p140 = scmp.ne.s32.totalorder %s132, %s135
    %p141 = scmp.eq.s32.totalorder %s12, 0
    %p142 = por %p140, %p141
    %p143 = scmp.ne.s32.totalorder %s132, %s135
    %p144 = scmp.eq.s32.totalorder %s17, 1
    %p145 = por %p143, %p144
    %p146 = scmp.ne.s32.totalorder %s135, %s136
    %p147 = scmp.eq.s32.totalorder %s17, 0
    %p148 = por %p146, %p147
    %p149 = scmp.ne.s32.totalorder %s135, %s136
    %p150 = scmp.eq.s32.totalorder %s18, 1
    %p151 = por %p149, %p150
    %p153 = scmp.ne.s32.totalorder %s136, %s152
    %p154 = scmp.eq.s32.totalorder %s18, 0
    %p155 = por %p153, %p154
    %s156 = ssub.s32 %s12, %s19
    %p157 = scmp.eq.s32.totalorder %s156, 0
    %s159 = sadd.s32 %s158, 1
    %s160 = scalar_select %p157, %s158, %s159
    %p163 = pneg %p157
    %p164 = scmp.eq.s32.totalorder %s12, 1
    %p165 = por %p163, %p164
    %p166 = scmp.ne.s32.totalorder %s158, %s161
    %p167 = scmp.eq.s32.totalorder %s12, 0
    %p168 = por %p166, %p167
    %p169 = scmp.ne.s32.totalorder %s158, %s161
    %p170 = scmp.eq.s32.totalorder %s17, 1
    %p171 = por %p169, %p170
    %p172 = scmp.ne.s32.totalorder %s161, %s162
    %p173 = scmp.eq.s32.totalorder %s17, 0
    %p174 = por %p172, %p173
    %p175 = scmp.ne.s32.totalorder %s161, %s162
    %p176 = scmp.eq.s32.totalorder %s18, 1
    %p177 = por %p175, %p176
    %p179 = scmp.ne.s32.totalorder %s162, %s178
    %p180 = scmp.eq.s32.totalorder %s18, 0
    %p181 = por %p179, %p180
    %p182 = scmp.le.s32.totalorder 1, %s12
    %p183 = scmp.lt.s32.totalorder %s12, 3
    %p184 = pnand %p182, %p183
    %p185 = pneg %p184
    // Predicated region
    $region9: #{t5_model_loss.6} parent=5 // pred_check
      _
    $region10: #{t5_model_loss.6} parent=5 // pred_check_branch
      %187 = sbr.rel (%p184) target = $region12
    $region11: #{t5_model_loss.6} parent=5 // pred_region
      %s188 = ssub.s32 %s12, 1
      // Predicated region
      $region13: #{t5_model_loss.6} parent=11 // pred_check
        %p189 = pneg %p59
      $region14: #{t5_model_loss.6} parent=11 // pred_check_branch
        %191 = sbr.rel (%p189) target = $region16
      $region15: #{t5_model_loss.6} parent=11 // pred_region
        _
      $region16: #{t5_model_loss.6} parent=11 // pred_fallthru
        _
      // Predicated region
      $region17: #{t5_model_loss.6} parent=11 // pred_check
        %p192 = pneg %p80
      $region18: #{t5_model_loss.6} parent=11 // pred_check_branch
        %194 = sbr.rel (%p192) target = $region20
      $region19: #{t5_model_loss.6} parent=11 // pred_region
        _
      $region20: #{t5_model_loss.6} parent=11 // pred_fallthru
        _
      // Predicated region
      $region21: #{t5_model_loss.6} parent=11 // pred_check
        %p195 = pneg %p101
      $region22: #{t5_model_loss.6} parent=11 // pred_check_branch
        %197 = sbr.rel (%p195) target = $region24
      $region23: #{t5_model_loss.6} parent=11 // pred_region
        _
      $region24: #{t5_model_loss.6} parent=11 // pred_fallthru
        _
      // Predicated region
      $region25: #{t5_model_loss.6} parent=11 // pred_check
        %p198 = pneg %p122
      $region26: #{t5_model_loss.6} parent=11 // pred_check_branch
        %200 = sbr.rel (%p198) target = $region28
      $region27: #{t5_model_loss.6} parent=11 // pred_region
        _
      $region28: #{t5_model_loss.6} parent=11 // pred_fallthru
        _
    $region12: #{t5_model_loss.6} parent=5 // pred_fallthru
      _
    %p201 = scmp.lt.s32.totalorder %s12, 2
    // Predicated region
    $region29: #{t5_model_loss.6} parent=5 // pred_check
      %p202 = pneg %p201
    $region30: #{t5_model_loss.6} parent=5 // pred_check_branch
      %204 = sbr.rel (%p202) target = $region32
    $region31: #{t5_model_loss.6} parent=5 // pred_region
      // Predicated region
      $region33: #{t5_model_loss.6} parent=31 // pred_check
        %p205 = pneg %p32
      $region34: #{t5_model_loss.6} parent=31 // pred_check_branch
        %207 = sbr.rel (%p205) target = $region36
      $region35: #{t5_model_loss.6} parent=31 // pred_region
        %p208 = scmp.lt.s32.totalorder %s12, 1
        %s209 = scalar_select %p208, %s12, 1
        %s210 = smul.addr %s209, 8
        %s211 = scalar_lea.vmem %s0, %s210
      $region36: #{t5_model_loss.6} parent=31 // pred_fallthru
        _
      // Predicated region
      $region37: #{t5_model_loss.6} parent=31 // pred_check
        %p212 = pneg %p142
      $region38: #{t5_model_loss.6} parent=31 // pred_check_branch
        %214 = sbr.rel (%p212) target = $region40
      $region39: #{t5_model_loss.6} parent=31 // pred_region
        %p215 = scmp.lt.s32.totalorder %s12, 1
        %s216 = scalar_select %p215, %s12, 1
        %s217 = scalar_lea.vmem %s5, %s216
      $region40: #{t5_model_loss.6} parent=31 // pred_fallthru
        _
    $region32: #{t5_model_loss.6} parent=5 // pred_fallthru
      _
    %p218 = scmp.le.s32.totalorder 1, %s12
    %p219 = scmp.lt.s32.totalorder %s12, 3
    %p220 = pnand %p218, %p219
    %p221 = pneg %p220
    // Predicated region
    $region41: #{t5_model_loss.6} parent=5 // pred_check
      _
    $region42: #{t5_model_loss.6} parent=5 // pred_check_branch
      %223 = sbr.rel (%p220) target = $region44
    $region43: #{t5_model_loss.6} parent=5 // pred_region
      %s224 = ssub.s32 %s12, 1
      %p225 = scmp.lt.s32.totalorder %s17, 1
      %s226 = scalar_select %p225, %s17, 1
      %s227 = smul.addr %s226, 8
      %s228 = scalar_lea.vmem %s0, %s227
      %p229 = pneg %p38
      %p230 = pneg %p35
      %p231 = pneg %p59
      %p232 = pneg %p56
      %p233 = pneg %p80
      %p234 = pneg %p77
      %p235 = pneg %p101
      %p236 = pneg %p98
      %p237 = pneg %p122
      %p238 = pneg %p119
      %p239 = scmp.lt.s32.totalorder %s17, 1
      %s240 = scalar_select %p239, %s17, 1
      %s241 = scalar_lea.vmem %s5, %s240
      %p242 = pneg %p148
      %p243 = pneg %p145
      %p244 = pneg %p174
      %p245 = pneg %p171
      %p246 = scmp.lt.s32.totalorder %s17, 1
      %s247 = scalar_select %p246, %s17, 1
      %s248 = smul.addr %s247, 8
      %s249 = scalar_lea.vmem %s6, %s248
      %p250 = scmp.lt.s32.totalorder %s17, 1
      %s251 = scalar_select %p250, %s17, 1
      %s252 = smul.addr %s251, 8
      %s253 = scalar_lea.vmem %s0, %s252
      %p254 = scmp.lt.s32.totalorder %s17, 1
      %s255 = scalar_select %p254, %s17, 1
      %s256 = scalar_lea.vmem %s5, %s255
      %p257 = scmp.lt.s32.totalorder %s17, 1
      %s258 = scalar_select %p257, %s17, 1
      %s259 = smul.addr %s258, 8
      %s260 = scalar_lea.vmem %s6, %s259
      %v262 = vld [vmem:[%s253] sm:$0xff]
      %v263 = vld [vmem:[%s1] sm:$0x1]
      %v264 = vmul.f32 %v262, %v262
      %265 = vadd.xlane.f32.xlu0 %v264
      %v266 = vpop.xlane.xlu0 %265
      %v267 = vrcp.pop 128.0
      %v268 = vmul.f32 %v266, %v267
      %v269 = vadd.f32 %v268, 1e-06
      %v270 = vrsqrt.pop %v269
      %v271 = vmul.f32 %v262, %v270
      %v273 = vlaneseq
      %v274 = vshrl.u32 %v273, 7
      %v275 = vsub.s32 0, %v274
      %v276 = vrot.slane %v263, %v275
      %v278 = vmul.f32 %v271, %v276
      %v279 = vpack.c.bf16 %v278, %v278
      %v280 = vld [vmem:[%s2] sm:$0xff]
      %v281 = vld [vmem:[%s2 + $0x8] sm:$0xf]
      %v282 = vld [vmem:[%s2 + $0xc] sm:$0xff]
      %v283 = vld [vmem:[%s2 + $0x14] sm:$0xf]
      %v284 = vld [vmem:[%s2 + $0x18] sm:$0xff]
      %v285 = vld [vmem:[%s2 + $0x20] sm:$0xf]
      %v286 = vld [vmem:[%s2 + $0x24] sm:$0xff]
      %v287 = vld [vmem:[%s2 + $0x2c] sm:$0xf]
      %v288 = vld [vmem:[%s2 + $0x30] sm:$0xff]
      %v289 = vld [vmem:[%s2 + $0x38] sm:$0xf]
      %v290 = vld [vmem:[%s2 + $0x3c] sm:$0xff]
      %v291 = vld [vmem:[%s2 + $0x44] sm:$0xf]
      %v292 = vld [vmem:[%s2 + $0x48] sm:$0xff]
      %v293 = vld [vmem:[%s2 + $0x50] sm:$0xf]
      %v294 = vld [vmem:[%s2 + $0x54] sm:$0xff]
      %v295 = vld [vmem:[%s2 + $0x5c] sm:$0xf]
      %v296 = vld [vmem:[%s2 + $0x60] sm:$0xff]
      %v297 = vld [vmem:[%s2 + $0x68] sm:$0xf]
      %v298 = vld [vmem:[%s2 + $0x6c] sm:$0xff]
      %v299 = vld [vmem:[%s2 + $0x74] sm:$0xf]
      %v300 = vld [vmem:[%s2 + $0x78] sm:$0xff]
      %v301 = vld [vmem:[%s2 + $0x80] sm:$0xf]
      %v302 = vld [vmem:[%s2 + $0x84] sm:$0xff]
      %v303 = vld [vmem:[%s2 + $0x8c] sm:$0xf]
      %v304 = vld [vmem:[%s2 + $0x90] sm:$0xff]
      %v305 = vld [vmem:[%s2 + $0x98] sm:$0xf]
      %v306 = vld [vmem:[%s2 + $0x9c] sm:$0xff]
      %v307 = vld [vmem:[%s2 + $0xa4] sm:$0xf]
      %v308 = vld [vmem:[%s2 + $0xa8] sm:$0xff]
      %v309 = vld [vmem:[%s2 + $0xb0] sm:$0xf]
      %v310 = vld [vmem:[%s2 + $0xb4] sm:$0xff]
      %v311 = vld [vmem:[%s2 + $0xbc] sm:$0xf]
      %v344 = vunpack.c.l.b16 %v280
      %v345 = vunpack.c.h.b16 %v280
      %v346 = vunpack.c.l.b16 %v281
      %v347 = vunpack.c.l.b16 %v282
      %v348 = vunpack.c.h.b16 %v282
      %v349 = vunpack.c.l.b16 %v283
      %v350 = vunpack.c.l.b16 %v284
      %v351 = vunpack.c.h.b16 %v284
      %v352 = vunpack.c.l.b16 %v285
      %v353 = vunpack.c.l.b16 %v286
      %v354 = vunpack.c.h.b16 %v286
      %v355 = vunpack.c.l.b16 %v287
      %v356 = vunpack.c.l.b16 %v288
      %v357 = vunpack.c.h.b16 %v288
      %v358 = vunpack.c.l.b16 %v289
      %v359 = vunpack.c.l.b16 %v290
      %v360 = vunpack.c.h.b16 %v290
      %v361 = vunpack.c.l.b16 %v291
      %v362 = vunpack.c.l.b16 %v292
      %v363 = vunpack.c.h.b16 %v292
      %v364 = vunpack.c.l.b16 %v293
      %v365 = vunpack.c.l.b16 %v294
      %v366 = vunpack.c.h.b16 %v294
      %v367 = vunpack.c.l.b16 %v295
      %v368 = vunpack.c.l.b16 %v296
      %v369 = vunpack.c.h.b16 %v296
      %v370 = vunpack.c.l.b16 %v297
      %v371 = vunpack.c.l.b16 %v298
      %v372 = vunpack.c.h.b16 %v298
      %v373 = vunpack.c.l.b16 %v299
      %v374 = vunpack.c.l.b16 %v300
      %v375 = vunpack.c.h.b16 %v300
      %v376 = vunpack.c.l.b16 %v301
      %v377 = vunpack.c.l.b16 %v302
      %v378 = vunpack.c.h.b16 %v302
      %v379 = vunpack.c.l.b16 %v303
      %v380 = vunpack.c.l.b16 %v304
      %v381 = vunpack.c.h.b16 %v304
      %v382 = vunpack.c.l.b16 %v305
      %v383 = vunpack.c.l.b16 %v306
      %v384 = vunpack.c.h.b16 %v306
      %v385 = vunpack.c.l.b16 %v307
      %v386 = vunpack.c.l.b16 %v308
      %v387 = vunpack.c.h.b16 %v308
      %v388 = vunpack.c.l.b16 %v309
      %v389 = vunpack.c.l.b16 %v310
      %v390 = vunpack.c.h.b16 %v310
      %v391 = vunpack.c.l.b16 %v311
      %v392 = vpack.c.b16 %v347, %v344
      %v393 = vpack.c.b16 %v348, %v345
      %v394 = vpack.c.b16 %v349, %v346
      %v395 = vpack.c.b16 %v353, %v350
      %v396 = vpack.c.b16 %v354, %v351
      %v397 = vpack.c.b16 %v355, %v352
      %v398 = vpack.c.b16 %v359, %v356
      %v399 = vpack.c.b16 %v360, %v357
      %v400 = vpack.c.b16 %v361, %v358
      %v401 = vpack.c.b16 %v365, %v362
      %v402 = vpack.c.b16 %v366, %v363
      %v403 = vpack.c.b16 %v367, %v364
      %v404 = vpack.c.b16 %v371, %v368
      %v405 = vpack.c.b16 %v372, %v369
      %v406 = vpack.c.b16 %v373, %v370
      %v407 = vpack.c.b16 %v377, %v374
      %v408 = vpack.c.b16 %v378, %v375
      %v409 = vpack.c.b16 %v379, %v376
      %v410 = vpack.c.b16 %v383, %v380
      %v411 = vpack.c.b16 %v384, %v381
      %v412 = vpack.c.b16 %v385, %v382
      %v413 = vpack.c.b16 %v389, %v386
      %v414 = vpack.c.b16 %v390, %v387
      %v415 = vpack.c.b16 %v391, %v388
      %440 = vmatprep.subr.bf16.mxu0 %v414
      %441 = vmatpush1.bf16.msra.mxu0 %v413
      %442 = vmatprep.subr.bf16.mxu0 %v411
      %443 = vmatpush1.bf16.msra.mxu0 %v410
      %444 = vmatprep.subr.bf16.mxu0 %v408
      %445 = vmatpush1.bf16.msra.mxu0 %v407
      %446 = vmatprep.subr.bf16.mxu0 %v405
      %447 = vmatpush1.bf16.msra.mxu0 %v404
      %448 = vmatprep.subr.bf16.mxu0 %v402
      %449 = vmatpush1.bf16.msra.mxu0 %v401
      %450 = vmatprep.subr.bf16.mxu0 %v399
      %451 = vmatpush1.bf16.msra.mxu0 %v398
      %452 = vmatprep.subr.bf16.mxu0 %v396
      %453 = vmatpush1.bf16.msra.mxu0 %v395
      %454 = vmatprep.subr.bf16.mxu0 %v393
      %455 = vmatpush1.bf16.msra.mxu0 %v392
      %456 = vmatprep.subr.bf16.mxu0 0
      %457 = vmatpush2.bf16.msra.mxu0 0
      %458 = vmatprep.subr.bf16.mxu0 0
      %459 = vmatpush2.bf16.msra.mxu0 0
      %460 = vmatprep.subr.bf16.mxu0 0
      %461 = vmatpush2.bf16.msra.mxu0 0
      %462 = vmatprep.subr.bf16.mxu0 0
      %463 = vmatpush2.bf16.msra.mxu0 0
      %464 = vmatprep.subr.bf16.mxu0 0
      %465 = vmatpush2.bf16.msra.mxu0 0
      %466 = vmatprep.subr.bf16.mxu0 0
      %467 = vmatpush2.bf16.msra.mxu0 0
      %468 = vmatprep.subr.bf16.mxu0 0
      %469 = vmatpush2.bf16.msra.mxu0 0
      %470 = vmatprep.subr.bf16.mxu0 0
      %471 = vmatpush2.bf16.msra.mxu0 0
      %472 = vmatprep.mubr.bf16.mxu0 0
      %473 = vmatmul.mubr.bf16.gmra.mxu0 %v279
      %v474 = vpop.f32.mrf.mxu0
      %v475 = vadd.f32 0.0, %v474
      %v476 = vpop.f32.mrf.mxu0
      %v477 = vadd.f32 0.0, %v476
      %v478 = vpop.f32.mrf.mxu0
      %v479 = vpop.f32.mrf.mxu0
      %480 = vdwg.mxu0
      %481 = vmatprep.subr.bf16.mxu0 0
      %482 = vmatpush1.bf16.msra.mxu0 %v415
      %483 = vmatprep.subr.bf16.mxu0 0
      %484 = vmatpush1.bf16.msra.mxu0 %v412
      %485 = vmatprep.subr.bf16.mxu0 0
      %486 = vmatpush1.bf16.msra.mxu0 %v409
      %487 = vmatprep.subr.bf16.mxu0 0
      %488 = vmatpush1.bf16.msra.mxu0 %v406
      %489 = vmatprep.subr.bf16.mxu0 0
      %490 = vmatpush1.bf16.msra.mxu0 %v403
      %491 = vmatprep.subr.bf16.mxu0 0
      %492 = vmatpush1.bf16.msra.mxu0 %v400
      %493 = vmatprep.subr.bf16.mxu0 0
      %494 = vmatpush1.bf16.msra.mxu0 %v397
      %495 = vmatprep.subr.bf16.mxu0 0
      %496 = vmatpush1.bf16.msra.mxu0 %v394
      %497 = vmatprep.subr.bf16.mxu0 0
      %498 = vmatpush2.bf16.msra.mxu0 0
      %499 = vmatprep.subr.bf16.mxu0 0
      %500 = vmatpush2.bf16.msra.mxu0 0
      %501 = vmatprep.subr.bf16.mxu0 0
      %502 = vmatpush2.bf16.msra.mxu0 0
      %503 = vmatprep.subr.bf16.mxu0 0
      %504 = vmatpush2.bf16.msra.mxu0 0
      %505 = vmatprep.subr.bf16.mxu0 0
      %506 = vmatpush2.bf16.msra.mxu0 0
      %507 = vmatprep.subr.bf16.mxu0 0
      %508 = vmatpush2.bf16.msra.mxu0 0
      %509 = vmatprep.subr.bf16.mxu0 0
      %510 = vmatpush2.bf16.msra.mxu0 0
      %511 = vmatprep.subr.bf16.mxu0 0
      %512 = vmatpush2.bf16.msra.mxu0 0
      %513 = vmatprep.mubr.bf16.mxu0 0
      %514 = vmatmul.mubr.bf16.gmra.mxu0 %v279
      %v515 = vpop.f32.mrf.mxu0
      %v516 = vadd.f32 0.0, %v515
      %v517 = vpop.f32.mrf.mxu0
      %v518 = vpop.f32.mrf.mxu0
      %v519 = vpop.f32.mrf.mxu0
      %520 = vdwg.mxu0
      %v521 = vld [vmem:[%s4] sm:$0xff]
      %v522 = vld [vmem:[%s4 + $0x8] sm:$0xff]
      %v523 = vld [vmem:[%s4 + $0x10] sm:$0xff]
      %v524 = vld [vmem:[%s4 + $0x18] sm:$0xff]
      %v525 = vld [vmem:[%s256] sm:$0x1]
      %v526 = vpack.c.bf16 %v475, %v475
      %v527 = vpack.c.bf16 %v477, %v477
      %v528 = vpack.c.bf16 %v516, %v516
      %vm529 = vcmask 261120
      %v531 = vsel %vm529, %v526, 0
      %v534 = vsel %vm529, %v527, 0
      %536 = vmatprep.subr.bf16.mxu0 0
      %537 = vmatpush1.bf16.xpose.msra.mxu0 0
      %538 = vmatprep.subr.bf16.mxu0 0
      %539 = vmatpush1.bf16.xpose.msra.mxu0 0
      %540 = vmatprep.subr.bf16.mxu0 0
      %541 = vmatpush1.bf16.xpose.msra.mxu0 0
      %542 = vmatprep.subr.bf16.mxu0 0
      %543 = vmatpush1.bf16.xpose.msra.mxu0 0
      %544 = vmatprep.subr.bf16.mxu0 0
      %545 = vmatpush1.bf16.xpose.msra.mxu0 0
      %546 = vmatprep.subr.bf16.mxu0 0
      %547 = vmatpush1.bf16.xpose.msra.mxu0 0
      %548 = vmatprep.subr.bf16.mxu0 0
      %549 = vmatpush1.bf16.xpose.msra.mxu0 0
      %550 = vmatprep.subr.bf16.mxu0 0
      %551 = vmatpush1.bf16.xpose.msra.mxu0 %v534
      %552 = vmatprep.subr.bf16.mxu0 0
      %553 = vmatpush2.bf16.xpose.msra.mxu0 0
      %554 = vmatprep.subr.bf16.mxu0 0
      %555 = vmatpush2.bf16.xpose.msra.mxu0 0
      %556 = vmatprep.subr.bf16.mxu0 0
      %557 = vmatpush2.bf16.xpose.msra.mxu0 0
      %558 = vmatprep.subr.bf16.mxu0 0
      %559 = vmatpush2.bf16.xpose.msra.mxu0 0
      %560 = vmatprep.subr.bf16.mxu0 0
      %561 = vmatpush2.bf16.xpose.msra.mxu0 0
      %562 = vmatprep.subr.bf16.mxu0 0
      %563 = vmatpush2.bf16.xpose.msra.mxu0 0
      %564 = vmatprep.subr.bf16.mxu0 0
      %565 = vmatpush2.bf16.xpose.msra.mxu0 0
      %566 = vmatprep.subr.bf16.mxu0 0
      %567 = vmatpush2.bf16.xpose.msra.mxu0 0
      %568 = vmatprep.mubr.bf16.mxu0 0
      %569 = vmatmul.mubr.bf16.gmra.mxu0 %v531
      %v570 = vpop.f32.mrf.mxu0
      %v571 = vadd.f32 %v521, %v570
      %v572 = vpop.f32.mrf.mxu0
      %v573 = vpop.f32.mrf.mxu0
      %v574 = vpop.f32.mrf.mxu0
      %575 = vdwg.mxu0
      %v577 = vlaneseq
      %v578 = vshrl.u32 %v577, 7
      %v579 = vsub.s32 0, %v578
      %v580 = vrot.slane %v525, %v579
      %v582 = vadd.f32 %v571, %v580
      %vm583 = vcmask 64512
      %v584 = vsel %vm583, %v582, -inf
      %585 = vmax.xlane.f32.xlu0 %v584
      %v586 = vpop.xlane.xlu0 %585
      %v587 = vsub.f32 %v582, %v586
      %v588 = vmul.f32 %v587, 1.442695
      %v589 = vpow.pop %v588
      %v590 = vsel %vm583, %v589, 0.0
      %591 = vadd.xlane.f32.xlu0 %v590
      %v592 = vpop.xlane.xlu0 %591
      %v593 = vrcp.pop %v592
      %v594 = vmul.f32 %v589, %v593
      %v595 = vpack.c.bf16 %v594, %v594
      %v597 = vsel %vm583, %v595, 0
      %vm599 = vcmask 1043456
      %v601 = vsel %vm599, %v528, 0
      %603 = vmatprep.subr.bf16.mxu0 0
      %604 = vmatpush1.bf16.msra.mxu0 0
      %605 = vmatprep.subr.bf16.mxu0 0
      %606 = vmatpush1.bf16.msra.mxu0 0
      %607 = vmatprep.subr.bf16.mxu0 0
      %608 = vmatpush1.bf16.msra.mxu0 0
      %609 = vmatprep.subr.bf16.mxu0 0
      %610 = vmatpush1.bf16.msra.mxu0 0
      %611 = vmatprep.subr.bf16.mxu0 0
      %612 = vmatpush1.bf16.msra.mxu0 0
      %613 = vmatprep.subr.bf16.mxu0 0
      %614 = vmatpush1.bf16.msra.mxu0 0
      %615 = vmatprep.subr.bf16.mxu0 0
      %616 = vmatpush1.bf16.msra.mxu0 0
      %617 = vmatprep.subr.bf16.mxu0 0
      %618 = vmatpush1.bf16.msra.mxu0 %v601
      %619 = vmatprep.subr.bf16.mxu0 0
      %620 = vmatpush2.bf16.msra.mxu0 0
      %621 = vmatprep.subr.bf16.mxu0 0
      %622 = vmatpush2.bf16.msra.mxu0 0
      %623 = vmatprep.subr.bf16.mxu0 0
      %624 = vmatpush2.bf16.msra.mxu0 0
      %625 = vmatprep.subr.bf16.mxu0 0
      %626 = vmatpush2.bf16.msra.mxu0 0
      %627 = vmatprep.subr.bf16.mxu0 0
      %628 = vmatpush2.bf16.msra.mxu0 0
      %629 = vmatprep.subr.bf16.mxu0 0
      %630 = vmatpush2.bf16.msra.mxu0 0
      %631 = vmatprep.subr.bf16.mxu0 0
      %632 = vmatpush2.bf16.msra.mxu0 0
      %633 = vmatprep.subr.bf16.mxu0 0
      %634 = vmatpush2.bf16.msra.mxu0 0
      %635 = vmatprep.mubr.bf16.mxu0 0
      %636 = vmatmul.mubr.bf16.gmra.mxu0 %v597
      %v637 = vpop.f32.mrf.mxu0
      %v638 = vadd.f32 0.0, %v637
      %v639 = vpop.f32.mrf.mxu0
      %v640 = vpop.f32.mrf.mxu0
      %v641 = vpop.f32.mrf.mxu0
      %642 = vdwg.mxu0
      %644 = vrot.lane.b32.xlu0 %v526, 96
      %v645 = vpop.permute.xlu0 %644
      %647 = vrot.lane.b32.xlu0 %v527, 96
      %v648 = vpop.permute.xlu0 %647
      %v650 = vsel %vm529, %v645, 0
      %v653 = vsel %vm529, %v648, 0
      %655 = vmatprep.subr.bf16.mxu0 0
      %656 = vmatpush1.bf16.xpose.msra.mxu0 0
      %657 = vmatprep.subr.bf16.mxu0 0
      %658 = vmatpush1.bf16.xpose.msra.mxu0 0
      %659 = vmatprep.subr.bf16.mxu0 0
      %660 = vmatpush1.bf16.xpose.msra.mxu0 0
      %661 = vmatprep.subr.bf16.mxu0 0
      %662 = vmatpush1.bf16.xpose.msra.mxu0 0
      %663 = vmatprep.subr.bf16.mxu0 0
      %664 = vmatpush1.bf16.xpose.msra.mxu0 0
      %665 = vmatprep.subr.bf16.mxu0 0
      %666 = vmatpush1.bf16.xpose.msra.mxu0 0
      %667 = vmatprep.subr.bf16.mxu0 0
      %668 = vmatpush1.bf16.xpose.msra.mxu0 0
      %669 = vmatprep.subr.bf16.mxu0 0
      %670 = vmatpush1.bf16.xpose.msra.mxu0 %v653
      %671 = vmatprep.subr.bf16.mxu0 0
      %672 = vmatpush2.bf16.xpose.msra.mxu0 0
      %673 = vmatprep.subr.bf16.mxu0 0
      %674 = vmatpush2.bf16.xpose.msra.mxu0 0
      %675 = vmatprep.subr.bf16.mxu0 0
      %676 = vmatpush2.bf16.xpose.msra.mxu0 0
      %677 = vmatprep.subr.bf16.mxu0 0
      %678 = vmatpush2.bf16.xpose.msra.mxu0 0
      %679 = vmatprep.subr.bf16.mxu0 0
      %680 = vmatpush2.bf16.xpose.msra.mxu0 0
      %681 = vmatprep.subr.bf16.mxu0 0
      %682 = vmatpush2.bf16.xpose.msra.mxu0 0
      %683 = vmatprep.subr.bf16.mxu0 0
      %684 = vmatpush2.bf16.xpose.msra.mxu0 0
      %685 = vmatprep.subr.bf16.mxu0 0
      %686 = vmatpush2.bf16.xpose.msra.mxu0 0
      %687 = vmatprep.mubr.bf16.mxu0 0
      %688 = vmatmul.mubr.bf16.gmra.mxu0 %v650
      %v689 = vpop.f32.mrf.mxu0
      %v690 = vadd.f32 %v522, %v689
      %v691 = vpop.f32.mrf.mxu0
      %v692 = vpop.f32.mrf.mxu0
      %v693 = vpop.f32.mrf.mxu0
      %694 = vdwg.mxu0
      %v695 = vadd.f32 %v690, %v580
      %v696 = vsel %vm583, %v695, -inf
      %697 = vmax.xlane.f32.xlu0 %v696
      %v698 = vpop.xlane.xlu0 %697
      %v699 = vsub.f32 %v695, %v698
      %v700 = vmul.f32 %v699, 1.442695
      %v701 = vpow.pop %v700
      %v702 = vsel %vm583, %v701, 0.0
      %703 = vadd.xlane.f32.xlu0 %v702
      %v704 = vpop.xlane.xlu0 %703
      %v705 = vrcp.pop %v704
      %v706 = vmul.f32 %v701, %v705
      %v707 = vpack.c.bf16 %v706, %v706
      %709 = vrot.lane.b32.xlu0 %v528, 96
      %v710 = vpop.permute.xlu0 %709
      %v712 = vsel %vm583, %v707, 0
      %v715 = vsel %vm599, %v710, 0
      %717 = vmatprep.subr.bf16.mxu0 0
      %718 = vmatpush1.bf16.msra.mxu0 0
      %719 = vmatprep.subr.bf16.mxu0 0
      %720 = vmatpush1.bf16.msra.mxu0 0
      %721 = vmatprep.subr.bf16.mxu0 0
      %722 = vmatpush1.bf16.msra.mxu0 0
      %723 = vmatprep.subr.bf16.mxu0 0
      %724 = vmatpush1.bf16.msra.mxu0 0
      %725 = vmatprep.subr.bf16.mxu0 0
      %726 = vmatpush1.bf16.msra.mxu0 0
      %727 = vmatprep.subr.bf16.mxu0 0
      %728 = vmatpush1.bf16.msra.mxu0 0
      %729 = vmatprep.subr.bf16.mxu0 0
      %730 = vmatpush1.bf16.msra.mxu0 0
      %731 = vmatprep.subr.bf16.mxu0 0
      %732 = vmatpush1.bf16.msra.mxu0 %v715
      %733 = vmatprep.subr.bf16.mxu0 0
      %734 = vmatpush2.bf16.msra.mxu0 0
      %735 = vmatprep.subr.bf16.mxu0 0
      %736 = vmatpush2.bf16.msra.mxu0 0
      %737 = vmatprep.subr.bf16.mxu0 0
      %738 = vmatpush2.bf16.msra.mxu0 0
      %739 = vmatprep.subr.bf16.mxu0 0
      %740 = vmatpush2.bf16.msra.mxu0 0
      %741 = vmatprep.subr.bf16.mxu0 0
      %742 = vmatpush2.bf16.msra.mxu0 0
      %743 = vmatprep.subr.bf16.mxu0 0
      %744 = vmatpush2.bf16.msra.mxu0 0
      %745 = vmatprep.subr.bf16.mxu0 0
      %746 = vmatpush2.bf16.msra.mxu0 0
      %747 = vmatprep.subr.bf16.mxu0 0
      %748 = vmatpush2.bf16.msra.mxu0 0
      %749 = vmatprep.mubr.bf16.mxu0 0
      %750 = vmatmul.mubr.bf16.gmra.mxu0 %v712
      %v751 = vpop.f32.mrf.mxu0
      %v752 = vadd.f32 0.0, %v751
      %v753 = vpop.f32.mrf.mxu0
      %v754 = vpop.f32.mrf.mxu0
      %v755 = vpop.f32.mrf.mxu0
      %756 = vdwg.mxu0
      %757 = vrot.lane.b32.xlu0 %v526, 64
      %v758 = vpop.permute.xlu0 %757
      %759 = vrot.lane.b32.xlu0 %v527, 64
      %v760 = vpop.permute.xlu0 %759
      %v762 = vsel %vm529, %v758, 0
      %v765 = vsel %vm529, %v760, 0
      %767 = vmatprep.subr.bf16.mxu0 0
      %768 = vmatpush1.bf16.xpose.msra.mxu0 0
      %769 = vmatprep.subr.bf16.mxu0 0
      %770 = vmatpush1.bf16.xpose.msra.mxu0 0
      %771 = vmatprep.subr.bf16.mxu0 0
      %772 = vmatpush1.bf16.xpose.msra.mxu0 0
      %773 = vmatprep.subr.bf16.mxu0 0
      %774 = vmatpush1.bf16.xpose.msra.mxu0 0
      %775 = vmatprep.subr.bf16.mxu0 0
      %776 = vmatpush1.bf16.xpose.msra.mxu0 0
      %777 = vmatprep.subr.bf16.mxu0 0
      %778 = vmatpush1.bf16.xpose.msra.mxu0 0
      %779 = vmatprep.subr.bf16.mxu0 0
      %780 = vmatpush1.bf16.xpose.msra.mxu0 0
      %781 = vmatprep.subr.bf16.mxu0 0
      %782 = vmatpush1.bf16.xpose.msra.mxu0 %v765
      %783 = vmatprep.subr.bf16.mxu0 0
      %784 = vmatpush2.bf16.xpose.msra.mxu0 0
      %785 = vmatprep.subr.bf16.mxu0 0
      %786 = vmatpush2.bf16.xpose.msra.mxu0 0
      %787 = vmatprep.subr.bf16.mxu0 0
      %788 = vmatpush2.bf16.xpose.msra.mxu0 0
      %789 = vmatprep.subr.bf16.mxu0 0
      %790 = vmatpush2.bf16.xpose.msra.mxu0 0
      %791 = vmatprep.subr.bf16.mxu0 0
      %792 = vmatpush2.bf16.xpose.msra.mxu0 0
      %793 = vmatprep.subr.bf16.mxu0 0
      %794 = vmatpush2.bf16.xpose.msra.mxu0 0
      %795 = vmatprep.subr.bf16.mxu0 0
      %796 = vmatpush2.bf16.xpose.msra.mxu0 0
      %797 = vmatprep.subr.bf16.mxu0 0
      %798 = vmatpush2.bf16.xpose.msra.mxu0 0
      %799 = vmatprep.mubr.bf16.mxu0 0
      %800 = vmatmul.mubr.bf16.gmra.mxu0 %v762
      %v801 = vpop.f32.mrf.mxu0
      %v802 = vadd.f32 %v523, %v801
      %v803 = vpop.f32.mrf.mxu0
      %v804 = vpop.f32.mrf.mxu0
      %v805 = vpop.f32.mrf.mxu0
      %806 = vdwg.mxu0
      %v807 = vadd.f32 %v802, %v580
      %v808 = vsel %vm583, %v807, -inf
      %809 = vmax.xlane.f32.xlu0 %v808
      %v810 = vpop.xlane.xlu0 %809
      %v811 = vsub.f32 %v807, %v810
      %v812 = vmul.f32 %v811, 1.442695
      %v813 = vpow.pop %v812
      %v814 = vsel %vm583, %v813, 0.0
      %815 = vadd.xlane.f32.xlu0 %v814
      %v816 = vpop.xlane.xlu0 %815
      %v817 = vrcp.pop %v816
      %v818 = vmul.f32 %v813, %v817
      %v819 = vpack.c.bf16 %v818, %v818
      %820 = vrot.lane.b32.xlu0 %v528, 64
      %v821 = vpop.permute.xlu0 %820
      %v823 = vsel %vm583, %v819, 0
      %v826 = vsel %vm599, %v821, 0
      %828 = vmatprep.subr.bf16.mxu0 0
      %829 = vmatpush1.bf16.msra.mxu0 0
      %830 = vmatprep.subr.bf16.mxu0 0
      %831 = vmatpush1.bf16.msra.mxu0 0
      %832 = vmatprep.subr.bf16.mxu0 0
      %833 = vmatpush1.bf16.msra.mxu0 0
      %834 = vmatprep.subr.bf16.mxu0 0
      %835 = vmatpush1.bf16.msra.mxu0 0
      %836 = vmatprep.subr.bf16.mxu0 0
      %837 = vmatpush1.bf16.msra.mxu0 0
      %838 = vmatprep.subr.bf16.mxu0 0
      %839 = vmatpush1.bf16.msra.mxu0 0
      %840 = vmatprep.subr.bf16.mxu0 0
      %841 = vmatpush1.bf16.msra.mxu0 0
      %842 = vmatprep.subr.bf16.mxu0 0
      %843 = vmatpush1.bf16.msra.mxu0 %v826
      %844 = vmatprep.subr.bf16.mxu0 0
      %845 = vmatpush2.bf16.msra.mxu0 0
      %846 = vmatprep.subr.bf16.mxu0 0
      %847 = vmatpush2.bf16.msra.mxu0 0
      %848 = vmatprep.subr.bf16.mxu0 0
      %849 = vmatpush2.bf16.msra.mxu0 0
      %850 = vmatprep.subr.bf16.mxu0 0
      %851 = vmatpush2.bf16.msra.mxu0 0
      %852 = vmatprep.subr.bf16.mxu0 0
      %853 = vmatpush2.bf16.msra.mxu0 0
      %854 = vmatprep.subr.bf16.mxu0 0
      %855 = vmatpush2.bf16.msra.mxu0 0
      %856 = vmatprep.subr.bf16.mxu0 0
      %857 = vmatpush2.bf16.msra.mxu0 0
      %858 = vmatprep.subr.bf16.mxu0 0
      %859 = vmatpush2.bf16.msra.mxu0 0
      %860 = vmatprep.mubr.bf16.mxu0 0
      %861 = vmatmul.mubr.bf16.gmra.mxu0 %v823
      %v862 = vpop.f32.mrf.mxu0
      %v863 = vadd.f32 0.0, %v862
      %v864 = vpop.f32.mrf.mxu0
      %v865 = vpop.f32.mrf.mxu0
      %v866 = vpop.f32.mrf.mxu0
      %867 = vdwg.mxu0
      %868 = vrot.lane.b32.xlu0 %v526, 32
      %v869 = vpop.permute.xlu0 %868
      %870 = vrot.lane.b32.xlu0 %v527, 32
      %v871 = vpop.permute.xlu0 %870
      %v873 = vsel %vm529, %v869, 0
      %v876 = vsel %vm529, %v871, 0
      %878 = vmatprep.subr.bf16.mxu0 0
      %879 = vmatpush1.bf16.xpose.msra.mxu0 0
      %880 = vmatprep.subr.bf16.mxu0 0
      %881 = vmatpush1.bf16.xpose.msra.mxu0 0
      %882 = vmatprep.subr.bf16.mxu0 0
      %883 = vmatpush1.bf16.xpose.msra.mxu0 0
      %884 = vmatprep.subr.bf16.mxu0 0
      %885 = vmatpush1.bf16.xpose.msra.mxu0 0
      %886 = vmatprep.subr.bf16.mxu0 0
      %887 = vmatpush1.bf16.xpose.msra.mxu0 0
      %888 = vmatprep.subr.bf16.mxu0 0
      %889 = vmatpush1.bf16.xpose.msra.mxu0 0
      %890 = vmatprep.subr.bf16.mxu0 0
      %891 = vmatpush1.bf16.xpose.msra.mxu0 0
      %892 = vmatprep.subr.bf16.mxu0 0
      %893 = vmatpush1.bf16.xpose.msra.mxu0 %v876
      %894 = vmatprep.subr.bf16.mxu0 0
      %895 = vmatpush2.bf16.xpose.msra.mxu0 0
      %896 = vmatprep.subr.bf16.mxu0 0
      %897 = vmatpush2.bf16.xpose.msra.mxu0 0
      %898 = vmatprep.subr.bf16.mxu0 0
      %899 = vmatpush2.bf16.xpose.msra.mxu0 0
      %900 = vmatprep.subr.bf16.mxu0 0
      %901 = vmatpush2.bf16.xpose.msra.mxu0 0
      %902 = vmatprep.subr.bf16.mxu0 0
      %903 = vmatpush2.bf16.xpose.msra.mxu0 0
      %904 = vmatprep.subr.bf16.mxu0 0
      %905 = vmatpush2.bf16.xpose.msra.mxu0 0
      %906 = vmatprep.subr.bf16.mxu0 0
      %907 = vmatpush2.bf16.xpose.msra.mxu0 0
      %908 = vmatprep.subr.bf16.mxu0 0
      %909 = vmatpush2.bf16.xpose.msra.mxu0 0
      %910 = vmatprep.mubr.bf16.mxu0 0
      %911 = vmatmul.mubr.bf16.gmra.mxu0 %v873
      %v912 = vpop.f32.mrf.mxu0
      %v913 = vadd.f32 %v524, %v912
      %v914 = vpop.f32.mrf.mxu0
      %v915 = vpop.f32.mrf.mxu0
      %v916 = vpop.f32.mrf.mxu0
      %917 = vdwg.mxu0
      %v918 = vadd.f32 %v913, %v580
      %v919 = vsel %vm583, %v918, -inf
      %920 = vmax.xlane.f32.xlu0 %v919
      %v921 = vpop.xlane.xlu0 %920
      %v922 = vsub.f32 %v918, %v921
      %v923 = vmul.f32 %v922, 1.442695
      %v924 = vpow.pop %v923
      %v925 = vsel %vm583, %v924, 0.0
      %926 = vadd.xlane.f32.xlu0 %v925
      %v927 = vpop.xlane.xlu0 %926
      %v928 = vrcp.pop %v927
      %v929 = vmul.f32 %v924, %v928
      %v930 = vpack.c.bf16 %v929, %v929
      %931 = vrot.lane.b32.xlu0 %v528, 32
      %v932 = vpop.permute.xlu0 %931
      %v934 = vsel %vm583, %v930, 0
      %v937 = vsel %vm599, %v932, 0
      %939 = vmatprep.subr.bf16.mxu0 0
      %940 = vmatpush1.bf16.msra.mxu0 0
      %941 = vmatprep.subr.bf16.mxu0 0
      %942 = vmatpush1.bf16.msra.mxu0 0
      %943 = vmatprep.subr.bf16.mxu0 0
      %944 = vmatpush1.bf16.msra.mxu0 0
      %945 = vmatprep.subr.bf16.mxu0 0
      %946 = vmatpush1.bf16.msra.mxu0 0
      %947 = vmatprep.subr.bf16.mxu0 0
      %948 = vmatpush1.bf16.msra.mxu0 0
      %949 = vmatprep.subr.bf16.mxu0 0
      %950 = vmatpush1.bf16.msra.mxu0 0
      %951 = vmatprep.subr.bf16.mxu0 0
      %952 = vmatpush1.bf16.msra.mxu0 0
      %953 = vmatprep.subr.bf16.mxu0 0
      %954 = vmatpush1.bf16.msra.mxu0 %v937
      %955 = vmatprep.subr.bf16.mxu0 0
      %956 = vmatpush2.bf16.msra.mxu0 0
      %957 = vmatprep.subr.bf16.mxu0 0
      %958 = vmatpush2.bf16.msra.mxu0 0
      %959 = vmatprep.subr.bf16.mxu0 0
      %960 = vmatpush2.bf16.msra.mxu0 0
      %961 = vmatprep.subr.bf16.mxu0 0
      %962 = vmatpush2.bf16.msra.mxu0 0
      %963 = vmatprep.subr.bf16.mxu0 0
      %964 = vmatpush2.bf16.msra.mxu0 0
      %965 = vmatprep.subr.bf16.mxu0 0
      %966 = vmatpush2.bf16.msra.mxu0 0
      %967 = vmatprep.subr.bf16.mxu0 0
      %968 = vmatpush2.bf16.msra.mxu0 0
      %969 = vmatprep.subr.bf16.mxu0 0
      %970 = vmatpush2.bf16.msra.mxu0 0
      %971 = vmatprep.mubr.bf16.mxu0 0
      %972 = vmatmul.mubr.bf16.gmra.mxu0 %v934
      %v973 = vpop.f32.mrf.mxu0
      %v974 = vadd.f32 0.0, %v973
      %v975 = vpop.f32.mrf.mxu0
      %v976 = vpop.f32.mrf.mxu0
      %v977 = vpop.f32.mrf.mxu0
      %978 = vdwg.mxu0
      %980 = vrot.lane.b32.xlu0 %v752, 32
      %v981 = vpop.permute.xlu0 %980
      %984 = vrot.lane.b32.xlu0 %v863, 64
      %v985 = vpop.permute.xlu0 %984
      %988 = vrot.lane.b32.xlu0 %v974, 96
      %v989 = vpop.permute.xlu0 %988
      %v991 = vsel %vm529, %v638, %v981
      %vm992 = vcmask 523264
      %v993 = vsel %vm992, %v991, %v985
      %vm994 = vcmask 785408
      %v995 = vsel %vm994, %v993, %v989
      %v996 = vpack.c.bf16 %v995, %v995
      %v997 = vld [vmem:[%s3] sm:$0xf]
      %v998 = vld [vmem:[%s3 + $0x4] sm:$0xf]
      %v999 = vld [vmem:[%s3 + $0x8] sm:$0xf]
      %v1000 = vld [vmem:[%s3 + $0xc] sm:$0xf]
      %v1001 = vld [vmem:[%s3 + $0x10] sm:$0xf]
      %v1002 = vld [vmem:[%s3 + $0x14] sm:$0xf]
      %v1003 = vld [vmem:[%s3 + $0x18] sm:$0xf]
      %v1004 = vld [vmem:[%s3 + $0x1c] sm:$0xf]
      %v1005 = vld [vmem:[%s3 + $0x20] sm:$0xf]
      %v1006 = vld [vmem:[%s3 + $0x24] sm:$0xf]
      %v1007 = vld [vmem:[%s3 + $0x28] sm:$0xf]
      %v1008 = vld [vmem:[%s3 + $0x2c] sm:$0xf]
      %v1009 = vld [vmem:[%s3 + $0x30] sm:$0xf]
      %v1010 = vld [vmem:[%s3 + $0x34] sm:$0xf]
      %v1011 = vld [vmem:[%s3 + $0x38] sm:$0xf]
      %v1012 = vld [vmem:[%s3 + $0x3c] sm:$0xf]
      %v1029 = vunpack.c.l.b16 %v997
      %v1030 = vunpack.c.l.b16 %v998
      %v1031 = vunpack.c.l.b16 %v999
      %v1032 = vunpack.c.l.b16 %v1000
      %v1033 = vunpack.c.l.b16 %v1001
      %v1034 = vunpack.c.l.b16 %v1002
      %v1035 = vunpack.c.l.b16 %v1003
      %v1036 = vunpack.c.l.b16 %v1004
      %v1037 = vunpack.c.l.b16 %v1005
      %v1038 = vunpack.c.l.b16 %v1006
      %v1039 = vunpack.c.l.b16 %v1007
      %v1040 = vunpack.c.l.b16 %v1008
      %v1041 = vunpack.c.l.b16 %v1009
      %v1042 = vunpack.c.l.b16 %v1010
      %v1043 = vunpack.c.l.b16 %v1011
      %v1044 = vunpack.c.l.b16 %v1012
      %v1045 = vpack.c.b16 %v1030, %v1029
      %v1046 = vpack.c.b16 %v1032, %v1031
      %v1047 = vpack.c.b16 %v1034, %v1033
      %v1048 = vpack.c.b16 %v1036, %v1035
      %v1049 = vpack.c.b16 %v1038, %v1037
      %v1050 = vpack.c.b16 %v1040, %v1039
      %v1051 = vpack.c.b16 %v1042, %v1041
      %v1052 = vpack.c.b16 %v1044, %v1043
      %1061 = vmatprep.subr.bf16.mxu0 0
      %1062 = vmatpush1.bf16.msra.mxu0 %v1052
      %1063 = vmatprep.subr.bf16.mxu0 0
      %1064 = vmatpush1.bf16.msra.mxu0 %v1051
      %1065 = vmatprep.subr.bf16.mxu0 0
      %1066 = vmatpush1.bf16.msra.mxu0 %v1050
      %1067 = vmatprep.subr.bf16.mxu0 0
      %1068 = vmatpush1.bf16.msra.mxu0 %v1049
      %1069 = vmatprep.subr.bf16.mxu0 0
      %1070 = vmatpush1.bf16.msra.mxu0 %v1048
      %1071 = vmatprep.subr.bf16.mxu0 0
      %1072 = vmatpush1.bf16.msra.mxu0 %v1047
      %1073 = vmatprep.subr.bf16.mxu0 0
      %1074 = vmatpush1.bf16.msra.mxu0 %v1046
      %1075 = vmatprep.subr.bf16.mxu0 0
      %1076 = vmatpush1.bf16.msra.mxu0 %v1045
      %1077 = vmatprep.subr.bf16.mxu0 0
      %1078 = vmatpush2.bf16.msra.mxu0 0
      %1079 = vmatprep.subr.bf16.mxu0 0
      %1080 = vmatpush2.bf16.msra.mxu0 0
      %1081 = vmatprep.subr.bf16.mxu0 0
      %1082 = vmatpush2.bf16.msra.mxu0 0
      %1083 = vmatprep.subr.bf16.mxu0 0
      %1084 = vmatpush2.bf16.msra.mxu0 0
      %1085 = vmatprep.subr.bf16.mxu0 0
      %1086 = vmatpush2.bf16.msra.mxu0 0
      %1087 = vmatprep.subr.bf16.mxu0 0
      %1088 = vmatpush2.bf16.msra.mxu0 0
      %1089 = vmatprep.subr.bf16.mxu0 0
      %1090 = vmatpush2.bf16.msra.mxu0 0
      %1091 = vmatprep.subr.bf16.mxu0 0
      %1092 = vmatpush2.bf16.msra.mxu0 0
      %1093 = vmatprep.mubr.bf16.mxu0 0
      %1094 = vmatmul.mubr.bf16.gmra.mxu0 %v996
      %v1095 = vpop.f32.mrf.mxu0
      %v1096 = vadd.f32 0.0, %v1095
      %v1097 = vpop.f32.mrf.mxu0
      %v1098 = vpop.f32.mrf.mxu0
      %v1099 = vpop.f32.mrf.mxu0
      %1100 = vdwg.mxu0
      %v1101 = vadd.f32 %v262, %v1096
      %1102 = vst [vmem:[%s260] sm:$0xff] %v1101
      %p1103 = scmp.lt.s32.totalorder %s17, 1
      %s1104 = scalar_select %p1103, %s17, 1
      %s1105 = smul.addr %s1104, 8
      %s1106 = scalar_lea.vmem %s6, %s1105
      // Predicated region
      $region45: #{t5_model_loss.6} parent=43 // pred_check
        %p1107 = pneg %p171
      $region46: #{t5_model_loss.6} parent=43 // pred_check_branch
        %1109 = sbr.rel (%p1107) target = $region48
      $region47: #{t5_model_loss.6} parent=43 // pred_region
        _
      $region48: #{t5_model_loss.6} parent=43 // pred_fallthru
        _
    $region44: #{t5_model_loss.6} parent=5 // pred_fallthru
      _
    %p1110 = scmp.le.s32.totalorder 2, %s12
    // Predicated region
    $region49: #{t5_model_loss.6} parent=5 // pred_check
      %p1111 = pneg %p1110
    $region50: #{t5_model_loss.6} parent=5 // pred_check_branch
      %1113 = sbr.rel (%p1111) target = $region52
    $region51: #{t5_model_loss.6} parent=5 // pred_region
      %s1114 = ssub.s32 %s12, 2
      // Predicated region
      $region53: #{t5_model_loss.6} parent=51 // pred_check
        %p1115 = pneg %p177
      $region54: #{t5_model_loss.6} parent=51 // pred_check_branch
        %1117 = sbr.rel (%p1115) target = $region56
      $region55: #{t5_model_loss.6} parent=51 // pred_region
        %p1118 = scmp.lt.s32.totalorder %s18, 1
        %s1119 = scalar_select %p1118, %s18, 1
        %s1120 = smul.addr %s1119, 8
        %s1121 = scalar_lea.vmem %s6, %s1120
      $region56: #{t5_model_loss.6} parent=51 // pred_fallthru
        _
    $region52: #{t5_model_loss.6} parent=5 // pred_fallthru
      _
  $region6: #{t5_model_loss.6} parent=0 // loop_footer
    %s16 = sadd.s32 1, %s12
  $region7: #{t5_model_loss.6} parent=0 // loop_footer_branch
    %11 = sbr.rel target = $region3
  $region8: #{t5_model_loss.6} parent=0 // loop_exit
    _

// kernel: t5_model_loss.8
$region0: #{t5_model_loss.8}
  #allocation0 [shape = 'u32[]', space=smem, size = 0x4, offset = 0x4, fixed_abs, tag = 'smem constant byte address 0x4 - core index']
  #allocation1 [shape = 'u32[144,128]{1,0:T(1,128)}', space=vmem, size = 0x12000, scoped, tag = 'internal scratch']
  %s0 = inlined_call_operand.vmem [shape: f32[2,3,128], index: 0, kind: input, shape index: {}]
  %s1 = inlined_call_operand.vmem [shape: f32[1,128], index: 1, kind: input, shape index: {}]
  %s2 = inlined_call_operand.vmem [shape: bf16[128,384], index: 2, kind: input, shape index: {}]
  %s3 = inlined_call_operand.vmem [shape: bf16[128,128], index: 3, kind: input, shape index: {}]
  %s4 = inlined_call_operand.vmem [shape: f32[1,4,3,3], index: 4, kind: input, shape index: {}]
  %s5 = inlined_call_operand.vmem [shape: f32[2,1,1,3], index: 5, kind: input, shape index: {}]
  %s6 = inlined_call_operand.vmem [shape: f32[2,3,128], index: 6, kind: output, shape index: {}]
  %s7 = sld [smem:[#allocation0]]
  $region57: #{t5_model_loss.8} parent=0
    _
  %s9 = ssub.s32 1, %s7
  %s10 = scalar_select 0, %s9, %s7
  loop: start=0, step=1, limit=4
  $region2: #{t5_model_loss.8} parent=0 // loop_pre_header
    _
  $region3: #{t5_model_loss.8} parent=0 // loop_header
    %s12 = sphi 0, %s16
    %p13 = scmp.ge.s32.totalorder %s12, 4
    %s22 = sphi 0, %s24
    %s25 = sphi 0, %s22
    %s26 = sphi 0, %s25
    %s42 = sphi 0, %s26
    %s46 = sphi 0, %s46
    %s48 = sphi 0, %s46
    %s49 = sphi 0, %s48
    %s63 = sphi 0, %s49
    %s67 = sphi 0, %s67
    %s69 = sphi 0, %s67
    %s70 = sphi 0, %s69
    %s84 = sphi 0, %s70
    %s88 = sphi 0, %s88
    %s90 = sphi 0, %s88
    %s91 = sphi 0, %s90
    %s105 = sphi 0, %s91
    %s109 = sphi 0, %s109
    %s111 = sphi 0, %s109
    %s112 = sphi 0, %s111
    %s126 = sphi 0, %s112
    %s132 = sphi 0, %s134
    %s135 = sphi 0, %s132
    %s136 = sphi 0, %s135
    %s152 = sphi 0, %s136
    %s158 = sphi 0, %s160
    %s161 = sphi 0, %s158
    %s162 = sphi 0, %s161
    %s178 = sphi 0, %s162
  $region4: #{t5_model_loss.8} parent=0 // loop_header_branch
    %15 = sbr.rel (%p13) target = $region8
  $region5: #{t5_model_loss.8} parent=0 // loop_body
    %s17 = ssub.s32 %s12, 1
    %s18 = ssub.s32 %s12, 2
    %s19 = sadd.s32 %s12, 1
    %s20 = ssub.s32 %s12, %s19
    %p21 = scmp.eq.s32.totalorder %s20, 0
    %s23 = sadd.s32 %s22, 1
    %s24 = scalar_select %p21, %s22, %s23
    %p27 = pneg %p21
    %p28 = scmp.eq.s32.totalorder %s12, 1
    %p29 = por %p27, %p28
    %p30 = scmp.ne.s32.totalorder %s22, %s25
    %p31 = scmp.eq.s32.totalorder %s12, 0
    %p32 = por %p30, %p31
    %p33 = scmp.ne.s32.totalorder %s22, %s25
    %p34 = scmp.eq.s32.totalorder %s17, 1
    %p35 = por %p33, %p34
    %p36 = scmp.ne.s32.totalorder %s25, %s26
    %p37 = scmp.eq.s32.totalorder %s17, 0
    %p38 = por %p36, %p37
    %p39 = scmp.ne.s32.totalorder %s25, %s26
    %p40 = scmp.eq.s32.totalorder %s18, 1
    %p41 = por %p39, %p40
    %p43 = scmp.ne.s32.totalorder %s26, %s42
    %p44 = scmp.eq.s32.totalorder %s18, 0
    %p45 = por %p43, %p44
    %s47 = sadd.s32 %s46, 1
    %p50 = scmp.eq.s32.totalorder %s12, 1
    %p51 = scmp.ne.s32.totalorder %s46, %s48
    %p52 = scmp.eq.s32.totalorder %s12, 0
    %p53 = por %p51, %p52
    %p54 = scmp.ne.s32.totalorder %s46, %s48
    %p55 = scmp.eq.s32.totalorder %s17, 1
    %p56 = por %p54, %p55
    %p57 = scmp.ne.s32.totalorder %s48, %s49
    %p58 = scmp.eq.s32.totalorder %s17, 0
    %p59 = por %p57, %p58
    %p60 = scmp.ne.s32.totalorder %s48, %s49
    %p61 = scmp.eq.s32.totalorder %s18, 1
    %p62 = por %p60, %p61
    %p64 = scmp.ne.s32.totalorder %s49, %s63
    %p65 = scmp.eq.s32.totalorder %s18, 0
    %p66 = por %p64, %p65
    %s68 = sadd.s32 %s67, 1
    %p71 = scmp.eq.s32.totalorder %s12, 1
    %p72 = scmp.ne.s32.totalorder %s67, %s69
    %p73 = scmp.eq.s32.totalorder %s12, 0
    %p74 = por %p72, %p73
    %p75 = scmp.ne.s32.totalorder %s67, %s69
    %p76 = scmp.eq.s32.totalorder %s17, 1
    %p77 = por %p75, %p76
    %p78 = scmp.ne.s32.totalorder %s69, %s70
    %p79 = scmp.eq.s32.totalorder %s17, 0
    %p80 = por %p78, %p79
    %p81 = scmp.ne.s32.totalorder %s69, %s70
    %p82 = scmp.eq.s32.totalorder %s18, 1
    %p83 = por %p81, %p82
    %p85 = scmp.ne.s32.totalorder %s70, %s84
    %p86 = scmp.eq.s32.totalorder %s18, 0
    %p87 = por %p85, %p86
    %s89 = sadd.s32 %s88, 1
    %p92 = scmp.eq.s32.totalorder %s12, 1
    %p93 = scmp.ne.s32.totalorder %s88, %s90
    %p94 = scmp.eq.s32.totalorder %s12, 0
    %p95 = por %p93, %p94
    %p96 = scmp.ne.s32.totalorder %s88, %s90
    %p97 = scmp.eq.s32.totalorder %s17, 1
    %p98 = por %p96, %p97
    %p99 = scmp.ne.s32.totalorder %s90, %s91
    %p100 = scmp.eq.s32.totalorder %s17, 0
    %p101 = por %p99, %p100
    %p102 = scmp.ne.s32.totalorder %s90, %s91
    %p103 = scmp.eq.s32.totalorder %s18, 1
    %p104 = por %p102, %p103
    %p106 = scmp.ne.s32.totalorder %s91, %s105
    %p107 = scmp.eq.s32.totalorder %s18, 0
    %p108 = por %p106, %p107
    %s110 = sadd.s32 %s109, 1
    %p113 = scmp.eq.s32.totalorder %s12, 1
    %p114 = scmp.ne.s32.totalorder %s109, %s111
    %p115 = scmp.eq.s32.totalorder %s12, 0
    %p116 = por %p114, %p115
    %p117 = scmp.ne.s32.totalorder %s109, %s111
    %p118 = scmp.eq.s32.totalorder %s17, 1
    %p119 = por %p117, %p118
    %p120 = scmp.ne.s32.totalorder %s111, %s112
    %p121 = scmp.eq.s32.totalorder %s17, 0
    %p122 = por %p120, %p121
    %p123 = scmp.ne.s32.totalorder %s111, %s112
    %p124 = scmp.eq.s32.totalorder %s18, 1
    %p125 = por %p123, %p124
    %p127 = scmp.ne.s32.totalorder %s112, %s126
    %p128 = scmp.eq.s32.totalorder %s18, 0
    %p129 = por %p127, %p128
    %s130 = ssub.s32 %s12, %s19
    %p131 = scmp.eq.s32.totalorder %s130, 0
    %s133 = sadd.s32 %s132, 1
    %s134 = scalar_select %p131, %s132, %s133
    %p137 = pneg %p131
    %p138 = scmp.eq.s32.totalorder %s12, 1
    %p139 = por %p137, %p138
    %p140 = scmp.ne.s32.totalorder %s132, %s135
    %p141 = scmp.eq.s32.totalorder %s12, 0
    %p142 = por %p140, %p141
    %p143 = scmp.ne.s32.totalorder %s132, %s135
    %p144 = scmp.eq.s32.totalorder %s17, 1
    %p145 = por %p143, %p144
    %p146 = scmp.ne.s32.totalorder %s135, %s136
    %p147 = scmp.eq.s32.totalorder %s17, 0
    %p148 = por %p146, %p147
    %p149 = scmp.ne.s32.totalorder %s135, %s136
    %p150 = scmp.eq.s32.totalorder %s18, 1
    %p151 = por %p149, %p150
    %p153 = scmp.ne.s32.totalorder %s136, %s152
    %p154 = scmp.eq.s32.totalorder %s18, 0
    %p155 = por %p153, %p154
    %s156 = ssub.s32 %s12, %s19
    %p157 = scmp.eq.s32.totalorder %s156, 0
    %s159 = sadd.s32 %s158, 1
    %s160 = scalar_select %p157, %s158, %s159
    %p163 = pneg %p157
    %p164 = scmp.eq.s32.totalorder %s12, 1
    %p165 = por %p163, %p164
    %p166 = scmp.ne.s32.totalorder %s158, %s161
    %p167 = scmp.eq.s32.totalorder %s12, 0
    %p168 = por %p166, %p167
    %p169 = scmp.ne.s32.totalorder %s158, %s161
    %p170 = scmp.eq.s32.totalorder %s17, 1
    %p171 = por %p169, %p170
    %p172 = scmp.ne.s32.totalorder %s161, %s162
    %p173 = scmp.eq.s32.totalorder %s17, 0
    %p174 = por %p172, %p173
    %p175 = scmp.ne.s32.totalorder %s161, %s162
    %p176 = scmp.eq.s32.totalorder %s18, 1
    %p177 = por %p175, %p176
    %p179 = scmp.ne.s32.totalorder %s162, %s178
    %p180 = scmp.eq.s32.totalorder %s18, 0
    %p181 = por %p179, %p180
    %p182 = scmp.le.s32.totalorder 1, %s12
    %p183 = scmp.lt.s32.totalorder %s12, 3
    %p184 = pnand %p182, %p183
    %p185 = pneg %p184
    // Predicated region
    $region9: #{t5_model_loss.8} parent=5 // pred_check
      _
    $region10: #{t5_model_loss.8} parent=5 // pred_check_branch
      %187 = sbr.rel (%p184) target = $region12
    $region11: #{t5_model_loss.8} parent=5 // pred_region
      %s188 = ssub.s32 %s12, 1
      // Predicated region
      $region13: #{t5_model_loss.8} parent=11 // pred_check
        %p189 = pneg %p59
      $region14: #{t5_model_loss.8} parent=11 // pred_check_branch
        %191 = sbr.rel (%p189) target = $region16
      $region15: #{t5_model_loss.8} parent=11 // pred_region
        _
      $region16: #{t5_model_loss.8} parent=11 // pred_fallthru
        _
      // Predicated region
      $region17: #{t5_model_loss.8} parent=11 // pred_check
        %p192 = pneg %p80
      $region18: #{t5_model_loss.8} parent=11 // pred_check_branch
        %194 = sbr.rel (%p192) target = $region20
      $region19: #{t5_model_loss.8} parent=11 // pred_region
        _
      $region20: #{t5_model_loss.8} parent=11 // pred_fallthru
        _
      // Predicated region
      $region21: #{t5_model_loss.8} parent=11 // pred_check
        %p195 = pneg %p101
      $region22: #{t5_model_loss.8} parent=11 // pred_check_branch
        %197 = sbr.rel (%p195) target = $region24
      $region23: #{t5_model_loss.8} parent=11 // pred_region
        _
      $region24: #{t5_model_loss.8} parent=11 // pred_fallthru
        _
      // Predicated region
      $region25: #{t5_model_loss.8} parent=11 // pred_check
        %p198 = pneg %p122
      $region26: #{t5_model_loss.8} parent=11 // pred_check_branch
        %200 = sbr.rel (%p198) target = $region28
      $region27: #{t5_model_loss.8} parent=11 // pred_region
        _
      $region28: #{t5_model_loss.8} parent=11 // pred_fallthru
        _
    $region12: #{t5_model_loss.8} parent=5 // pred_fallthru
      _
    %p201 = scmp.lt.s32.totalorder %s12, 2
    // Predicated region
    $region29: #{t5_model_loss.8} parent=5 // pred_check
      %p202 = pneg %p201
    $region30: #{t5_model_loss.8} parent=5 // pred_check_branch
      %204 = sbr.rel (%p202) target = $region32
    $region31: #{t5_model_loss.8} parent=5 // pred_region
      // Predicated region
      $region33: #{t5_model_loss.8} parent=31 // pred_check
        %p205 = pneg %p32
      $region34: #{t5_model_loss.8} parent=31 // pred_check_branch
        %207 = sbr.rel (%p205) target = $region36
      $region35: #{t5_model_loss.8} parent=31 // pred_region
        %p208 = scmp.lt.s32.totalorder %s12, 1
        %s209 = scalar_select %p208, %s12, 1
        %s210 = smul.addr %s209, 4
        %s211 = scalar_lea.vmem %s0, %s210
      $region36: #{t5_model_loss.8} parent=31 // pred_fallthru
        _
      // Predicated region
      $region37: #{t5_model_loss.8} parent=31 // pred_check
        %p212 = pneg %p142
      $region38: #{t5_model_loss.8} parent=31 // pred_check_branch
        %214 = sbr.rel (%p212) target = $region40
      $region39: #{t5_model_loss.8} parent=31 // pred_region
        %p215 = scmp.lt.s32.totalorder %s12, 1
        %s216 = scalar_select %p215, %s12, 1
        %s217 = scalar_lea.vmem %s5, %s216
      $region40: #{t5_model_loss.8} parent=31 // pred_fallthru
        _
    $region32: #{t5_model_loss.8} parent=5 // pred_fallthru
      _
    %p218 = scmp.le.s32.totalorder 1, %s12
    %p219 = scmp.lt.s32.totalorder %s12, 3
    %p220 = pnand %p218, %p219
    %p221 = pneg %p220
    // Predicated region
    $region41: #{t5_model_loss.8} parent=5 // pred_check
      _
    $region42: #{t5_model_loss.8} parent=5 // pred_check_branch
      %223 = sbr.rel (%p220) target = $region44
    $region43: #{t5_model_loss.8} parent=5 // pred_region
      %s224 = ssub.s32 %s12, 1
      %p225 = scmp.lt.s32.totalorder %s17, 1
      %s226 = scalar_select %p225, %s17, 1
      %s227 = smul.addr %s226, 4
      %s228 = scalar_lea.vmem %s0, %s227
      %p229 = pneg %p38
      %p230 = pneg %p35
      %p231 = pneg %p59
      %p232 = pneg %p56
      %p233 = pneg %p80
      %p234 = pneg %p77
      %p235 = pneg %p101
      %p236 = pneg %p98
      %p237 = pneg %p122
      %p238 = pneg %p119
      %p239 = scmp.lt.s32.totalorder %s17, 1
      %s240 = scalar_select %p239, %s17, 1
      %s241 = scalar_lea.vmem %s5, %s240
      %p242 = pneg %p148
      %p243 = pneg %p145
      %p244 = pneg %p174
      %p245 = pneg %p171
      %p246 = scmp.lt.s32.totalorder %s17, 1
      %s247 = scalar_select %p246, %s17, 1
      %s248 = smul.addr %s247, 4
      %s249 = scalar_lea.vmem %s6, %s248
      %p250 = scmp.lt.s32.totalorder %s17, 1
      %s251 = scalar_select %p250, %s17, 1
      %s252 = smul.addr %s251, 4
      %s253 = scalar_lea.vmem %s0, %s252
      %p254 = scmp.lt.s32.totalorder %s17, 1
      %s255 = scalar_select %p254, %s17, 1
      %s256 = scalar_lea.vmem %s5, %s255
      %p257 = scmp.lt.s32.totalorder %s17, 1
      %s258 = scalar_select %p257, %s17, 1
      %s259 = smul.addr %s258, 4
      %s260 = scalar_lea.vmem %s6, %s259
      %v262 = vld [vmem:[%s253] sm:$0x7]
      %v263 = vld [vmem:[%s1] sm:$0x1]
      %v264 = vmul.f32 %v262, %v262
      %vm265 = vcmask 1042432
      %v266 = vsel %vm265, %v264, 0.0
      %267 = vadd.xlane.f32.xlu0 %v266
      %v268 = vpop.xlane.xlu0 %267
      %v269 = vrcp.pop 128.0
      %v270 = vmul.f32 %v268, %v269
      %v271 = vadd.f32 %v270, 1e-06
      %v272 = vrsqrt.pop %v271
      %v273 = vmul.f32 %v262, %v272
      %v275 = vlaneseq
      %v276 = vshrl.u32 %v275, 7
      %v277 = vsub.s32 0, %v276
      %v278 = vrot.slane %v263, %v277
      %v280 = vmul.f32 %v273, %v278
      %v281 = vpack.c.bf16 %v280, %v280
      %v282 = vld [vmem:[%s2] sm:$0xff]
      %v283 = vld [vmem:[%s2 + $0x8] sm:$0xf]
      %v284 = vld [vmem:[%s2 + $0xc] sm:$0xff]
      %v285 = vld [vmem:[%s2 + $0x14] sm:$0xf]
      %v286 = vld [vmem:[%s2 + $0x18] sm:$0xff]
      %v287 = vld [vmem:[%s2 + $0x20] sm:$0xf]
      %v288 = vld [vmem:[%s2 + $0x24] sm:$0xff]
      %v289 = vld [vmem:[%s2 + $0x2c] sm:$0xf]
      %v290 = vld [vmem:[%s2 + $0x30] sm:$0xff]
      %v291 = vld [vmem:[%s2 + $0x38] sm:$0xf]
      %v292 = vld [vmem:[%s2 + $0x3c] sm:$0xff]
      %v293 = vld [vmem:[%s2 + $0x44] sm:$0xf]
      %v294 = vld [vmem:[%s2 + $0x48] sm:$0xff]
      %v295 = vld [vmem:[%s2 + $0x50] sm:$0xf]
      %v296 = vld [vmem:[%s2 + $0x54] sm:$0xff]
      %v297 = vld [vmem:[%s2 + $0x5c] sm:$0xf]
      %v298 = vld [vmem:[%s2 + $0x60] sm:$0xff]
      %v299 = vld [vmem:[%s2 + $0x68] sm:$0xf]
      %v300 = vld [vmem:[%s2 + $0x6c] sm:$0xff]
      %v301 = vld [vmem:[%s2 + $0x74] sm:$0xf]
      %v302 = vld [vmem:[%s2 + $0x78] sm:$0xff]
      %v303 = vld [vmem:[%s2 + $0x80] sm:$0xf]
      %v304 = vld [vmem:[%s2 + $0x84] sm:$0xff]
      %v305 = vld [vmem:[%s2 + $0x8c] sm:$0xf]
      %v306 = vld [vmem:[%s2 + $0x90] sm:$0xff]
      %v307 = vld [vmem:[%s2 + $0x98] sm:$0xf]
      %v308 = vld [vmem:[%s2 + $0x9c] sm:$0xff]
      %v309 = vld [vmem:[%s2 + $0xa4] sm:$0xf]
      %v310 = vld [vmem:[%s2 + $0xa8] sm:$0xff]
      %v311 = vld [vmem:[%s2 + $0xb0] sm:$0xf]
      %v312 = vld [vmem:[%s2 + $0xb4] sm:$0xff]
      %v313 = vld [vmem:[%s2 + $0xbc] sm:$0xf]
      %v346 = vunpack.c.l.b16 %v282
      %v347 = vunpack.c.h.b16 %v282
      %v348 = vunpack.c.l.b16 %v283
      %v349 = vunpack.c.l.b16 %v284
      %v350 = vunpack.c.h.b16 %v284
      %v351 = vunpack.c.l.b16 %v285
      %v352 = vunpack.c.l.b16 %v286
      %v353 = vunpack.c.h.b16 %v286
      %v354 = vunpack.c.l.b16 %v287
      %v355 = vunpack.c.l.b16 %v288
      %v356 = vunpack.c.h.b16 %v288
      %v357 = vunpack.c.l.b16 %v289
      %v358 = vunpack.c.l.b16 %v290
      %v359 = vunpack.c.h.b16 %v290
      %v360 = vunpack.c.l.b16 %v291
      %v361 = vunpack.c.l.b16 %v292
      %v362 = vunpack.c.h.b16 %v292
      %v363 = vunpack.c.l.b16 %v293
      %v364 = vunpack.c.l.b16 %v294
      %v365 = vunpack.c.h.b16 %v294
      %v366 = vunpack.c.l.b16 %v295
      %v367 = vunpack.c.l.b16 %v296
      %v368 = vunpack.c.h.b16 %v296
      %v369 = vunpack.c.l.b16 %v297
      %v370 = vunpack.c.l.b16 %v298
      %v371 = vunpack.c.h.b16 %v298
      %v372 = vunpack.c.l.b16 %v299
      %v373 = vunpack.c.l.b16 %v300
      %v374 = vunpack.c.h.b16 %v300
      %v375 = vunpack.c.l.b16 %v301
      %v376 = vunpack.c.l.b16 %v302
      %v377 = vunpack.c.h.b16 %v302
      %v378 = vunpack.c.l.b16 %v303
      %v379 = vunpack.c.l.b16 %v304
      %v380 = vunpack.c.h.b16 %v304
      %v381 = vunpack.c.l.b16 %v305
      %v382 = vunpack.c.l.b16 %v306
      %v383 = vunpack.c.h.b16 %v306
      %v384 = vunpack.c.l.b16 %v307
      %v385 = vunpack.c.l.b16 %v308
      %v386 = vunpack.c.h.b16 %v308
      %v387 = vunpack.c.l.b16 %v309
      %v388 = vunpack.c.l.b16 %v310
      %v389 = vunpack.c.h.b16 %v310
      %v390 = vunpack.c.l.b16 %v311
      %v391 = vunpack.c.l.b16 %v312
      %v392 = vunpack.c.h.b16 %v312
      %v393 = vunpack.c.l.b16 %v313
      %v394 = vpack.c.b16 %v349, %v346
      %v395 = vpack.c.b16 %v350, %v347
      %v396 = vpack.c.b16 %v351, %v348
      %v397 = vpack.c.b16 %v355, %v352
      %v398 = vpack.c.b16 %v356, %v353
      %v399 = vpack.c.b16 %v357, %v354
      %v400 = vpack.c.b16 %v361, %v358
      %v401 = vpack.c.b16 %v362, %v359
      %v402 = vpack.c.b16 %v363, %v360
      %v403 = vpack.c.b16 %v367, %v364
      %v404 = vpack.c.b16 %v368, %v365
      %v405 = vpack.c.b16 %v369, %v366
      %v406 = vpack.c.b16 %v373, %v370
      %v407 = vpack.c.b16 %v374, %v371
      %v408 = vpack.c.b16 %v375, %v372
      %v409 = vpack.c.b16 %v379, %v376
      %v410 = vpack.c.b16 %v380, %v377
      %v411 = vpack.c.b16 %v381, %v378
      %v412 = vpack.c.b16 %v385, %v382
      %v413 = vpack.c.b16 %v386, %v383
      %v414 = vpack.c.b16 %v387, %v384
      %v415 = vpack.c.b16 %v391, %v388
      %v416 = vpack.c.b16 %v392, %v389
      %v417 = vpack.c.b16 %v393, %v390
      %442 = vmatprep.subr.bf16.mxu0 %v416
      %443 = vmatpush1.bf16.msra.mxu0 %v415
      %444 = vmatprep.subr.bf16.mxu0 %v413
      %445 = vmatpush1.bf16.msra.mxu0 %v412
      %446 = vmatprep.subr.bf16.mxu0 %v410
      %447 = vmatpush1.bf16.msra.mxu0 %v409
      %448 = vmatprep.subr.bf16.mxu0 %v407
      %449 = vmatpush1.bf16.msra.mxu0 %v406
      %450 = vmatprep.subr.bf16.mxu0 %v404
      %451 = vmatpush1.bf16.msra.mxu0 %v403
      %452 = vmatprep.subr.bf16.mxu0 %v401
      %453 = vmatpush1.bf16.msra.mxu0 %v400
      %454 = vmatprep.subr.bf16.mxu0 %v398
      %455 = vmatpush1.bf16.msra.mxu0 %v397
      %456 = vmatprep.subr.bf16.mxu0 %v395
      %457 = vmatpush1.bf16.msra.mxu0 %v394
      %458 = vmatprep.subr.bf16.mxu0 0
      %459 = vmatpush2.bf16.msra.mxu0 0
      %460 = vmatprep.subr.bf16.mxu0 0
      %461 = vmatpush2.bf16.msra.mxu0 0
      %462 = vmatprep.subr.bf16.mxu0 0
      %463 = vmatpush2.bf16.msra.mxu0 0
      %464 = vmatprep.subr.bf16.mxu0 0
      %465 = vmatpush2.bf16.msra.mxu0 0
      %466 = vmatprep.subr.bf16.mxu0 0
      %467 = vmatpush2.bf16.msra.mxu0 0
      %468 = vmatprep.subr.bf16.mxu0 0
      %469 = vmatpush2.bf16.msra.mxu0 0
      %470 = vmatprep.subr.bf16.mxu0 0
      %471 = vmatpush2.bf16.msra.mxu0 0
      %472 = vmatprep.subr.bf16.mxu0 0
      %473 = vmatpush2.bf16.msra.mxu0 0
      %474 = vmatprep.mubr.bf16.mxu0 0
      %475 = vmatmul.mubr.bf16.gmra.mxu0 %v281
      %v476 = vpop.f32.mrf.mxu0
      %v477 = vadd.f32 0.0, %v476
      %v478 = vpop.f32.mrf.mxu0
      %v479 = vadd.f32 0.0, %v478
      %v480 = vpop.f32.mrf.mxu0
      %v481 = vpop.f32.mrf.mxu0
      %482 = vdwg.mxu0
      %483 = vmatprep.subr.bf16.mxu0 0
      %484 = vmatpush1.bf16.msra.mxu0 %v417
      %485 = vmatprep.subr.bf16.mxu0 0
      %486 = vmatpush1.bf16.msra.mxu0 %v414
      %487 = vmatprep.subr.bf16.mxu0 0
      %488 = vmatpush1.bf16.msra.mxu0 %v411
      %489 = vmatprep.subr.bf16.mxu0 0
      %490 = vmatpush1.bf16.msra.mxu0 %v408
      %491 = vmatprep.subr.bf16.mxu0 0
      %492 = vmatpush1.bf16.msra.mxu0 %v405
      %493 = vmatprep.subr.bf16.mxu0 0
      %494 = vmatpush1.bf16.msra.mxu0 %v402
      %495 = vmatprep.subr.bf16.mxu0 0
      %496 = vmatpush1.bf16.msra.mxu0 %v399
      %497 = vmatprep.subr.bf16.mxu0 0
      %498 = vmatpush1.bf16.msra.mxu0 %v396
      %499 = vmatprep.subr.bf16.mxu0 0
      %500 = vmatpush2.bf16.msra.mxu0 0
      %501 = vmatprep.subr.bf16.mxu0 0
      %502 = vmatpush2.bf16.msra.mxu0 0
      %503 = vmatprep.subr.bf16.mxu0 0
      %504 = vmatpush2.bf16.msra.mxu0 0
      %505 = vmatprep.subr.bf16.mxu0 0
      %506 = vmatpush2.bf16.msra.mxu0 0
      %507 = vmatprep.subr.bf16.mxu0 0
      %508 = vmatpush2.bf16.msra.mxu0 0
      %509 = vmatprep.subr.bf16.mxu0 0
      %510 = vmatpush2.bf16.msra.mxu0 0
      %511 = vmatprep.subr.bf16.mxu0 0
      %512 = vmatpush2.bf16.msra.mxu0 0
      %513 = vmatprep.subr.bf16.mxu0 0
      %514 = vmatpush2.bf16.msra.mxu0 0
      %515 = vmatprep.mubr.bf16.mxu0 0
      %516 = vmatmul.mubr.bf16.gmra.mxu0 %v281
      %v517 = vpop.f32.mrf.mxu0
      %v518 = vadd.f32 0.0, %v517
      %v519 = vpop.f32.mrf.mxu0
      %v520 = vpop.f32.mrf.mxu0
      %v521 = vpop.f32.mrf.mxu0
      %522 = vdwg.mxu0
      %v523 = vld [vmem:[%s4] sm:$0x7]
      %v524 = vld [vmem:[%s4 + $0x4] sm:$0x7]
      %v525 = vld [vmem:[%s4 + $0x8] sm:$0x7]
      %v526 = vld [vmem:[%s4 + $0xc] sm:$0x7]
      %v527 = vld [vmem:[%s256] sm:$0x1]
      %v528 = vpack.c.bf16 %v477, %v477
      %v529 = vpack.c.bf16 %v479, %v479
      %v530 = vpack.c.bf16 %v518, %v518
      %vm531 = vcmask 261120
      %v533 = vsel %vm531, %v528, 0
      %v536 = vsel %vm531, %v529, 0
      %538 = vmatprep.subr.bf16.mxu0 0
      %539 = vmatpush1.bf16.xpose.msra.mxu0 0
      %540 = vmatprep.subr.bf16.mxu0 0
      %541 = vmatpush1.bf16.xpose.msra.mxu0 0
      %542 = vmatprep.subr.bf16.mxu0 0
      %543 = vmatpush1.bf16.xpose.msra.mxu0 0
      %544 = vmatprep.subr.bf16.mxu0 0
      %545 = vmatpush1.bf16.xpose.msra.mxu0 0
      %546 = vmatprep.subr.bf16.mxu0 0
      %547 = vmatpush1.bf16.xpose.msra.mxu0 0
      %548 = vmatprep.subr.bf16.mxu0 0
      %549 = vmatpush1.bf16.xpose.msra.mxu0 0
      %550 = vmatprep.subr.bf16.mxu0 0
      %551 = vmatpush1.bf16.xpose.msra.mxu0 0
      %552 = vmatprep.subr.bf16.mxu0 0
      %553 = vmatpush1.bf16.xpose.msra.mxu0 %v536
      %554 = vmatprep.subr.bf16.mxu0 0
      %555 = vmatpush2.bf16.xpose.msra.mxu0 0
      %556 = vmatprep.subr.bf16.mxu0 0
      %557 = vmatpush2.bf16.xpose.msra.mxu0 0
      %558 = vmatprep.subr.bf16.mxu0 0
      %559 = vmatpush2.bf16.xpose.msra.mxu0 0
      %560 = vmatprep.subr.bf16.mxu0 0
      %561 = vmatpush2.bf16.xpose.msra.mxu0 0
      %562 = vmatprep.subr.bf16.mxu0 0
      %563 = vmatpush2.bf16.xpose.msra.mxu0 0
      %564 = vmatprep.subr.bf16.mxu0 0
      %565 = vmatpush2.bf16.xpose.msra.mxu0 0
      %566 = vmatprep.subr.bf16.mxu0 0
      %567 = vmatpush2.bf16.xpose.msra.mxu0 0
      %568 = vmatprep.subr.bf16.mxu0 0
      %569 = vmatpush2.bf16.xpose.msra.mxu0 0
      %570 = vmatprep.mubr.bf16.mxu0 0
      %571 = vmatmul.mubr.bf16.gmra.mxu0 %v533
      %v572 = vpop.f32.mrf.mxu0
      %v573 = vadd.f32 %v523, %v572
      %v574 = vpop.f32.mrf.mxu0
      %v575 = vpop.f32.mrf.mxu0
      %v576 = vpop.f32.mrf.mxu0
      %577 = vdwg.mxu0
      %v579 = vlaneseq
      %v580 = vshrl.u32 %v579, 7
      %v581 = vsub.s32 0, %v580
      %v582 = vrot.slane %v527, %v581
      %v584 = vadd.f32 %v573, %v582
      %vm585 = vcmask 18432
      %v586 = vsel %vm585, %v584, -inf
      %587 = vmax.xlane.f32.xlu0 %v586
      %v588 = vpop.xlane.xlu0 %587
      %v589 = vsub.f32 %v584, %v588
      %v590 = vmul.f32 %v589, 1.442695
      %v591 = vpow.pop %v590
      %v592 = vsel %vm585, %v591, 0.0
      %593 = vadd.xlane.f32.xlu0 %v592
      %v594 = vpop.xlane.xlu0 %593
      %v595 = vrcp.pop %v594
      %v596 = vmul.f32 %v591, %v595
      %v597 = vpack.c.bf16 %v596, %v596
      %vm598 = vcmask 23552
      %v600 = vsel %vm598, %v597, 0
      %vm602 = vcmask 1040384
      %vm603 = vcmask 1041408
      %v604 = vsel %vm602, 4294967295, 65535
      %v605 = vsel %vm603, %v604, 0
      %v607 = vand.u32 %v530, %v605
      %609 = vmatprep.subr.bf16.mxu0 0
      %610 = vmatpush1.bf16.msra.mxu0 0
      %611 = vmatprep.subr.bf16.mxu0 0
      %612 = vmatpush1.bf16.msra.mxu0 0
      %613 = vmatprep.subr.bf16.mxu0 0
      %614 = vmatpush1.bf16.msra.mxu0 0
      %615 = vmatprep.subr.bf16.mxu0 0
      %616 = vmatpush1.bf16.msra.mxu0 0
      %617 = vmatprep.subr.bf16.mxu0 0
      %618 = vmatpush1.bf16.msra.mxu0 0
      %619 = vmatprep.subr.bf16.mxu0 0
      %620 = vmatpush1.bf16.msra.mxu0 0
      %621 = vmatprep.subr.bf16.mxu0 0
      %622 = vmatpush1.bf16.msra.mxu0 0
      %623 = vmatprep.subr.bf16.mxu0 0
      %624 = vmatpush1.bf16.msra.mxu0 %v607
      %625 = vmatprep.subr.bf16.mxu0 0
      %626 = vmatpush2.bf16.msra.mxu0 0
      %627 = vmatprep.subr.bf16.mxu0 0
      %628 = vmatpush2.bf16.msra.mxu0 0
      %629 = vmatprep.subr.bf16.mxu0 0
      %630 = vmatpush2.bf16.msra.mxu0 0
      %631 = vmatprep.subr.bf16.mxu0 0
      %632 = vmatpush2.bf16.msra.mxu0 0
      %633 = vmatprep.subr.bf16.mxu0 0
      %634 = vmatpush2.bf16.msra.mxu0 0
      %635 = vmatprep.subr.bf16.mxu0 0
      %636 = vmatpush2.bf16.msra.mxu0 0
      %637 = vmatprep.subr.bf16.mxu0 0
      %638 = vmatpush2.bf16.msra.mxu0 0
      %639 = vmatprep.subr.bf16.mxu0 0
      %640 = vmatpush2.bf16.msra.mxu0 0
      %641 = vmatprep.mubr.bf16.mxu0 0
      %642 = vmatmul.mubr.bf16.gmra.mxu0 %v600
      %v643 = vpop.f32.mrf.mxu0
      %v644 = vadd.f32 0.0, %v643
      %v645 = vpop.f32.mrf.mxu0
      %v646 = vpop.f32.mrf.mxu0
      %v647 = vpop.f32.mrf.mxu0
      %648 = vdwg.mxu0
      %650 = vrot.lane.b32.xlu0 %v528, 96
      %v651 = vpop.permute.xlu0 %650
      %653 = vrot.lane.b32.xlu0 %v529, 96
      %v654 = vpop.permute.xlu0 %653
      %v656 = vsel %vm531, %v651, 0
      %v659 = vsel %vm531, %v654, 0
      %661 = vmatprep.subr.bf16.mxu0 0
      %662 = vmatpush1.bf16.xpose.msra.mxu0 0
      %663 = vmatprep.subr.bf16.mxu0 0
      %664 = vmatpush1.bf16.xpose.msra.mxu0 0
      %665 = vmatprep.subr.bf16.mxu0 0
      %666 = vmatpush1.bf16.xpose.msra.mxu0 0
      %667 = vmatprep.subr.bf16.mxu0 0
      %668 = vmatpush1.bf16.xpose.msra.mxu0 0
      %669 = vmatprep.subr.bf16.mxu0 0
      %670 = vmatpush1.bf16.xpose.msra.mxu0 0
      %671 = vmatprep.subr.bf16.mxu0 0
      %672 = vmatpush1.bf16.xpose.msra.mxu0 0
      %673 = vmatprep.subr.bf16.mxu0 0
      %674 = vmatpush1.bf16.xpose.msra.mxu0 0
      %675 = vmatprep.subr.bf16.mxu0 0
      %676 = vmatpush1.bf16.xpose.msra.mxu0 %v659
      %677 = vmatprep.subr.bf16.mxu0 0
      %678 = vmatpush2.bf16.xpose.msra.mxu0 0
      %679 = vmatprep.subr.bf16.mxu0 0
      %680 = vmatpush2.bf16.xpose.msra.mxu0 0
      %681 = vmatprep.subr.bf16.mxu0 0
      %682 = vmatpush2.bf16.xpose.msra.mxu0 0
      %683 = vmatprep.subr.bf16.mxu0 0
      %684 = vmatpush2.bf16.xpose.msra.mxu0 0
      %685 = vmatprep.subr.bf16.mxu0 0
      %686 = vmatpush2.bf16.xpose.msra.mxu0 0
      %687 = vmatprep.subr.bf16.mxu0 0
      %688 = vmatpush2.bf16.xpose.msra.mxu0 0
      %689 = vmatprep.subr.bf16.mxu0 0
      %690 = vmatpush2.bf16.xpose.msra.mxu0 0
      %691 = vmatprep.subr.bf16.mxu0 0
      %692 = vmatpush2.bf16.xpose.msra.mxu0 0
      %693 = vmatprep.mubr.bf16.mxu0 0
      %694 = vmatmul.mubr.bf16.gmra.mxu0 %v656
      %v695 = vpop.f32.mrf.mxu0
      %v696 = vadd.f32 %v524, %v695
      %v697 = vpop.f32.mrf.mxu0
      %v698 = vpop.f32.mrf.mxu0
      %v699 = vpop.f32.mrf.mxu0
      %700 = vdwg.mxu0
      %v701 = vadd.f32 %v696, %v582
      %v702 = vsel %vm585, %v701, -inf
      %703 = vmax.xlane.f32.xlu0 %v702
      %v704 = vpop.xlane.xlu0 %703
      %v705 = vsub.f32 %v701, %v704
      %v706 = vmul.f32 %v705, 1.442695
      %v707 = vpow.pop %v706
      %v708 = vsel %vm585, %v707, 0.0
      %709 = vadd.xlane.f32.xlu0 %v708
      %v710 = vpop.xlane.xlu0 %709
      %v711 = vrcp.pop %v710
      %v712 = vmul.f32 %v707, %v711
      %v713 = vpack.c.bf16 %v712, %v712
      %715 = vrot.lane.b32.xlu0 %v530, 96
      %v716 = vpop.permute.xlu0 %715
      %v718 = vsel %vm598, %v713, 0
      %v721 = vand.u32 %v716, %v605
      %723 = vmatprep.subr.bf16.mxu0 0
      %724 = vmatpush1.bf16.msra.mxu0 0
      %725 = vmatprep.subr.bf16.mxu0 0
      %726 = vmatpush1.bf16.msra.mxu0 0
      %727 = vmatprep.subr.bf16.mxu0 0
      %728 = vmatpush1.bf16.msra.mxu0 0
      %729 = vmatprep.subr.bf16.mxu0 0
      %730 = vmatpush1.bf16.msra.mxu0 0
      %731 = vmatprep.subr.bf16.mxu0 0
      %732 = vmatpush1.bf16.msra.mxu0 0
      %733 = vmatprep.subr.bf16.mxu0 0
      %734 = vmatpush1.bf16.msra.mxu0 0
      %735 = vmatprep.subr.bf16.mxu0 0
      %736 = vmatpush1.bf16.msra.mxu0 0
      %737 = vmatprep.subr.bf16.mxu0 0
      %738 = vmatpush1.bf16.msra.mxu0 %v721
      %739 = vmatprep.subr.bf16.mxu0 0
      %740 = vmatpush2.bf16.msra.mxu0 0
      %741 = vmatprep.subr.bf16.mxu0 0
      %742 = vmatpush2.bf16.msra.mxu0 0
      %743 = vmatprep.subr.bf16.mxu0 0
      %744 = vmatpush2.bf16.msra.mxu0 0
      %745 = vmatprep.subr.bf16.mxu0 0
      %746 = vmatpush2.bf16.msra.mxu0 0
      %747 = vmatprep.subr.bf16.mxu0 0
      %748 = vmatpush2.bf16.msra.mxu0 0
      %749 = vmatprep.subr.bf16.mxu0 0
      %750 = vmatpush2.bf16.msra.mxu0 0
      %751 = vmatprep.subr.bf16.mxu0 0
      %752 = vmatpush2.bf16.msra.mxu0 0
      %753 = vmatprep.subr.bf16.mxu0 0
      %754 = vmatpush2.bf16.msra.mxu0 0
      %755 = vmatprep.mubr.bf16.mxu0 0
      %756 = vmatmul.mubr.bf16.gmra.mxu0 %v718
      %v757 = vpop.f32.mrf.mxu0
      %v758 = vadd.f32 0.0, %v757
      %v759 = vpop.f32.mrf.mxu0
      %v760 = vpop.f32.mrf.mxu0
      %v761 = vpop.f32.mrf.mxu0
      %762 = vdwg.mxu0
      %763 = vrot.lane.b32.xlu0 %v528, 64
      %v764 = vpop.permute.xlu0 %763
      %765 = vrot.lane.b32.xlu0 %v529, 64
      %v766 = vpop.permute.xlu0 %765
      %v768 = vsel %vm531, %v764, 0
      %v771 = vsel %vm531, %v766, 0
      %773 = vmatprep.subr.bf16.mxu0 0
      %774 = vmatpush1.bf16.xpose.msra.mxu0 0
      %775 = vmatprep.subr.bf16.mxu0 0
      %776 = vmatpush1.bf16.xpose.msra.mxu0 0
      %777 = vmatprep.subr.bf16.mxu0 0
      %778 = vmatpush1.bf16.xpose.msra.mxu0 0
      %779 = vmatprep.subr.bf16.mxu0 0
      %780 = vmatpush1.bf16.xpose.msra.mxu0 0
      %781 = vmatprep.subr.bf16.mxu0 0
      %782 = vmatpush1.bf16.xpose.msra.mxu0 0
      %783 = vmatprep.subr.bf16.mxu0 0
      %784 = vmatpush1.bf16.xpose.msra.mxu0 0
      %785 = vmatprep.subr.bf16.mxu0 0
      %786 = vmatpush1.bf16.xpose.msra.mxu0 0
      %787 = vmatprep.subr.bf16.mxu0 0
      %788 = vmatpush1.bf16.xpose.msra.mxu0 %v771
      %789 = vmatprep.subr.bf16.mxu0 0
      %790 = vmatpush2.bf16.xpose.msra.mxu0 0
      %791 = vmatprep.subr.bf16.mxu0 0
      %792 = vmatpush2.bf16.xpose.msra.mxu0 0
      %793 = vmatprep.subr.bf16.mxu0 0
      %794 = vmatpush2.bf16.xpose.msra.mxu0 0
      %795 = vmatprep.subr.bf16.mxu0 0
      %796 = vmatpush2.bf16.xpose.msra.mxu0 0
      %797 = vmatprep.subr.bf16.mxu0 0
      %798 = vmatpush2.bf16.xpose.msra.mxu0 0
      %799 = vmatprep.subr.bf16.mxu0 0
      %800 = vmatpush2.bf16.xpose.msra.mxu0 0
      %801 = vmatprep.subr.bf16.mxu0 0
      %802 = vmatpush2.bf16.xpose.msra.mxu0 0
      %803 = vmatprep.subr.bf16.mxu0 0
      %804 = vmatpush2.bf16.xpose.msra.mxu0 0
      %805 = vmatprep.mubr.bf16.mxu0 0
      %806 = vmatmul.mubr.bf16.gmra.mxu0 %v768
      %v807 = vpop.f32.mrf.mxu0
      %v808 = vadd.f32 %v525, %v807
      %v809 = vpop.f32.mrf.mxu0
      %v810 = vpop.f32.mrf.mxu0
      %v811 = vpop.f32.mrf.mxu0
      %812 = vdwg.mxu0
      %v813 = vadd.f32 %v808, %v582
      %v814 = vsel %vm585, %v813, -inf
      %815 = vmax.xlane.f32.xlu0 %v814
      %v816 = vpop.xlane.xlu0 %815
      %v817 = vsub.f32 %v813, %v816
      %v818 = vmul.f32 %v817, 1.442695
      %v819 = vpow.pop %v818
      %v820 = vsel %vm585, %v819, 0.0
      %821 = vadd.xlane.f32.xlu0 %v820
      %v822 = vpop.xlane.xlu0 %821
      %v823 = vrcp.pop %v822
      %v824 = vmul.f32 %v819, %v823
      %v825 = vpack.c.bf16 %v824, %v824
      %826 = vrot.lane.b32.xlu0 %v530, 64
      %v827 = vpop.permute.xlu0 %826
      %v829 = vsel %vm598, %v825, 0
      %v832 = vand.u32 %v827, %v605
      %834 = vmatprep.subr.bf16.mxu0 0
      %835 = vmatpush1.bf16.msra.mxu0 0
      %836 = vmatprep.subr.bf16.mxu0 0
      %837 = vmatpush1.bf16.msra.mxu0 0
      %838 = vmatprep.subr.bf16.mxu0 0
      %839 = vmatpush1.bf16.msra.mxu0 0
      %840 = vmatprep.subr.bf16.mxu0 0
      %841 = vmatpush1.bf16.msra.mxu0 0
      %842 = vmatprep.subr.bf16.mxu0 0
      %843 = vmatpush1.bf16.msra.mxu0 0
      %844 = vmatprep.subr.bf16.mxu0 0
      %845 = vmatpush1.bf16.msra.mxu0 0
      %846 = vmatprep.subr.bf16.mxu0 0
      %847 = vmatpush1.bf16.msra.mxu0 0
      %848 = vmatprep.subr.bf16.mxu0 0
      %849 = vmatpush1.bf16.msra.mxu0 %v832
      %850 = vmatprep.subr.bf16.mxu0 0
      %851 = vmatpush2.bf16.msra.mxu0 0
      %852 = vmatprep.subr.bf16.mxu0 0
      %853 = vmatpush2.bf16.msra.mxu0 0
      %854 = vmatprep.subr.bf16.mxu0 0
      %855 = vmatpush2.bf16.msra.mxu0 0
      %856 = vmatprep.subr.bf16.mxu0 0
      %857 = vmatpush2.bf16.msra.mxu0 0
      %858 = vmatprep.subr.bf16.mxu0 0
      %859 = vmatpush2.bf16.msra.mxu0 0
      %860 = vmatprep.subr.bf16.mxu0 0
      %861 = vmatpush2.bf16.msra.mxu0 0
      %862 = vmatprep.subr.bf16.mxu0 0
      %863 = vmatpush2.bf16.msra.mxu0 0
      %864 = vmatprep.subr.bf16.mxu0 0
      %865 = vmatpush2.bf16.msra.mxu0 0
      %866 = vmatprep.mubr.bf16.mxu0 0
      %867 = vmatmul.mubr.bf16.gmra.mxu0 %v829
      %v868 = vpop.f32.mrf.mxu0
      %v869 = vadd.f32 0.0, %v868
      %v870 = vpop.f32.mrf.mxu0
      %v871 = vpop.f32.mrf.mxu0
      %v872 = vpop.f32.mrf.mxu0
      %873 = vdwg.mxu0
      %874 = vrot.lane.b32.xlu0 %v528, 32
      %v875 = vpop.permute.xlu0 %874
      %876 = vrot.lane.b32.xlu0 %v529, 32
      %v877 = vpop.permute.xlu0 %876
      %v879 = vsel %vm531, %v875, 0
      %v882 = vsel %vm531, %v877, 0
      %884 = vmatprep.subr.bf16.mxu0 0
      %885 = vmatpush1.bf16.xpose.msra.mxu0 0
      %886 = vmatprep.subr.bf16.mxu0 0
      %887 = vmatpush1.bf16.xpose.msra.mxu0 0
      %888 = vmatprep.subr.bf16.mxu0 0
      %889 = vmatpush1.bf16.xpose.msra.mxu0 0
      %890 = vmatprep.subr.bf16.mxu0 0
      %891 = vmatpush1.bf16.xpose.msra.mxu0 0
      %892 = vmatprep.subr.bf16.mxu0 0
      %893 = vmatpush1.bf16.xpose.msra.mxu0 0
      %894 = vmatprep.subr.bf16.mxu0 0
      %895 = vmatpush1.bf16.xpose.msra.mxu0 0
      %896 = vmatprep.subr.bf16.mxu0 0
      %897 = vmatpush1.bf16.xpose.msra.mxu0 0
      %898 = vmatprep.subr.bf16.mxu0 0
      %899 = vmatpush1.bf16.xpose.msra.mxu0 %v882
      %900 = vmatprep.subr.bf16.mxu0 0
      %901 = vmatpush2.bf16.xpose.msra.mxu0 0
      %902 = vmatprep.subr.bf16.mxu0 0
      %903 = vmatpush2.bf16.xpose.msra.mxu0 0
      %904 = vmatprep.subr.bf16.mxu0 0
      %905 = vmatpush2.bf16.xpose.msra.mxu0 0
      %906 = vmatprep.subr.bf16.mxu0 0
      %907 = vmatpush2.bf16.xpose.msra.mxu0 0
      %908 = vmatprep.subr.bf16.mxu0 0
      %909 = vmatpush2.bf16.xpose.msra.mxu0 0
      %910 = vmatprep.subr.bf16.mxu0 0
      %911 = vmatpush2.bf16.xpose.msra.mxu0 0
      %912 = vmatprep.subr.bf16.mxu0 0
      %913 = vmatpush2.bf16.xpose.msra.mxu0 0
      %914 = vmatprep.subr.bf16.mxu0 0
      %915 = vmatpush2.bf16.xpose.msra.mxu0 0
      %916 = vmatprep.mubr.bf16.mxu0 0
      %917 = vmatmul.mubr.bf16.gmra.mxu0 %v879
      %v918 = vpop.f32.mrf.mxu0
      %v919 = vadd.f32 %v526, %v918
      %v920 = vpop.f32.mrf.mxu0
      %v921 = vpop.f32.mrf.mxu0
      %v922 = vpop.f32.mrf.mxu0
      %923 = vdwg.mxu0
      %v924 = vadd.f32 %v919, %v582
      %v925 = vsel %vm585, %v924, -inf
      %926 = vmax.xlane.f32.xlu0 %v925
      %v927 = vpop.xlane.xlu0 %926
      %v928 = vsub.f32 %v924, %v927
      %v929 = vmul.f32 %v928, 1.442695
      %v930 = vpow.pop %v929
      %v931 = vsel %vm585, %v930, 0.0
      %932 = vadd.xlane.f32.xlu0 %v931
      %v933 = vpop.xlane.xlu0 %932
      %v934 = vrcp.pop %v933
      %v935 = vmul.f32 %v930, %v934
      %v936 = vpack.c.bf16 %v935, %v935
      %937 = vrot.lane.b32.xlu0 %v530, 32
      %v938 = vpop.permute.xlu0 %937
      %v940 = vsel %vm598, %v936, 0
      %v943 = vand.u32 %v938, %v605
      %945 = vmatprep.subr.bf16.mxu0 0
      %946 = vmatpush1.bf16.msra.mxu0 0
      %947 = vmatprep.subr.bf16.mxu0 0
      %948 = vmatpush1.bf16.msra.mxu0 0
      %949 = vmatprep.subr.bf16.mxu0 0
      %950 = vmatpush1.bf16.msra.mxu0 0
      %951 = vmatprep.subr.bf16.mxu0 0
      %952 = vmatpush1.bf16.msra.mxu0 0
      %953 = vmatprep.subr.bf16.mxu0 0
      %954 = vmatpush1.bf16.msra.mxu0 0
      %955 = vmatprep.subr.bf16.mxu0 0
      %956 = vmatpush1.bf16.msra.mxu0 0
      %957 = vmatprep.subr.bf16.mxu0 0
      %958 = vmatpush1.bf16.msra.mxu0 0
      %959 = vmatprep.subr.bf16.mxu0 0
      %960 = vmatpush1.bf16.msra.mxu0 %v943
      %961 = vmatprep.subr.bf16.mxu0 0
      %962 = vmatpush2.bf16.msra.mxu0 0
      %963 = vmatprep.subr.bf16.mxu0 0
      %964 = vmatpush2.bf16.msra.mxu0 0
      %965 = vmatprep.subr.bf16.mxu0 0
      %966 = vmatpush2.bf16.msra.mxu0 0
      %967 = vmatprep.subr.bf16.mxu0 0
      %968 = vmatpush2.bf16.msra.mxu0 0
      %969 = vmatprep.subr.bf16.mxu0 0
      %970 = vmatpush2.bf16.msra.mxu0 0
      %971 = vmatprep.subr.bf16.mxu0 0
      %972 = vmatpush2.bf16.msra.mxu0 0
      %973 = vmatprep.subr.bf16.mxu0 0
      %974 = vmatpush2.bf16.msra.mxu0 0
      %975 = vmatprep.subr.bf16.mxu0 0
      %976 = vmatpush2.bf16.msra.mxu0 0
      %977 = vmatprep.mubr.bf16.mxu0 0
      %978 = vmatmul.mubr.bf16.gmra.mxu0 %v940
      %v979 = vpop.f32.mrf.mxu0
      %v980 = vadd.f32 0.0, %v979
      %v981 = vpop.f32.mrf.mxu0
      %v982 = vpop.f32.mrf.mxu0
      %v983 = vpop.f32.mrf.mxu0
      %984 = vdwg.mxu0
      %986 = vrot.lane.b32.xlu0 %v758, 32
      %v987 = vpop.permute.xlu0 %986
      %990 = vrot.lane.b32.xlu0 %v869, 64
      %v991 = vpop.permute.xlu0 %990
      %994 = vrot.lane.b32.xlu0 %v980, 96
      %v995 = vpop.permute.xlu0 %994
      %v997 = vsel %vm531, %v644, %v987
      %vm998 = vcmask 523264
      %v999 = vsel %vm998, %v997, %v991
      %vm1000 = vcmask 785408
      %v1001 = vsel %vm1000, %v999, %v995
      %v1002 = vpack.c.bf16 %v1001, %v1001
      %v1003 = vld [vmem:[%s3] sm:$0xf]
      %v1004 = vld [vmem:[%s3 + $0x4] sm:$0xf]
      %v1005 = vld [vmem:[%s3 + $0x8] sm:$0xf]
      %v1006 = vld [vmem:[%s3 + $0xc] sm:$0xf]
      %v1007 = vld [vmem:[%s3 + $0x10] sm:$0xf]
      %v1008 = vld [vmem:[%s3 + $0x14] sm:$0xf]
      %v1009 = vld [vmem:[%s3 + $0x18] sm:$0xf]
      %v1010 = vld [vmem:[%s3 + $0x1c] sm:$0xf]
      %v1011 = vld [vmem:[%s3 + $0x20] sm:$0xf]
      %v1012 = vld [vmem:[%s3 + $0x24] sm:$0xf]
      %v1013 = vld [vmem:[%s3 + $0x28] sm:$0xf]
      %v1014 = vld [vmem:[%s3 + $0x2c] sm:$0xf]
      %v1015 = vld [vmem:[%s3 + $0x30] sm:$0xf]
      %v1016 = vld [vmem:[%s3 + $0x34] sm:$0xf]
      %v1017 = vld [vmem:[%s3 + $0x38] sm:$0xf]
      %v1018 = vld [vmem:[%s3 + $0x3c] sm:$0xf]
      %v1035 = vunpack.c.l.b16 %v1003
      %v1036 = vunpack.c.l.b16 %v1004
      %v1037 = vunpack.c.l.b16 %v1005
      %v1038 = vunpack.c.l.b16 %v1006
      %v1039 = vunpack.c.l.b16 %v1007
      %v1040 = vunpack.c.l.b16 %v1008
      %v1041 = vunpack.c.l.b16 %v1009
      %v1042 = vunpack.c.l.b16 %v1010
      %v1043 = vunpack.c.l.b16 %v1011
      %v1044 = vunpack.c.l.b16 %v1012
      %v1045 = vunpack.c.l.b16 %v1013
      %v1046 = vunpack.c.l.b16 %v1014
      %v1047 = vunpack.c.l.b16 %v1015
      %v1048 = vunpack.c.l.b16 %v1016
      %v1049 = vunpack.c.l.b16 %v1017
      %v1050 = vunpack.c.l.b16 %v1018
      %v1051 = vpack.c.b16 %v1036, %v1035
      %v1052 = vpack.c.b16 %v1038, %v1037
      %v1053 = vpack.c.b16 %v1040, %v1039
      %v1054 = vpack.c.b16 %v1042, %v1041
      %v1055 = vpack.c.b16 %v1044, %v1043
      %v1056 = vpack.c.b16 %v1046, %v1045
      %v1057 = vpack.c.b16 %v1048, %v1047
      %v1058 = vpack.c.b16 %v1050, %v1049
      %1067 = vmatprep.subr.bf16.mxu0 0
      %1068 = vmatpush1.bf16.msra.mxu0 %v1058
      %1069 = vmatprep.subr.bf16.mxu0 0
      %1070 = vmatpush1.bf16.msra.mxu0 %v1057
      %1071 = vmatprep.subr.bf16.mxu0 0
      %1072 = vmatpush1.bf16.msra.mxu0 %v1056
      %1073 = vmatprep.subr.bf16.mxu0 0
      %1074 = vmatpush1.bf16.msra.mxu0 %v1055
      %1075 = vmatprep.subr.bf16.mxu0 0
      %1076 = vmatpush1.bf16.msra.mxu0 %v1054
      %1077 = vmatprep.subr.bf16.mxu0 0
      %1078 = vmatpush1.bf16.msra.mxu0 %v1053
      %1079 = vmatprep.subr.bf16.mxu0 0
      %1080 = vmatpush1.bf16.msra.mxu0 %v1052
      %1081 = vmatprep.subr.bf16.mxu0 0
      %1082 = vmatpush1.bf16.msra.mxu0 %v1051
      %1083 = vmatprep.subr.bf16.mxu0 0
      %1084 = vmatpush2.bf16.msra.mxu0 0
      %1085 = vmatprep.subr.bf16.mxu0 0
      %1086 = vmatpush2.bf16.msra.mxu0 0
      %1087 = vmatprep.subr.bf16.mxu0 0
      %1088 = vmatpush2.bf16.msra.mxu0 0
      %1089 = vmatprep.subr.bf16.mxu0 0
      %1090 = vmatpush2.bf16.msra.mxu0 0
      %1091 = vmatprep.subr.bf16.mxu0 0
      %1092 = vmatpush2.bf16.msra.mxu0 0
      %1093 = vmatprep.subr.bf16.mxu0 0
      %1094 = vmatpush2.bf16.msra.mxu0 0
      %1095 = vmatprep.subr.bf16.mxu0 0
      %1096 = vmatpush2.bf16.msra.mxu0 0
      %1097 = vmatprep.subr.bf16.mxu0 0
      %1098 = vmatpush2.bf16.msra.mxu0 0
      %1099 = vmatprep.mubr.bf16.mxu0 0
      %1100 = vmatmul.mubr.bf16.gmra.mxu0 %v1002
      %v1101 = vpop.f32.mrf.mxu0
      %v1102 = vadd.f32 0.0, %v1101
      %v1103 = vpop.f32.mrf.mxu0
      %v1104 = vpop.f32.mrf.mxu0
      %v1105 = vpop.f32.mrf.mxu0
      %1106 = vdwg.mxu0
      %v1107 = vadd.f32 %v262, %v1102
      %1108 = vst [vmem:[%s260] sm:$0x7] %v1107
      %p1109 = scmp.lt.s32.totalorder %s17, 1
      %s1110 = scalar_select %p1109, %s17, 1
      %s1111 = smul.addr %s1110, 4
      %s1112 = scalar_lea.vmem %s6, %s1111
      // Predicated region
      $region45: #{t5_model_loss.8} parent=43 // pred_check
        %p1113 = pneg %p171
      $region46: #{t5_model_loss.8} parent=43 // pred_check_branch
        %1115 = sbr.rel (%p1113) target = $region48
      $region47: #{t5_model_loss.8} parent=43 // pred_region
        _
      $region48: #{t5_model_loss.8} parent=43 // pred_fallthru
        _
    $region44: #{t5_model_loss.8} parent=5 // pred_fallthru
      _
    %p1116 = scmp.le.s32.totalorder 2, %s12
    // Predicated region
    $region49: #{t5_model_loss.8} parent=5 // pred_check
      %p1117 = pneg %p1116
    $region50: #{t5_model_loss.8} parent=5 // pred_check_branch
      %1119 = sbr.rel (%p1117) target = $region52
    $region51: #{t5_model_loss.8} parent=5 // pred_region
      %s1120 = ssub.s32 %s12, 2
      // Predicated region
      $region53: #{t5_model_loss.8} parent=51 // pred_check
        %p1121 = pneg %p177
      $region54: #{t5_model_loss.8} parent=51 // pred_check_branch
        %1123 = sbr.rel (%p1121) target = $region56
      $region55: #{t5_model_loss.8} parent=51 // pred_region
        %p1124 = scmp.lt.s32.totalorder %s18, 1
        %s1125 = scalar_select %p1124, %s18, 1
        %s1126 = smul.addr %s1125, 4
        %s1127 = scalar_lea.vmem %s6, %s1126
      $region56: #{t5_model_loss.8} parent=51 // pred_fallthru
        _
    $region52: #{t5_model_loss.8} parent=5 // pred_fallthru
      _
  $region6: #{t5_model_loss.8} parent=0 // loop_footer
    %s16 = sadd.s32 1, %s12
  $region7: #{t5_model_loss.8} parent=0 // loop_footer_branch
    %11 = sbr.rel target = $region3
  $region8: #{t5_model_loss.8} parent=0 // loop_exit
    _

// kernel: t5_model_loss.9
$region0: #{t5_model_loss.9}
  #allocation0 [shape = 'u32[]', space=smem, size = 0x4, offset = 0x4, fixed_abs, tag = 'smem constant byte address 0x4 - core index']
  #allocation1 [shape = 'u32[144,128]{1,0:T(1,128)}', space=vmem, size = 0x12000, scoped, tag = 'internal scratch']
  %s0 = inlined_call_operand.vmem [shape: f32[2,3,128], index: 0, kind: input, shape index: {}]
  %s1 = inlined_call_operand.vmem [shape: f32[2,8,128], index: 1, kind: input, shape index: {}]
  %s2 = inlined_call_operand.vmem [shape: f32[1,128], index: 2, kind: input, shape index: {}]
  %s3 = inlined_call_operand.vmem [shape: f32[1,128], index: 3, kind: input, shape index: {}]
  %s4 = inlined_call_operand.vmem [shape: bf16[128,128], index: 4, kind: input, shape index: {}]
  %s5 = inlined_call_operand.vmem [shape: bf16[128,256], index: 5, kind: input, shape index: {}]
  %s6 = inlined_call_operand.vmem [shape: bf16[128,128], index: 6, kind: input, shape index: {}]
  %s7 = inlined_call_operand.vmem [shape: f32[2,1,1,8], index: 7, kind: input, shape index: {}]
  %s8 = inlined_call_operand.vmem [shape: f32[2,3,128], index: 8, kind: output, shape index: {}]
  %s9 = sld [smem:[#allocation0]]
  $region65: #{t5_model_loss.9} parent=0
    _
  %s11 = ssub.s32 1, %s9
  %s12 = scalar_select 0, %s11, %s9
  loop: start=0, step=1, limit=4
  $region2: #{t5_model_loss.9} parent=0 // loop_pre_header
    _
  $region3: #{t5_model_loss.9} parent=0 // loop_header
    %s14 = sphi 0, %s18
    %p15 = scmp.ge.s32.totalorder %s14, 4
    %s24 = sphi 0, %s26
    %s27 = sphi 0, %s24
    %s28 = sphi 0, %s27
    %s44 = sphi 0, %s28
    %s50 = sphi 0, %s52
    %s53 = sphi 0, %s50
    %s54 = sphi 0, %s53
    %s70 = sphi 0, %s54
    %s74 = sphi 0, %s74
    %s76 = sphi 0, %s74
    %s77 = sphi 0, %s76
    %s91 = sphi 0, %s77
    %s95 = sphi 0, %s95
    %s97 = sphi 0, %s95
    %s98 = sphi 0, %s97
    %s112 = sphi 0, %s98
    %s116 = sphi 0, %s116
    %s118 = sphi 0, %s116
    %s119 = sphi 0, %s118
    %s133 = sphi 0, %s119
    %s137 = sphi 0, %s137
    %s139 = sphi 0, %s137
    %s140 = sphi 0, %s139
    %s154 = sphi 0, %s140
    %s158 = sphi 0, %s158
    %s160 = sphi 0, %s158
    %s161 = sphi 0, %s160
    %s175 = sphi 0, %s161
    %s181 = sphi 0, %s183
    %s184 = sphi 0, %s181
    %s185 = sphi 0, %s184
    %s201 = sphi 0, %s185
    %s207 = sphi 0, %s209
    %s210 = sphi 0, %s207
    %s211 = sphi 0, %s210
    %s227 = sphi 0, %s211
  $region4: #{t5_model_loss.9} parent=0 // loop_header_branch
    %17 = sbr.rel (%p15) target = $region8
  $region5: #{t5_model_loss.9} parent=0 // loop_body
    %s19 = ssub.s32 %s14, 1
    %s20 = ssub.s32 %s14, 2
    %s21 = sadd.s32 %s14, 1
    %s22 = ssub.s32 %s14, %s21
    %p23 = scmp.eq.s32.totalorder %s22, 0
    %s25 = sadd.s32 %s24, 1
    %s26 = scalar_select %p23, %s24, %s25
    %p29 = pneg %p23
    %p30 = scmp.eq.s32.totalorder %s14, 1
    %p31 = por %p29, %p30
    %p32 = scmp.ne.s32.totalorder %s24, %s27
    %p33 = scmp.eq.s32.totalorder %s14, 0
    %p34 = por %p32, %p33
    %p35 = scmp.ne.s32.totalorder %s24, %s27
    %p36 = scmp.eq.s32.totalorder %s19, 1
    %p37 = por %p35, %p36
    %p38 = scmp.ne.s32.totalorder %s27, %s28
    %p39 = scmp.eq.s32.totalorder %s19, 0
    %p40 = por %p38, %p39
    %p41 = scmp.ne.s32.totalorder %s27, %s28
    %p42 = scmp.eq.s32.totalorder %s20, 1
    %p43 = por %p41, %p42
    %p45 = scmp.ne.s32.totalorder %s28, %s44
    %p46 = scmp.eq.s32.totalorder %s20, 0
    %p47 = por %p45, %p46
    %s48 = ssub.s32 %s14, %s21
    %p49 = scmp.eq.s32.totalorder %s48, 0
    %s51 = sadd.s32 %s50, 1
    %s52 = scalar_select %p49, %s50, %s51
    %p55 = pneg %p49
    %p56 = scmp.eq.s32.totalorder %s14, 1
    %p57 = por %p55, %p56
    %p58 = scmp.ne.s32.totalorder %s50, %s53
    %p59 = scmp.eq.s32.totalorder %s14, 0
    %p60 = por %p58, %p59
    %p61 = scmp.ne.s32.totalorder %s50, %s53
    %p62 = scmp.eq.s32.totalorder %s19, 1
    %p63 = por %p61, %p62
    %p64 = scmp.ne.s32.totalorder %s53, %s54
    %p65 = scmp.eq.s32.totalorder %s19, 0
    %p66 = por %p64, %p65
    %p67 = scmp.ne.s32.totalorder %s53, %s54
    %p68 = scmp.eq.s32.totalorder %s20, 1
    %p69 = por %p67, %p68
    %p71 = scmp.ne.s32.totalorder %s54, %s70
    %p72 = scmp.eq.s32.totalorder %s20, 0
    %p73 = por %p71, %p72
    %s75 = sadd.s32 %s74, 1
    %p78 = scmp.eq.s32.totalorder %s14, 1
    %p79 = scmp.ne.s32.totalorder %s74, %s76
    %p80 = scmp.eq.s32.totalorder %s14, 0
    %p81 = por %p79, %p80
    %p82 = scmp.ne.s32.totalorder %s74, %s76
    %p83 = scmp.eq.s32.totalorder %s19, 1
    %p84 = por %p82, %p83
    %p85 = scmp.ne.s32.totalorder %s76, %s77
    %p86 = scmp.eq.s32.totalorder %s19, 0
    %p87 = por %p85, %p86
    %p88 = scmp.ne.s32.totalorder %s76, %s77
    %p89 = scmp.eq.s32.totalorder %s20, 1
    %p90 = por %p88, %p89
    %p92 = scmp.ne.s32.totalorder %s77, %s91
    %p93 = scmp.eq.s32.totalorder %s20, 0
    %p94 = por %p92, %p93
    %s96 = sadd.s32 %s95, 1
    %p99 = scmp.eq.s32.totalorder %s14, 1
    %p100 = scmp.ne.s32.totalorder %s95, %s97
    %p101 = scmp.eq.s32.totalorder %s14, 0
    %p102 = por %p100, %p101
    %p103 = scmp.ne.s32.totalorder %s95, %s97
    %p104 = scmp.eq.s32.totalorder %s19, 1
    %p105 = por %p103, %p104
    %p106 = scmp.ne.s32.totalorder %s97, %s98
    %p107 = scmp.eq.s32.totalorder %s19, 0
    %p108 = por %p106, %p107
    %p109 = scmp.ne.s32.totalorder %s97, %s98
    %p110 = scmp.eq.s32.totalorder %s20, 1
    %p111 = por %p109, %p110
    %p113 = scmp.ne.s32.totalorder %s98, %s112
    %p114 = scmp.eq.s32.totalorder %s20, 0
    %p115 = por %p113, %p114
    %s117 = sadd.s32 %s116, 1
    %p120 = scmp.eq.s32.totalorder %s14, 1
    %p121 = scmp.ne.s32.totalorder %s116, %s118
    %p122 = scmp.eq.s32.totalorder %s14, 0
    %p123 = por %p121, %p122
    %p124 = scmp.ne.s32.totalorder %s116, %s118
    %p125 = scmp.eq.s32.totalorder %s19, 1
    %p126 = por %p124, %p125
    %p127 = scmp.ne.s32.totalorder %s118, %s119
    %p128 = scmp.eq.s32.totalorder %s19, 0
    %p129 = por %p127, %p128
    %p130 = scmp.ne.s32.totalorder %s118, %s119
    %p131 = scmp.eq.s32.totalorder %s20, 1
    %p132 = por %p130, %p131
    %p134 = scmp.ne.s32.totalorder %s119, %s133
    %p135 = scmp.eq.s32.totalorder %s20, 0
    %p136 = por %p134, %p135
    %s138 = sadd.s32 %s137, 1
    %p141 = scmp.eq.s32.totalorder %s14, 1
    %p142 = scmp.ne.s32.totalorder %s137, %s139
    %p143 = scmp.eq.s32.totalorder %s14, 0
    %p144 = por %p142, %p143
    %p145 = scmp.ne.s32.totalorder %s137, %s139
    %p146 = scmp.eq.s32.totalorder %s19, 1
    %p147 = por %p145, %p146
    %p148 = scmp.ne.s32.totalorder %s139, %s140
    %p149 = scmp.eq.s32.totalorder %s19, 0
    %p150 = por %p148, %p149
    %p151 = scmp.ne.s32.totalorder %s139, %s140
    %p152 = scmp.eq.s32.totalorder %s20, 1
    %p153 = por %p151, %p152
    %p155 = scmp.ne.s32.totalorder %s140, %s154
    %p156 = scmp.eq.s32.totalorder %s20, 0
    %p157 = por %p155, %p156
    %s159 = sadd.s32 %s158, 1
    %p162 = scmp.eq.s32.totalorder %s14, 1
    %p163 = scmp.ne.s32.totalorder %s158, %s160
    %p164 = scmp.eq.s32.totalorder %s14, 0
    %p165 = por %p163, %p164
    %p166 = scmp.ne.s32.totalorder %s158, %s160
    %p167 = scmp.eq.s32.totalorder %s19, 1
    %p168 = por %p166, %p167
    %p169 = scmp.ne.s32.totalorder %s160, %s161
    %p170 = scmp.eq.s32.totalorder %s19, 0
    %p171 = por %p169, %p170
    %p172 = scmp.ne.s32.totalorder %s160, %s161
    %p173 = scmp.eq.s32.totalorder %s20, 1
    %p174 = por %p172, %p173
    %p176 = scmp.ne.s32.totalorder %s161, %s175
    %p177 = scmp.eq.s32.totalorder %s20, 0
    %p178 = por %p176, %p177
    %s179 = ssub.s32 %s14, %s21
    %p180 = scmp.eq.s32.totalorder %s179, 0
    %s182 = sadd.s32 %s181, 1
    %s183 = scalar_select %p180, %s181, %s182
    %p186 = pneg %p180
    %p187 = scmp.eq.s32.totalorder %s14, 1
    %p188 = por %p186, %p187
    %p189 = scmp.ne.s32.totalorder %s181, %s184
    %p190 = scmp.eq.s32.totalorder %s14, 0
    %p191 = por %p189, %p190
    %p192 = scmp.ne.s32.totalorder %s181, %s184
    %p193 = scmp.eq.s32.totalorder %s19, 1
    %p194 = por %p192, %p193
    %p195 = scmp.ne.s32.totalorder %s184, %s185
    %p196 = scmp.eq.s32.totalorder %s19, 0
    %p197 = por %p195, %p196
    %p198 = scmp.ne.s32.totalorder %s184, %s185
    %p199 = scmp.eq.s32.totalorder %s20, 1
    %p200 = por %p198, %p199
    %p202 = scmp.ne.s32.totalorder %s185, %s201
    %p203 = scmp.eq.s32.totalorder %s20, 0
    %p204 = por %p202, %p203
    %s205 = ssub.s32 %s14, %s21
    %p206 = scmp.eq.s32.totalorder %s205, 0
    %s208 = sadd.s32 %s207, 1
    %s209 = scalar_select %p206, %s207, %s208
    %p212 = pneg %p206
    %p213 = scmp.eq.s32.totalorder %s14, 1
    %p214 = por %p212, %p213
    %p215 = scmp.ne.s32.totalorder %s207, %s210
    %p216 = scmp.eq.s32.totalorder %s14, 0
    %p217 = por %p215, %p216
    %p218 = scmp.ne.s32.totalorder %s207, %s210
    %p219 = scmp.eq.s32.totalorder %s19, 1
    %p220 = por %p218, %p219
    %p221 = scmp.ne.s32.totalorder %s210, %s211
    %p222 = scmp.eq.s32.totalorder %s19, 0
    %p223 = por %p221, %p222
    %p224 = scmp.ne.s32.totalorder %s210, %s211
    %p225 = scmp.eq.s32.totalorder %s20, 1
    %p226 = por %p224, %p225
    %p228 = scmp.ne.s32.totalorder %s211, %s227
    %p229 = scmp.eq.s32.totalorder %s20, 0
    %p230 = por %p228, %p229
    %p231 = scmp.le.s32.totalorder 1, %s14
    %p232 = scmp.lt.s32.totalorder %s14, 3
    %p233 = pnand %p231, %p232
    %p234 = pneg %p233
    // Predicated region
    $region9: #{t5_model_loss.9} parent=5 // pred_check
      _
    $region10: #{t5_model_loss.9} parent=5 // pred_check_branch
      %236 = sbr.rel (%p233) target = $region12
    $region11: #{t5_model_loss.9} parent=5 // pred_region
      %s237 = ssub.s32 %s14, 1
      // Predicated region
      $region13: #{t5_model_loss.9} parent=11 // pred_check
        %p238 = pneg %p87
      $region14: #{t5_model_loss.9} parent=11 // pred_check_branch
        %240 = sbr.rel (%p238) target = $region16
      $region15: #{t5_model_loss.9} parent=11 // pred_region
        _
      $region16: #{t5_model_loss.9} parent=11 // pred_fallthru
        _
      // Predicated region
      $region17: #{t5_model_loss.9} parent=11 // pred_check
        %p241 = pneg %p108
      $region18: #{t5_model_loss.9} parent=11 // pred_check_branch
        %243 = sbr.rel (%p241) target = $region20
      $region19: #{t5_model_loss.9} parent=11 // pred_region
        _
      $region20: #{t5_model_loss.9} parent=11 // pred_fallthru
        _
      // Predicated region
      $region21: #{t5_model_loss.9} parent=11 // pred_check
        %p244 = pneg %p129
      $region22: #{t5_model_loss.9} parent=11 // pred_check_branch
        %246 = sbr.rel (%p244) target = $region24
      $region23: #{t5_model_loss.9} parent=11 // pred_region
        _
      $region24: #{t5_model_loss.9} parent=11 // pred_fallthru
        _
      // Predicated region
      $region25: #{t5_model_loss.9} parent=11 // pred_check
        %p247 = pneg %p150
      $region26: #{t5_model_loss.9} parent=11 // pred_check_branch
        %249 = sbr.rel (%p247) target = $region28
      $region27: #{t5_model_loss.9} parent=11 // pred_region
        _
      $region28: #{t5_model_loss.9} parent=11 // pred_fallthru
        _
      // Predicated region
      $region29: #{t5_model_loss.9} parent=11 // pred_check
        %p250 = pneg %p171
      $region30: #{t5_model_loss.9} parent=11 // pred_check_branch
        %252 = sbr.rel (%p250) target = $region32
      $region31: #{t5_model_loss.9} parent=11 // pred_region
        _
      $region32: #{t5_model_loss.9} parent=11 // pred_fallthru
        _
    $region12: #{t5_model_loss.9} parent=5 // pred_fallthru
      _
    %p253 = scmp.lt.s32.totalorder %s14, 2
    // Predicated region
    $region33: #{t5_model_loss.9} parent=5 // pred_check
      %p254 = pneg %p253
    $region34: #{t5_model_loss.9} parent=5 // pred_check_branch
      %256 = sbr.rel (%p254) target = $region36
    $region35: #{t5_model_loss.9} parent=5 // pred_region
      // Predicated region
      $region37: #{t5_model_loss.9} parent=35 // pred_check
        %p257 = pneg %p34
      $region38: #{t5_model_loss.9} parent=35 // pred_check_branch
        %259 = sbr.rel (%p257) target = $region40
      $region39: #{t5_model_loss.9} parent=35 // pred_region
        %p260 = scmp.lt.s32.totalorder %s14, 1
        %s261 = scalar_select %p260, %s14, 1
        %s262 = smul.addr %s261, 4
        %s263 = scalar_lea.vmem %s0, %s262
      $region40: #{t5_model_loss.9} parent=35 // pred_fallthru
        _
      // Predicated region
      $region41: #{t5_model_loss.9} parent=35 // pred_check
        %p264 = pneg %p60
      $region42: #{t5_model_loss.9} parent=35 // pred_check_branch
        %266 = sbr.rel (%p264) target = $region44
      $region43: #{t5_model_loss.9} parent=35 // pred_region
        %p267 = scmp.lt.s32.totalorder %s14, 1
        %s268 = scalar_select %p267, %s14, 1
        %s269 = smul.addr %s268, 8
        %s270 = scalar_lea.vmem %s1, %s269
      $region44: #{t5_model_loss.9} parent=35 // pred_fallthru
        _
      // Predicated region
      $region45: #{t5_model_loss.9} parent=35 // pred_check
        %p271 = pneg %p191
      $region46: #{t5_model_loss.9} parent=35 // pred_check_branch
        %273 = sbr.rel (%p271) target = $region48
      $region47: #{t5_model_loss.9} parent=35 // pred_region
        %p274 = scmp.lt.s32.totalorder %s14, 1
        %s275 = scalar_select %p274, %s14, 1
        %s276 = scalar_lea.vmem %s7, %s275
      $region48: #{t5_model_loss.9} parent=35 // pred_fallthru
        _
    $region36: #{t5_model_loss.9} parent=5 // pred_fallthru
      _
    %p277 = scmp.le.s32.totalorder 1, %s14
    %p278 = scmp.lt.s32.totalorder %s14, 3
    %p279 = pnand %p277, %p278
    %p280 = pneg %p279
    // Predicated region
    $region49: #{t5_model_loss.9} parent=5 // pred_check
      _
    $region50: #{t5_model_loss.9} parent=5 // pred_check_branch
      %282 = sbr.rel (%p279) target = $region52
    $region51: #{t5_model_loss.9} parent=5 // pred_region
      %s283 = ssub.s32 %s14, 1
      %p284 = scmp.lt.s32.totalorder %s19, 1
      %s285 = scalar_select %p284, %s19, 1
      %s286 = smul.addr %s285, 4
      %s287 = scalar_lea.vmem %s0, %s286
      %p288 = pneg %p40
      %p289 = pneg %p37
      %p290 = scmp.lt.s32.totalorder %s19, 1
      %s291 = scalar_select %p290, %s19, 1
      %s292 = smul.addr %s291, 8
      %s293 = scalar_lea.vmem %s1, %s292
      %p294 = pneg %p66
      %p295 = pneg %p63
      %p296 = pneg %p87
      %p297 = pneg %p84
      %p298 = pneg %p108
      %p299 = pneg %p105
      %p300 = pneg %p129
      %p301 = pneg %p126
      %p302 = pneg %p150
      %p303 = pneg %p147
      %p304 = pneg %p171
      %p305 = pneg %p168
      %p306 = scmp.lt.s32.totalorder %s19, 1
      %s307 = scalar_select %p306, %s19, 1
      %s308 = scalar_lea.vmem %s7, %s307
      %p309 = pneg %p197
      %p310 = pneg %p194
      %p311 = pneg %p223
      %p312 = pneg %p220
      %p313 = scmp.lt.s32.totalorder %s19, 1
      %s314 = scalar_select %p313, %s19, 1
      %s315 = smul.addr %s314, 4
      %s316 = scalar_lea.vmem %s8, %s315
      %p317 = scmp.lt.s32.totalorder %s19, 1
      %s318 = scalar_select %p317, %s19, 1
      %s319 = smul.addr %s318, 4
      %s320 = scalar_lea.vmem %s0, %s319
      %p321 = scmp.lt.s32.totalorder %s19, 1
      %s322 = scalar_select %p321, %s19, 1
      %s323 = smul.addr %s322, 8
      %s324 = scalar_lea.vmem %s1, %s323
      %p325 = scmp.lt.s32.totalorder %s19, 1
      %s326 = scalar_select %p325, %s19, 1
      %s327 = scalar_lea.vmem %s7, %s326
      %p328 = scmp.lt.s32.totalorder %s19, 1
      %s329 = scalar_select %p328, %s19, 1
      %s330 = smul.addr %s329, 4
      %s331 = scalar_lea.vmem %s8, %s330
      %v333 = vld [vmem:[%s320] sm:$0x7]
      %v334 = vld [vmem:[%s324] sm:$0xff]
      %v335 = vld [vmem:[%s2] sm:$0x1]
      %v336 = vmul.f32 %v334, %v334
      %337 = vadd.xlane.f32.xlu0 %v336
      %v338 = vpop.xlane.xlu0 %337
      %v339 = vrcp.pop 128.0
      %v340 = vmul.f32 %v338, %v339
      %v341 = vadd.f32 %v340, 1e-06
      %v342 = vrsqrt.pop %v341
      %v343 = vmul.f32 %v334, %v342
      %v345 = vlaneseq
      %v346 = vshrl.u32 %v345, 7
      %v347 = vsub.s32 0, %v346
      %v348 = vrot.slane %v335, %v347
      %v350 = vmul.f32 %v343, %v348
      %v351 = vld [vmem:[%s3] sm:$0x1]
      %v352 = vmul.f32 %v333, %v333
      %vm353 = vcmask 1042432
      %v354 = vsel %vm353, %v352, 0.0
      %355 = vadd.xlane.f32.xlu0 %v354
      %v356 = vpop.xlane.xlu0 %355
      %v357 = vmul.f32 %v356, %v339
      %v358 = vadd.f32 %v357, 1e-06
      %v359 = vrsqrt.pop %v358
      %v360 = vmul.f32 %v333, %v359
      %v362 = vlaneseq
      %v363 = vshrl.u32 %v362, 7
      %v364 = vsub.s32 0, %v363
      %v365 = vrot.slane %v351, %v364
      %v367 = vmul.f32 %v360, %v365
      %v368 = vpack.c.bf16 %v367, %v367
      %v369 = vld [vmem:[%s4] sm:$0xf]
      %v370 = vld [vmem:[%s4 + $0x4] sm:$0xf]
      %v371 = vld [vmem:[%s4 + $0x8] sm:$0xf]
      %v372 = vld [vmem:[%s4 + $0xc] sm:$0xf]
      %v373 = vld [vmem:[%s4 + $0x10] sm:$0xf]
      %v374 = vld [vmem:[%s4 + $0x14] sm:$0xf]
      %v375 = vld [vmem:[%s4 + $0x18] sm:$0xf]
      %v376 = vld [vmem:[%s4 + $0x1c] sm:$0xf]
      %v377 = vld [vmem:[%s4 + $0x20] sm:$0xf]
      %v378 = vld [vmem:[%s4 + $0x24] sm:$0xf]
      %v379 = vld [vmem:[%s4 + $0x28] sm:$0xf]
      %v380 = vld [vmem:[%s4 + $0x2c] sm:$0xf]
      %v381 = vld [vmem:[%s4 + $0x30] sm:$0xf]
      %v382 = vld [vmem:[%s4 + $0x34] sm:$0xf]
      %v383 = vld [vmem:[%s4 + $0x38] sm:$0xf]
      %v384 = vld [vmem:[%s4 + $0x3c] sm:$0xf]
      %v401 = vunpack.c.l.b16 %v369
      %v402 = vunpack.c.l.b16 %v370
      %v403 = vunpack.c.l.b16 %v371
      %v404 = vunpack.c.l.b16 %v372
      %v405 = vunpack.c.l.b16 %v373
      %v406 = vunpack.c.l.b16 %v374
      %v407 = vunpack.c.l.b16 %v375
      %v408 = vunpack.c.l.b16 %v376
      %v409 = vunpack.c.l.b16 %v377
      %v410 = vunpack.c.l.b16 %v378
      %v411 = vunpack.c.l.b16 %v379
      %v412 = vunpack.c.l.b16 %v380
      %v413 = vunpack.c.l.b16 %v381
      %v414 = vunpack.c.l.b16 %v382
      %v415 = vunpack.c.l.b16 %v383
      %v416 = vunpack.c.l.b16 %v384
      %v417 = vpack.c.b16 %v402, %v401
      %v418 = vpack.c.b16 %v404, %v403
      %v419 = vpack.c.b16 %v406, %v405
      %v420 = vpack.c.b16 %v408, %v407
      %v421 = vpack.c.b16 %v410, %v409
      %v422 = vpack.c.b16 %v412, %v411
      %v423 = vpack.c.b16 %v414, %v413
      %v424 = vpack.c.b16 %v416, %v415
      %433 = vmatprep.subr.bf16.mxu0 0
      %434 = vmatpush1.bf16.msra.mxu0 %v424
      %435 = vmatprep.subr.bf16.mxu0 0
      %436 = vmatpush1.bf16.msra.mxu0 %v423
      %437 = vmatprep.subr.bf16.mxu0 0
      %438 = vmatpush1.bf16.msra.mxu0 %v422
      %439 = vmatprep.subr.bf16.mxu0 0
      %440 = vmatpush1.bf16.msra.mxu0 %v421
      %441 = vmatprep.subr.bf16.mxu0 0
      %442 = vmatpush1.bf16.msra.mxu0 %v420
      %443 = vmatprep.subr.bf16.mxu0 0
      %444 = vmatpush1.bf16.msra.mxu0 %v419
      %445 = vmatprep.subr.bf16.mxu0 0
      %446 = vmatpush1.bf16.msra.mxu0 %v418
      %447 = vmatprep.subr.bf16.mxu0 0
      %448 = vmatpush1.bf16.msra.mxu0 %v417
      %449 = vmatprep.subr.bf16.mxu0 0
      %450 = vmatpush2.bf16.msra.mxu0 0
      %451 = vmatprep.subr.bf16.mxu0 0
      %452 = vmatpush2.bf16.msra.mxu0 0
      %453 = vmatprep.subr.bf16.mxu0 0
      %454 = vmatpush2.bf16.msra.mxu0 0
      %455 = vmatprep.subr.bf16.mxu0 0
      %456 = vmatpush2.bf16.msra.mxu0 0
      %457 = vmatprep.subr.bf16.mxu0 0
      %458 = vmatpush2.bf16.msra.mxu0 0
      %459 = vmatprep.subr.bf16.mxu0 0
      %460 = vmatpush2.bf16.msra.mxu0 0
      %461 = vmatprep.subr.bf16.mxu0 0
      %462 = vmatpush2.bf16.msra.mxu0 0
      %463 = vmatprep.subr.bf16.mxu0 0
      %464 = vmatpush2.bf16.msra.mxu0 0
      %465 = vmatprep.mubr.bf16.mxu0 0
      %466 = vmatmul.mubr.bf16.gmra.mxu0 %v368
      %v467 = vpop.f32.mrf.mxu0
      %v468 = vadd.f32 0.0, %v467
      %v469 = vpop.f32.mrf.mxu0
      %v470 = vpop.f32.mrf.mxu0
      %v471 = vpop.f32.mrf.mxu0
      %472 = vdwg.mxu0
      %v473 = vpack.c.bf16 %v350, %v350
      %v474 = vld [vmem:[%s5] sm:$0xff]
      %v475 = vld [vmem:[%s5 + $0x8] sm:$0xff]
      %v476 = vld [vmem:[%s5 + $0x10] sm:$0xff]
      %v477 = vld [vmem:[%s5 + $0x18] sm:$0xff]
      %v478 = vld [vmem:[%s5 + $0x20] sm:$0xff]
      %v479 = vld [vmem:[%s5 + $0x28] sm:$0xff]
      %v480 = vld [vmem:[%s5 + $0x30] sm:$0xff]
      %v481 = vld [vmem:[%s5 + $0x38] sm:$0xff]
      %v482 = vld [vmem:[%s5 + $0x40] sm:$0xff]
      %v483 = vld [vmem:[%s5 + $0x48] sm:$0xff]
      %v484 = vld [vmem:[%s5 + $0x50] sm:$0xff]
      %v485 = vld [vmem:[%s5 + $0x58] sm:$0xff]
      %v486 = vld [vmem:[%s5 + $0x60] sm:$0xff]
      %v487 = vld [vmem:[%s5 + $0x68] sm:$0xff]
      %v488 = vld [vmem:[%s5 + $0x70] sm:$0xff]
      %v489 = vld [vmem:[%s5 + $0x78] sm:$0xff]
      %v506 = vunpack.c.l.b16 %v474
      %v507 = vunpack.c.h.b16 %v474
      %v508 = vunpack.c.l.b16 %v475
      %v509 = vunpack.c.h.b16 %v475
      %v510 = vunpack.c.l.b16 %v476
      %v511 = vunpack.c.h.b16 %v476
      %v512 = vunpack.c.l.b16 %v477
      %v513 = vunpack.c.h.b16 %v477
      %v514 = vunpack.c.l.b16 %v478
      %v515 = vunpack.c.h.b16 %v478
      %v516 = vunpack.c.l.b16 %v479
      %v517 = vunpack.c.h.b16 %v479
      %v518 = vunpack.c.l.b16 %v480
      %v519 = vunpack.c.h.b16 %v480
      %v520 = vunpack.c.l.b16 %v481
      %v521 = vunpack.c.h.b16 %v481
      %v522 = vunpack.c.l.b16 %v482
      %v523 = vunpack.c.h.b16 %v482
      %v524 = vunpack.c.l.b16 %v483
      %v525 = vunpack.c.h.b16 %v483
      %v526 = vunpack.c.l.b16 %v484
      %v527 = vunpack.c.h.b16 %v484
      %v528 = vunpack.c.l.b16 %v485
      %v529 = vunpack.c.h.b16 %v485
      %v530 = vunpack.c.l.b16 %v486
      %v531 = vunpack.c.h.b16 %v486
      %v532 = vunpack.c.l.b16 %v487
      %v533 = vunpack.c.h.b16 %v487
      %v534 = vunpack.c.l.b16 %v488
      %v535 = vunpack.c.h.b16 %v488
      %v536 = vunpack.c.l.b16 %v489
      %v537 = vunpack.c.h.b16 %v489
      %v538 = vpack.c.b16 %v508, %v506
      %v539 = vpack.c.b16 %v509, %v507
      %v540 = vpack.c.b16 %v512, %v510
      %v541 = vpack.c.b16 %v513, %v511
      %v542 = vpack.c.b16 %v516, %v514
      %v543 = vpack.c.b16 %v517, %v515
      %v544 = vpack.c.b16 %v520, %v518
      %v545 = vpack.c.b16 %v521, %v519
      %v546 = vpack.c.b16 %v524, %v522
      %v547 = vpack.c.b16 %v525, %v523
      %v548 = vpack.c.b16 %v528, %v526
      %v549 = vpack.c.b16 %v529, %v527
      %v550 = vpack.c.b16 %v532, %v530
      %v551 = vpack.c.b16 %v533, %v531
      %v552 = vpack.c.b16 %v536, %v534
      %v553 = vpack.c.b16 %v537, %v535
      %570 = vmatprep.subr.bf16.mxu0 %v553
      %571 = vmatpush1.bf16.msra.mxu0 %v552
      %572 = vmatprep.subr.bf16.mxu0 %v551
      %573 = vmatpush1.bf16.msra.mxu0 %v550
      %574 = vmatprep.subr.bf16.mxu0 %v549
      %575 = vmatpush1.bf16.msra.mxu0 %v548
      %576 = vmatprep.subr.bf16.mxu0 %v547
      %577 = vmatpush1.bf16.msra.mxu0 %v546
      %578 = vmatprep.subr.bf16.mxu0 %v545
      %579 = vmatpush1.bf16.msra.mxu0 %v544
      %580 = vmatprep.subr.bf16.mxu0 %v543
      %581 = vmatpush1.bf16.msra.mxu0 %v542
      %582 = vmatprep.subr.bf16.mxu0 %v541
      %583 = vmatpush1.bf16.msra.mxu0 %v540
      %584 = vmatprep.subr.bf16.mxu0 %v539
      %585 = vmatpush1.bf16.msra.mxu0 %v538
      %586 = vmatprep.subr.bf16.mxu0 0
      %587 = vmatpush2.bf16.msra.mxu0 0
      %588 = vmatprep.subr.bf16.mxu0 0
      %589 = vmatpush2.bf16.msra.mxu0 0
      %590 = vmatprep.subr.bf16.mxu0 0
      %591 = vmatpush2.bf16.msra.mxu0 0
      %592 = vmatprep.subr.bf16.mxu0 0
      %593 = vmatpush2.bf16.msra.mxu0 0
      %594 = vmatprep.subr.bf16.mxu0 0
      %595 = vmatpush2.bf16.msra.mxu0 0
      %596 = vmatprep.subr.bf16.mxu0 0
      %597 = vmatpush2.bf16.msra.mxu0 0
      %598 = vmatprep.subr.bf16.mxu0 0
      %599 = vmatpush2.bf16.msra.mxu0 0
      %600 = vmatprep.subr.bf16.mxu0 0
      %601 = vmatpush2.bf16.msra.mxu0 0
      %602 = vmatprep.mubr.bf16.mxu0 0
      %603 = vmatmul.mubr.bf16.gmra.mxu0 %v473
      %v604 = vpop.f32.mrf.mxu0
      %v605 = vadd.f32 0.0, %v604
      %v606 = vpop.f32.mrf.mxu0
      %v607 = vadd.f32 0.0, %v606
      %v608 = vpop.f32.mrf.mxu0
      %v609 = vpop.f32.mrf.mxu0
      %610 = vdwg.mxu0
      %v611 = vld [vmem:[%s327] sm:$0x1]
      %v612 = vpack.c.bf16 %v468, %v468
      %v613 = vpack.c.bf16 %v605, %v605
      %v614 = vpack.c.bf16 %v607, %v607
      %v616 = vlaneseq
      %v617 = vshrl.u32 %v616, 7
      %v618 = vsub.s32 0, %v617
      %v619 = vrot.slane %v611, %v618
      %vm621 = vcmask 261120
      %v623 = vsel %vm621, %v612, 0
      %v626 = vsel %vm621, %v613, 0
      %628 = vmatprep.subr.bf16.mxu0 0
      %629 = vmatpush1.bf16.xpose.msra.mxu0 0
      %630 = vmatprep.subr.bf16.mxu0 0
      %631 = vmatpush1.bf16.xpose.msra.mxu0 0
      %632 = vmatprep.subr.bf16.mxu0 0
      %633 = vmatpush1.bf16.xpose.msra.mxu0 0
      %634 = vmatprep.subr.bf16.mxu0 0
      %635 = vmatpush1.bf16.xpose.msra.mxu0 0
      %636 = vmatprep.subr.bf16.mxu0 0
      %637 = vmatpush1.bf16.xpose.msra.mxu0 0
      %638 = vmatprep.subr.bf16.mxu0 0
      %639 = vmatpush1.bf16.xpose.msra.mxu0 0
      %640 = vmatprep.subr.bf16.mxu0 0
      %641 = vmatpush1.bf16.xpose.msra.mxu0 0
      %642 = vmatprep.subr.bf16.mxu0 0
      %643 = vmatpush1.bf16.xpose.msra.mxu0 %v626
      %644 = vmatprep.subr.bf16.mxu0 0
      %645 = vmatpush2.bf16.xpose.msra.mxu0 0
      %646 = vmatprep.subr.bf16.mxu0 0
      %647 = vmatpush2.bf16.xpose.msra.mxu0 0
      %648 = vmatprep.subr.bf16.mxu0 0
      %649 = vmatpush2.bf16.xpose.msra.mxu0 0
      %650 = vmatprep.subr.bf16.mxu0 0
      %651 = vmatpush2.bf16.xpose.msra.mxu0 0
      %652 = vmatprep.subr.bf16.mxu0 0
      %653 = vmatpush2.bf16.xpose.msra.mxu0 0
      %654 = vmatprep.subr.bf16.mxu0 0
      %655 = vmatpush2.bf16.xpose.msra.mxu0 0
      %656 = vmatprep.subr.bf16.mxu0 0
      %657 = vmatpush2.bf16.xpose.msra.mxu0 0
      %658 = vmatprep.subr.bf16.mxu0 0
      %659 = vmatpush2.bf16.xpose.msra.mxu0 0
      %660 = vmatprep.mubr.bf16.mxu0 0
      %661 = vmatmul.mubr.bf16.gmra.mxu0 %v623
      %v662 = vpop.f32.mrf.mxu0
      %v663 = vadd.f32 %v619, %v662
      %v664 = vpop.f32.mrf.mxu0
      %v665 = vpop.f32.mrf.mxu0
      %v666 = vpop.f32.mrf.mxu0
      %667 = vdwg.mxu0
      %vm668 = vcmask 59392
      %v669 = vsel %vm668, %v663, -inf
      %670 = vmax.xlane.f32.xlu0 %v669
      %v671 = vpop.xlane.xlu0 %670
      %v672 = vsub.f32 %v663, %v671
      %v673 = vmul.f32 %v672, 1.442695
      %v674 = vpow.pop %v673
      %v675 = vsel %vm668, %v674, 0.0
      %676 = vadd.xlane.f32.xlu0 %v675
      %v677 = vpop.xlane.xlu0 %676
      %v678 = vrcp.pop %v677
      %v679 = vmul.f32 %v674, %v678
      %v680 = vpack.c.bf16 %v679, %v679
      %vm681 = vcmask 64512
      %v683 = vsel %vm681, %v680, 0
      %vm685 = vcmask 1043456
      %v687 = vsel %vm685, %v614, 0
      %689 = vmatprep.subr.bf16.mxu0 0
      %690 = vmatpush1.bf16.msra.mxu0 0
      %691 = vmatprep.subr.bf16.mxu0 0
      %692 = vmatpush1.bf16.msra.mxu0 0
      %693 = vmatprep.subr.bf16.mxu0 0
      %694 = vmatpush1.bf16.msra.mxu0 0
      %695 = vmatprep.subr.bf16.mxu0 0
      %696 = vmatpush1.bf16.msra.mxu0 0
      %697 = vmatprep.subr.bf16.mxu0 0
      %698 = vmatpush1.bf16.msra.mxu0 0
      %699 = vmatprep.subr.bf16.mxu0 0
      %700 = vmatpush1.bf16.msra.mxu0 0
      %701 = vmatprep.subr.bf16.mxu0 0
      %702 = vmatpush1.bf16.msra.mxu0 0
      %703 = vmatprep.subr.bf16.mxu0 0
      %704 = vmatpush1.bf16.msra.mxu0 %v687
      %705 = vmatprep.subr.bf16.mxu0 0
      %706 = vmatpush2.bf16.msra.mxu0 0
      %707 = vmatprep.subr.bf16.mxu0 0
      %708 = vmatpush2.bf16.msra.mxu0 0
      %709 = vmatprep.subr.bf16.mxu0 0
      %710 = vmatpush2.bf16.msra.mxu0 0
      %711 = vmatprep.subr.bf16.mxu0 0
      %712 = vmatpush2.bf16.msra.mxu0 0
      %713 = vmatprep.subr.bf16.mxu0 0
      %714 = vmatpush2.bf16.msra.mxu0 0
      %715 = vmatprep.subr.bf16.mxu0 0
      %716 = vmatpush2.bf16.msra.mxu0 0
      %717 = vmatprep.subr.bf16.mxu0 0
      %718 = vmatpush2.bf16.msra.mxu0 0
      %719 = vmatprep.subr.bf16.mxu0 0
      %720 = vmatpush2.bf16.msra.mxu0 0
      %721 = vmatprep.mubr.bf16.mxu0 0
      %722 = vmatmul.mubr.bf16.gmra.mxu0 %v683
      %v723 = vpop.f32.mrf.mxu0
      %v724 = vadd.f32 0.0, %v723
      %v725 = vpop.f32.mrf.mxu0
      %v726 = vpop.f32.mrf.mxu0
      %v727 = vpop.f32.mrf.mxu0
      %728 = vdwg.mxu0
      %730 = vrot.lane.b32.xlu0 %v612, 96
      %v731 = vpop.permute.xlu0 %730
      %733 = vrot.lane.b32.xlu0 %v613, 96
      %v734 = vpop.permute.xlu0 %733
      %v736 = vsel %vm621, %v731, 0
      %v739 = vsel %vm621, %v734, 0
      %741 = vmatprep.subr.bf16.mxu0 0
      %742 = vmatpush1.bf16.xpose.msra.mxu0 0
      %743 = vmatprep.subr.bf16.mxu0 0
      %744 = vmatpush1.bf16.xpose.msra.mxu0 0
      %745 = vmatprep.subr.bf16.mxu0 0
      %746 = vmatpush1.bf16.xpose.msra.mxu0 0
      %747 = vmatprep.subr.bf16.mxu0 0
      %748 = vmatpush1.bf16.xpose.msra.mxu0 0
      %749 = vmatprep.subr.bf16.mxu0 0
      %750 = vmatpush1.bf16.xpose.msra.mxu0 0
      %751 = vmatprep.subr.bf16.mxu0 0
      %752 = vmatpush1.bf16.xpose.msra.mxu0 0
      %753 = vmatprep.subr.bf16.mxu0 0
      %754 = vmatpush1.bf16.xpose.msra.mxu0 0
      %755 = vmatprep.subr.bf16.mxu0 0
      %756 = vmatpush1.bf16.xpose.msra.mxu0 %v739
      %757 = vmatprep.subr.bf16.mxu0 0
      %758 = vmatpush2.bf16.xpose.msra.mxu0 0
      %759 = vmatprep.subr.bf16.mxu0 0
      %760 = vmatpush2.bf16.xpose.msra.mxu0 0
      %761 = vmatprep.subr.bf16.mxu0 0
      %762 = vmatpush2.bf16.xpose.msra.mxu0 0
      %763 = vmatprep.subr.bf16.mxu0 0
      %764 = vmatpush2.bf16.xpose.msra.mxu0 0
      %765 = vmatprep.subr.bf16.mxu0 0
      %766 = vmatpush2.bf16.xpose.msra.mxu0 0
      %767 = vmatprep.subr.bf16.mxu0 0
      %768 = vmatpush2.bf16.xpose.msra.mxu0 0
      %769 = vmatprep.subr.bf16.mxu0 0
      %770 = vmatpush2.bf16.xpose.msra.mxu0 0
      %771 = vmatprep.subr.bf16.mxu0 0
      %772 = vmatpush2.bf16.xpose.msra.mxu0 0
      %773 = vmatprep.mubr.bf16.mxu0 0
      %774 = vmatmul.mubr.bf16.gmra.mxu0 %v736
      %v775 = vpop.f32.mrf.mxu0
      %v776 = vadd.f32 %v619, %v775
      %v777 = vpop.f32.mrf.mxu0
      %v778 = vpop.f32.mrf.mxu0
      %v779 = vpop.f32.mrf.mxu0
      %780 = vdwg.mxu0
      %v781 = vsel %vm668, %v776, -inf
      %782 = vmax.xlane.f32.xlu0 %v781
      %v783 = vpop.xlane.xlu0 %782
      %v784 = vsub.f32 %v776, %v783
      %v785 = vmul.f32 %v784, 1.442695
      %v786 = vpow.pop %v785
      %v787 = vsel %vm668, %v786, 0.0
      %788 = vadd.xlane.f32.xlu0 %v787
      %v789 = vpop.xlane.xlu0 %788
      %v790 = vrcp.pop %v789
      %v791 = vmul.f32 %v786, %v790
      %v792 = vpack.c.bf16 %v791, %v791
      %794 = vrot.lane.b32.xlu0 %v614, 96
      %v795 = vpop.permute.xlu0 %794
      %v797 = vsel %vm681, %v792, 0
      %v800 = vsel %vm685, %v795, 0
      %802 = vmatprep.subr.bf16.mxu0 0
      %803 = vmatpush1.bf16.msra.mxu0 0
      %804 = vmatprep.subr.bf16.mxu0 0
      %805 = vmatpush1.bf16.msra.mxu0 0
      %806 = vmatprep.subr.bf16.mxu0 0
      %807 = vmatpush1.bf16.msra.mxu0 0
      %808 = vmatprep.subr.bf16.mxu0 0
      %809 = vmatpush1.bf16.msra.mxu0 0
      %810 = vmatprep.subr.bf16.mxu0 0
      %811 = vmatpush1.bf16.msra.mxu0 0
      %812 = vmatprep.subr.bf16.mxu0 0
      %813 = vmatpush1.bf16.msra.mxu0 0
      %814 = vmatprep.subr.bf16.mxu0 0
      %815 = vmatpush1.bf16.msra.mxu0 0
      %816 = vmatprep.subr.bf16.mxu0 0
      %817 = vmatpush1.bf16.msra.mxu0 %v800
      %818 = vmatprep.subr.bf16.mxu0 0
      %819 = vmatpush2.bf16.msra.mxu0 0
      %820 = vmatprep.subr.bf16.mxu0 0
      %821 = vmatpush2.bf16.msra.mxu0 0
      %822 = vmatprep.subr.bf16.mxu0 0
      %823 = vmatpush2.bf16.msra.mxu0 0
      %824 = vmatprep.subr.bf16.mxu0 0
      %825 = vmatpush2.bf16.msra.mxu0 0
      %826 = vmatprep.subr.bf16.mxu0 0
      %827 = vmatpush2.bf16.msra.mxu0 0
      %828 = vmatprep.subr.bf16.mxu0 0
      %829 = vmatpush2.bf16.msra.mxu0 0
      %830 = vmatprep.subr.bf16.mxu0 0
      %831 = vmatpush2.bf16.msra.mxu0 0
      %832 = vmatprep.subr.bf16.mxu0 0
      %833 = vmatpush2.bf16.msra.mxu0 0
      %834 = vmatprep.mubr.bf16.mxu0 0
      %835 = vmatmul.mubr.bf16.gmra.mxu0 %v797
      %v836 = vpop.f32.mrf.mxu0
      %v837 = vadd.f32 0.0, %v836
      %v838 = vpop.f32.mrf.mxu0
      %v839 = vpop.f32.mrf.mxu0
      %v840 = vpop.f32.mrf.mxu0
      %841 = vdwg.mxu0
      %842 = vrot.lane.b32.xlu0 %v612, 64
      %v843 = vpop.permute.xlu0 %842
      %844 = vrot.lane.b32.xlu0 %v613, 64
      %v845 = vpop.permute.xlu0 %844
      %v847 = vsel %vm621, %v843, 0
      %v850 = vsel %vm621, %v845, 0
      %852 = vmatprep.subr.bf16.mxu0 0
      %853 = vmatpush1.bf16.xpose.msra.mxu0 0
      %854 = vmatprep.subr.bf16.mxu0 0
      %855 = vmatpush1.bf16.xpose.msra.mxu0 0
      %856 = vmatprep.subr.bf16.mxu0 0
      %857 = vmatpush1.bf16.xpose.msra.mxu0 0
      %858 = vmatprep.subr.bf16.mxu0 0
      %859 = vmatpush1.bf16.xpose.msra.mxu0 0
      %860 = vmatprep.subr.bf16.mxu0 0
      %861 = vmatpush1.bf16.xpose.msra.mxu0 0
      %862 = vmatprep.subr.bf16.mxu0 0
      %863 = vmatpush1.bf16.xpose.msra.mxu0 0
      %864 = vmatprep.subr.bf16.mxu0 0
      %865 = vmatpush1.bf16.xpose.msra.mxu0 0
      %866 = vmatprep.subr.bf16.mxu0 0
      %867 = vmatpush1.bf16.xpose.msra.mxu0 %v850
      %868 = vmatprep.subr.bf16.mxu0 0
      %869 = vmatpush2.bf16.xpose.msra.mxu0 0
      %870 = vmatprep.subr.bf16.mxu0 0
      %871 = vmatpush2.bf16.xpose.msra.mxu0 0
      %872 = vmatprep.subr.bf16.mxu0 0
      %873 = vmatpush2.bf16.xpose.msra.mxu0 0
      %874 = vmatprep.subr.bf16.mxu0 0
      %875 = vmatpush2.bf16.xpose.msra.mxu0 0
      %876 = vmatprep.subr.bf16.mxu0 0
      %877 = vmatpush2.bf16.xpose.msra.mxu0 0
      %878 = vmatprep.subr.bf16.mxu0 0
      %879 = vmatpush2.bf16.xpose.msra.mxu0 0
      %880 = vmatprep.subr.bf16.mxu0 0
      %881 = vmatpush2.bf16.xpose.msra.mxu0 0
      %882 = vmatprep.subr.bf16.mxu0 0
      %883 = vmatpush2.bf16.xpose.msra.mxu0 0
      %884 = vmatprep.mubr.bf16.mxu0 0
      %885 = vmatmul.mubr.bf16.gmra.mxu0 %v847
      %v886 = vpop.f32.mrf.mxu0
      %v887 = vadd.f32 %v619, %v886
      %v888 = vpop.f32.mrf.mxu0
      %v889 = vpop.f32.mrf.mxu0
      %v890 = vpop.f32.mrf.mxu0
      %891 = vdwg.mxu0
      %v892 = vsel %vm668, %v887, -inf
      %893 = vmax.xlane.f32.xlu0 %v892
      %v894 = vpop.xlane.xlu0 %893
      %v895 = vsub.f32 %v887, %v894
      %v896 = vmul.f32 %v895, 1.442695
      %v897 = vpow.pop %v896
      %v898 = vsel %vm668, %v897, 0.0
      %899 = vadd.xlane.f32.xlu0 %v898
      %v900 = vpop.xlane.xlu0 %899
      %v901 = vrcp.pop %v900
      %v902 = vmul.f32 %v897, %v901
      %v903 = vpack.c.bf16 %v902, %v902
      %904 = vrot.lane.b32.xlu0 %v614, 64
      %v905 = vpop.permute.xlu0 %904
      %v907 = vsel %vm681, %v903, 0
      %v910 = vsel %vm685, %v905, 0
      %912 = vmatprep.subr.bf16.mxu0 0
      %913 = vmatpush1.bf16.msra.mxu0 0
      %914 = vmatprep.subr.bf16.mxu0 0
      %915 = vmatpush1.bf16.msra.mxu0 0
      %916 = vmatprep.subr.bf16.mxu0 0
      %917 = vmatpush1.bf16.msra.mxu0 0
      %918 = vmatprep.subr.bf16.mxu0 0
      %919 = vmatpush1.bf16.msra.mxu0 0
      %920 = vmatprep.subr.bf16.mxu0 0
      %921 = vmatpush1.bf16.msra.mxu0 0
      %922 = vmatprep.subr.bf16.mxu0 0
      %923 = vmatpush1.bf16.msra.mxu0 0
      %924 = vmatprep.subr.bf16.mxu0 0
      %925 = vmatpush1.bf16.msra.mxu0 0
      %926 = vmatprep.subr.bf16.mxu0 0
      %927 = vmatpush1.bf16.msra.mxu0 %v910
      %928 = vmatprep.subr.bf16.mxu0 0
      %929 = vmatpush2.bf16.msra.mxu0 0
      %930 = vmatprep.subr.bf16.mxu0 0
      %931 = vmatpush2.bf16.msra.mxu0 0
      %932 = vmatprep.subr.bf16.mxu0 0
      %933 = vmatpush2.bf16.msra.mxu0 0
      %934 = vmatprep.subr.bf16.mxu0 0
      %935 = vmatpush2.bf16.msra.mxu0 0
      %936 = vmatprep.subr.bf16.mxu0 0
      %937 = vmatpush2.bf16.msra.mxu0 0
      %938 = vmatprep.subr.bf16.mxu0 0
      %939 = vmatpush2.bf16.msra.mxu0 0
      %940 = vmatprep.subr.bf16.mxu0 0
      %941 = vmatpush2.bf16.msra.mxu0 0
      %942 = vmatprep.subr.bf16.mxu0 0
      %943 = vmatpush2.bf16.msra.mxu0 0
      %944 = vmatprep.mubr.bf16.mxu0 0
      %945 = vmatmul.mubr.bf16.gmra.mxu0 %v907
      %v946 = vpop.f32.mrf.mxu0
      %v947 = vadd.f32 0.0, %v946
      %v948 = vpop.f32.mrf.mxu0
      %v949 = vpop.f32.mrf.mxu0
      %v950 = vpop.f32.mrf.mxu0
      %951 = vdwg.mxu0
      %952 = vrot.lane.b32.xlu0 %v612, 32
      %v953 = vpop.permute.xlu0 %952
      %954 = vrot.lane.b32.xlu0 %v613, 32
      %v955 = vpop.permute.xlu0 %954
      %v957 = vsel %vm621, %v953, 0
      %v960 = vsel %vm621, %v955, 0
      %962 = vmatprep.subr.bf16.mxu0 0
      %963 = vmatpush1.bf16.xpose.msra.mxu0 0
      %964 = vmatprep.subr.bf16.mxu0 0
      %965 = vmatpush1.bf16.xpose.msra.mxu0 0
      %966 = vmatprep.subr.bf16.mxu0 0
      %967 = vmatpush1.bf16.xpose.msra.mxu0 0
      %968 = vmatprep.subr.bf16.mxu0 0
      %969 = vmatpush1.bf16.xpose.msra.mxu0 0
      %970 = vmatprep.subr.bf16.mxu0 0
      %971 = vmatpush1.bf16.xpose.msra.mxu0 0
      %972 = vmatprep.subr.bf16.mxu0 0
      %973 = vmatpush1.bf16.xpose.msra.mxu0 0
      %974 = vmatprep.subr.bf16.mxu0 0
      %975 = vmatpush1.bf16.xpose.msra.mxu0 0
      %976 = vmatprep.subr.bf16.mxu0 0
      %977 = vmatpush1.bf16.xpose.msra.mxu0 %v960
      %978 = vmatprep.subr.bf16.mxu0 0
      %979 = vmatpush2.bf16.xpose.msra.mxu0 0
      %980 = vmatprep.subr.bf16.mxu0 0
      %981 = vmatpush2.bf16.xpose.msra.mxu0 0
      %982 = vmatprep.subr.bf16.mxu0 0
      %983 = vmatpush2.bf16.xpose.msra.mxu0 0
      %984 = vmatprep.subr.bf16.mxu0 0
      %985 = vmatpush2.bf16.xpose.msra.mxu0 0
      %986 = vmatprep.subr.bf16.mxu0 0
      %987 = vmatpush2.bf16.xpose.msra.mxu0 0
      %988 = vmatprep.subr.bf16.mxu0 0
      %989 = vmatpush2.bf16.xpose.msra.mxu0 0
      %990 = vmatprep.subr.bf16.mxu0 0
      %991 = vmatpush2.bf16.xpose.msra.mxu0 0
      %992 = vmatprep.subr.bf16.mxu0 0
      %993 = vmatpush2.bf16.xpose.msra.mxu0 0
      %994 = vmatprep.mubr.bf16.mxu0 0
      %995 = vmatmul.mubr.bf16.gmra.mxu0 %v957
      %v996 = vpop.f32.mrf.mxu0
      %v997 = vadd.f32 %v619, %v996
      %v998 = vpop.f32.mrf.mxu0
      %v999 = vpop.f32.mrf.mxu0
      %v1000 = vpop.f32.mrf.mxu0
      %1001 = vdwg.mxu0
      %v1002 = vsel %vm668, %v997, -inf
      %1003 = vmax.xlane.f32.xlu0 %v1002
      %v1004 = vpop.xlane.xlu0 %1003
      %v1005 = vsub.f32 %v997, %v1004
      %v1006 = vmul.f32 %v1005, 1.442695
      %v1007 = vpow.pop %v1006
      %v1008 = vsel %vm668, %v1007, 0.0
      %1009 = vadd.xlane.f32.xlu0 %v1008
      %v1010 = vpop.xlane.xlu0 %1009
      %v1011 = vrcp.pop %v1010
      %v1012 = vmul.f32 %v1007, %v1011
      %v1013 = vpack.c.bf16 %v1012, %v1012
      %1014 = vrot.lane.b32.xlu0 %v614, 32
      %v1015 = vpop.permute.xlu0 %1014
      %v1017 = vsel %vm681, %v1013, 0
      %v1020 = vsel %vm685, %v1015, 0
      %1022 = vmatprep.subr.bf16.mxu0 0
      %1023 = vmatpush1.bf16.msra.mxu0 0
      %1024 = vmatprep.subr.bf16.mxu0 0
      %1025 = vmatpush1.bf16.msra.mxu0 0
      %1026 = vmatprep.subr.bf16.mxu0 0
      %1027 = vmatpush1.bf16.msra.mxu0 0
      %1028 = vmatprep.subr.bf16.mxu0 0
      %1029 = vmatpush1.bf16.msra.mxu0 0
      %1030 = vmatprep.subr.bf16.mxu0 0
      %1031 = vmatpush1.bf16.msra.mxu0 0
      %1032 = vmatprep.subr.bf16.mxu0 0
      %1033 = vmatpush1.bf16.msra.mxu0 0
      %1034 = vmatprep.subr.bf16.mxu0 0
      %1035 = vmatpush1.bf16.msra.mxu0 0
      %1036 = vmatprep.subr.bf16.mxu0 0
      %1037 = vmatpush1.bf16.msra.mxu0 %v1020
      %1038 = vmatprep.subr.bf16.mxu0 0
      %1039 = vmatpush2.bf16.msra.mxu0 0
      %1040 = vmatprep.subr.bf16.mxu0 0
      %1041 = vmatpush2.bf16.msra.mxu0 0
      %1042 = vmatprep.subr.bf16.mxu0 0
      %1043 = vmatpush2.bf16.msra.mxu0 0
      %1044 = vmatprep.subr.bf16.mxu0 0
      %1045 = vmatpush2.bf16.msra.mxu0 0
      %1046 = vmatprep.subr.bf16.mxu0 0
      %1047 = vmatpush2.bf16.msra.mxu0 0
      %1048 = vmatprep.subr.bf16.mxu0 0
      %1049 = vmatpush2.bf16.msra.mxu0 0
      %1050 = vmatprep.subr.bf16.mxu0 0
      %1051 = vmatpush2.bf16.msra.mxu0 0
      %1052 = vmatprep.subr.bf16.mxu0 0
      %1053 = vmatpush2.bf16.msra.mxu0 0
      %1054 = vmatprep.mubr.bf16.mxu0 0
      %1055 = vmatmul.mubr.bf16.gmra.mxu0 %v1017
      %v1056 = vpop.f32.mrf.mxu0
      %v1057 = vadd.f32 0.0, %v1056
      %v1058 = vpop.f32.mrf.mxu0
      %v1059 = vpop.f32.mrf.mxu0
      %v1060 = vpop.f32.mrf.mxu0
      %1061 = vdwg.mxu0
      %1063 = vrot.lane.b32.xlu0 %v837, 32
      %v1064 = vpop.permute.xlu0 %1063
      %1067 = vrot.lane.b32.xlu0 %v947, 64
      %v1068 = vpop.permute.xlu0 %1067
      %1071 = vrot.lane.b32.xlu0 %v1057, 96
      %v1072 = vpop.permute.xlu0 %1071
      %v1074 = vsel %vm621, %v724, %v1064
      %vm1075 = vcmask 523264
      %v1076 = vsel %vm1075, %v1074, %v1068
      %vm1077 = vcmask 785408
      %v1078 = vsel %vm1077, %v1076, %v1072
      %v1079 = vpack.c.bf16 %v1078, %v1078
      %v1080 = vld [vmem:[%s6] sm:$0xf]
      %v1081 = vld [vmem:[%s6 + $0x4] sm:$0xf]
      %v1082 = vld [vmem:[%s6 + $0x8] sm:$0xf]
      %v1083 = vld [vmem:[%s6 + $0xc] sm:$0xf]
      %v1084 = vld [vmem:[%s6 + $0x10] sm:$0xf]
      %v1085 = vld [vmem:[%s6 + $0x14] sm:$0xf]
      %v1086 = vld [vmem:[%s6 + $0x18] sm:$0xf]
      %v1087 = vld [vmem:[%s6 + $0x1c] sm:$0xf]
      %v1088 = vld [vmem:[%s6 + $0x20] sm:$0xf]
      %v1089 = vld [vmem:[%s6 + $0x24] sm:$0xf]
      %v1090 = vld [vmem:[%s6 + $0x28] sm:$0xf]
      %v1091 = vld [vmem:[%s6 + $0x2c] sm:$0xf]
      %v1092 = vld [vmem:[%s6 + $0x30] sm:$0xf]
      %v1093 = vld [vmem:[%s6 + $0x34] sm:$0xf]
      %v1094 = vld [vmem:[%s6 + $0x38] sm:$0xf]
      %v1095 = vld [vmem:[%s6 + $0x3c] sm:$0xf]
      %v1112 = vunpack.c.l.b16 %v1080
      %v1113 = vunpack.c.l.b16 %v1081
      %v1114 = vunpack.c.l.b16 %v1082
      %v1115 = vunpack.c.l.b16 %v1083
      %v1116 = vunpack.c.l.b16 %v1084
      %v1117 = vunpack.c.l.b16 %v1085
      %v1118 = vunpack.c.l.b16 %v1086
      %v1119 = vunpack.c.l.b16 %v1087
      %v1120 = vunpack.c.l.b16 %v1088
      %v1121 = vunpack.c.l.b16 %v1089
      %v1122 = vunpack.c.l.b16 %v1090
      %v1123 = vunpack.c.l.b16 %v1091
      %v1124 = vunpack.c.l.b16 %v1092
      %v1125 = vunpack.c.l.b16 %v1093
      %v1126 = vunpack.c.l.b16 %v1094
      %v1127 = vunpack.c.l.b16 %v1095
      %v1128 = vpack.c.b16 %v1113, %v1112
      %v1129 = vpack.c.b16 %v1115, %v1114
      %v1130 = vpack.c.b16 %v1117, %v1116
      %v1131 = vpack.c.b16 %v1119, %v1118
      %v1132 = vpack.c.b16 %v1121, %v1120
      %v1133 = vpack.c.b16 %v1123, %v1122
      %v1134 = vpack.c.b16 %v1125, %v1124
      %v1135 = vpack.c.b16 %v1127, %v1126
      %1144 = vmatprep.subr.bf16.mxu0 0
      %1145 = vmatpush1.bf16.msra.mxu0 %v1135
      %1146 = vmatprep.subr.bf16.mxu0 0
      %1147 = vmatpush1.bf16.msra.mxu0 %v1134
      %1148 = vmatprep.subr.bf16.mxu0 0
      %1149 = vmatpush1.bf16.msra.mxu0 %v1133
      %1150 = vmatprep.subr.bf16.mxu0 0
      %1151 = vmatpush1.bf16.msra.mxu0 %v1132
      %1152 = vmatprep.subr.bf16.mxu0 0
      %1153 = vmatpush1.bf16.msra.mxu0 %v1131
      %1154 = vmatprep.subr.bf16.mxu0 0
      %1155 = vmatpush1.bf16.msra.mxu0 %v1130
      %1156 = vmatprep.subr.bf16.mxu0 0
      %1157 = vmatpush1.bf16.msra.mxu0 %v1129
      %1158 = vmatprep.subr.bf16.mxu0 0
      %1159 = vmatpush1.bf16.msra.mxu0 %v1128
      %1160 = vmatprep.subr.bf16.mxu0 0
      %1161 = vmatpush2.bf16.msra.mxu0 0
      %1162 = vmatprep.subr.bf16.mxu0 0
      %1163 = vmatpush2.bf16.msra.mxu0 0
      %1164 = vmatprep.subr.bf16.mxu0 0
      %1165 = vmatpush2.bf16.msra.mxu0 0
      %1166 = vmatprep.subr.bf16.mxu0 0
      %1167 = vmatpush2.bf16.msra.mxu0 0
      %1168 = vmatprep.subr.bf16.mxu0 0
      %1169 = vmatpush2.bf16.msra.mxu0 0
      %1170 = vmatprep.subr.bf16.mxu0 0
      %1171 = vmatpush2.bf16.msra.mxu0 0
      %1172 = vmatprep.subr.bf16.mxu0 0
      %1173 = vmatpush2.bf16.msra.mxu0 0
      %1174 = vmatprep.subr.bf16.mxu0 0
      %1175 = vmatpush2.bf16.msra.mxu0 0
      %1176 = vmatprep.mubr.bf16.mxu0 0
      %1177 = vmatmul.mubr.bf16.gmra.mxu0 %v1079
      %v1178 = vpop.f32.mrf.mxu0
      %v1179 = vadd.f32 0.0, %v1178
      %v1180 = vpop.f32.mrf.mxu0
      %v1181 = vpop.f32.mrf.mxu0
      %v1182 = vpop.f32.mrf.mxu0
      %1183 = vdwg.mxu0
      %v1184 = vadd.f32 %v333, %v1179
      %1185 = vst [vmem:[%s331] sm:$0x7] %v1184
      %p1186 = scmp.lt.s32.totalorder %s19, 1
      %s1187 = scalar_select %p1186, %s19, 1
      %s1188 = smul.addr %s1187, 4
      %s1189 = scalar_lea.vmem %s8, %s1188
      // Predicated region
      $region53: #{t5_model_loss.9} parent=51 // pred_check
        %p1190 = pneg %p220
      $region54: #{t5_model_loss.9} parent=51 // pred_check_branch
        %1192 = sbr.rel (%p1190) target = $region56
      $region55: #{t5_model_loss.9} parent=51 // pred_region
        _
      $region56: #{t5_model_loss.9} parent=51 // pred_fallthru
        _
    $region52: #{t5_model_loss.9} parent=5 // pred_fallthru
      _
    %p1193 = scmp.le.s32.totalorder 2, %s14
    // Predicated region
    $region57: #{t5_model_loss.9} parent=5 // pred_check
      %p1194 = pneg %p1193
    $region58: #{t5_model_loss.9} parent=5 // pred_check_branch
      %1196 = sbr.rel (%p1194) target = $region60
    $region59: #{t5_model_loss.9} parent=5 // pred_region
      %s1197 = ssub.s32 %s14, 2
      // Predicated region
      $region61: #{t5_model_loss.9} parent=59 // pred_check
        %p1198 = pneg %p226
      $region62: #{t5_model_loss.9} parent=59 // pred_check_branch
        %1200 = sbr.rel (%p1198) target = $region64
      $region63: #{t5_model_loss.9} parent=59 // pred_region
        %p1201 = scmp.lt.s32.totalorder %s20, 1
        %s1202 = scalar_select %p1201, %s20, 1
        %s1203 = smul.addr %s1202, 4
        %s1204 = scalar_lea.vmem %s8, %s1203
      $region64: #{t5_model_loss.9} parent=59 // pred_fallthru
        _
    $region60: #{t5_model_loss.9} parent=5 // pred_fallthru
      _
  $region6: #{t5_model_loss.9} parent=0 // loop_footer
    %s18 = sadd.s32 1, %s14
  $region7: #{t5_model_loss.9} parent=0 // loop_footer_branch
    %13 = sbr.rel target = $region3
  $region8: #{t5_model_loss.9} parent=0 // loop_exit
    _

// kernel: t5_model_loss.11
$region0: #{t5_model_loss.11}
  #allocation0 [shape = 'u32[]', space=smem, size = 0x4, offset = 0x4, fixed_abs, tag = 'smem constant byte address 0x4 - core index']
  #allocation1 [shape = 'u32[144,128]{1,0:T(1,128)}', space=vmem, size = 0x12000, scoped, tag = 'internal scratch']
  %s0 = inlined_call_operand.vmem [shape: f32[6,128], index: 0, kind: input, shape index: {}]
  %s1 = inlined_call_operand.vmem [shape: f32[1,128], index: 1, kind: input, shape index: {}]
  %s2 = inlined_call_operand.vmem [shape: bf16[128,128], index: 2, kind: input, shape index: {}]
  %s3 = inlined_call_operand.vmem [shape: s32[6,1], index: 3, kind: input, shape index: {}]
  %s4 = inlined_call_operand.hbm [shape: f32[1,1], index: 4, kind: output, shape index: {0}]
  %s5 = inlined_call_operand.hbm [shape: f32[1,1], index: 5, kind: output, shape index: {1}]
  %6 = xla_tuple %s4, %s5
  %s7 = sld [smem:[#allocation0]]
  $region34: #{t5_model_loss.11} parent=0
    _
  %s9 = ssub.s32 1, %s7
  %s10 = scalar_select 0, %s9, %s7
  $region1: #{t5_model_loss.11} parent=0
    #allocation2 [shape = 'u8[512]{0}', space=vmem, size = 0x400, scoped, tag = 'output window, operand 0, single buffered']
    #allocation3 [shape = 's32[1]{0}', space=sflag, size = 0x4, scoped, tag = 'scoped memory for t5_model_loss.11']
    #allocation4 [shape = 'u8[512]{0}', space=vmem, size = 0x400, scoped, tag = 'output window, operand 1, single buffered']
    #allocation5 [shape = 's32[1]{0}', space=sflag, size = 0x4, scoped, tag = 'scoped memory for t5_model_loss.11']
    %11 = vsyncpa [#allocation3], 0
    %12 = vsyncpa [#allocation5], 0
    // Predicated region
    $region2: #{t5_model_loss.11} parent=1 // pred_check
      _
    $region3: #{t5_model_loss.11} parent=1 // pred_check_branch
      %14 = sbr.rel (0) target = $region5
    $region4: #{t5_model_loss.11} parent=1 // pred_region
      _
    $region5: #{t5_model_loss.11} parent=1 // pred_fallthru
      _
    // Predicated region
    $region6: #{t5_model_loss.11} parent=1 // pred_check
      _
    $region7: #{t5_model_loss.11} parent=1 // pred_check_branch
      %16 = sbr.rel (0) target = $region9
    $region8: #{t5_model_loss.11} parent=1 // pred_region
      _
    $region9: #{t5_model_loss.11} parent=1 // pred_fallthru
      _
    // Predicated region
    $region10: #{t5_model_loss.11} parent=1 // pred_check
      _
    $region11: #{t5_model_loss.11} parent=1 // pred_check_branch
      %18 = sbr.rel (0) target = $region13
    $region12: #{t5_model_loss.11} parent=1 // pred_region
      _
    $region13: #{t5_model_loss.11} parent=1 // pred_fallthru
      _
    // Predicated region
    $region14: #{t5_model_loss.11} parent=1 // pred_check
      _
    $region15: #{t5_model_loss.11} parent=1 // pred_check_branch
      %20 = sbr.rel (0) target = $region17
    $region16: #{t5_model_loss.11} parent=1 // pred_region
      _
    $region17: #{t5_model_loss.11} parent=1 // pred_fallthru
      _
    %v22 = vld [vmem:[%s0] sm:$0x3f]
    %v23 = vld [vmem:[%s1] sm:$0x1]
    %v24 = vmul.f32 %v22, %v22
    %vm25 = vcmask 1045504
    %v26 = vsel %vm25, %v24, 0.0
    %27 = vadd.xlane.f32.xlu0 %v26
    %v28 = vpop.xlane.xlu0 %27
    %v29 = vrcp.pop 128.0
    %v30 = vmul.f32 %v28, %v29
    %v31 = vadd.f32 %v30, 1e-06
    %v32 = vrsqrt.pop %v31
    %v33 = vmul.f32 %v22, %v32
    %v35 = vlaneseq
    %v36 = vshrl.u32 %v35, 7
    %v37 = vsub.s32 0, %v36
    %v38 = vrot.slane %v23, %v37
    %v40 = vmul.f32 %v33, %v38
    %v41 = vpack.c.bf16 %v40, %v40
    %v42 = vld [vmem:[%s2] sm:$0xf]
    %v43 = vld [vmem:[%s2 + $0x4] sm:$0xf]
    %v44 = vld [vmem:[%s2 + $0x8] sm:$0xf]
    %v45 = vld [vmem:[%s2 + $0xc] sm:$0xf]
    %v46 = vld [vmem:[%s2 + $0x10] sm:$0xf]
    %v47 = vld [vmem:[%s2 + $0x14] sm:$0xf]
    %v48 = vld [vmem:[%s2 + $0x18] sm:$0xf]
    %v49 = vld [vmem:[%s2 + $0x1c] sm:$0xf]
    %v50 = vld [vmem:[%s2 + $0x20] sm:$0xf]
    %v51 = vld [vmem:[%s2 + $0x24] sm:$0xf]
    %v52 = vld [vmem:[%s2 + $0x28] sm:$0xf]
    %v53 = vld [vmem:[%s2 + $0x2c] sm:$0xf]
    %v54 = vld [vmem:[%s2 + $0x30] sm:$0xf]
    %v55 = vld [vmem:[%s2 + $0x34] sm:$0xf]
    %v56 = vld [vmem:[%s2 + $0x38] sm:$0xf]
    %v57 = vld [vmem:[%s2 + $0x3c] sm:$0xf]
    %v74 = vunpack.c.l.b16 %v42
    %v75 = vunpack.c.l.b16 %v43
    %v76 = vunpack.c.l.b16 %v44
    %v77 = vunpack.c.l.b16 %v45
    %v78 = vunpack.c.l.b16 %v46
    %v79 = vunpack.c.l.b16 %v47
    %v80 = vunpack.c.l.b16 %v48
    %v81 = vunpack.c.l.b16 %v49
    %v82 = vunpack.c.l.b16 %v50
    %v83 = vunpack.c.l.b16 %v51
    %v84 = vunpack.c.l.b16 %v52
    %v85 = vunpack.c.l.b16 %v53
    %v86 = vunpack.c.l.b16 %v54
    %v87 = vunpack.c.l.b16 %v55
    %v88 = vunpack.c.l.b16 %v56
    %v89 = vunpack.c.l.b16 %v57
    %v90 = vpack.c.b16 %v75, %v74
    %v91 = vpack.c.b16 %v77, %v76
    %v92 = vpack.c.b16 %v79, %v78
    %v93 = vpack.c.b16 %v81, %v80
    %v94 = vpack.c.b16 %v83, %v82
    %v95 = vpack.c.b16 %v85, %v84
    %v96 = vpack.c.b16 %v87, %v86
    %v97 = vpack.c.b16 %v89, %v88
    %106 = vmatprep.subr.bf16.mxu0 0
    %107 = vmatpush1.bf16.msra.mxu0 %v97
    %108 = vmatprep.subr.bf16.mxu0 0
    %109 = vmatpush1.bf16.msra.mxu0 %v96
    %110 = vmatprep.subr.bf16.mxu0 0
    %111 = vmatpush1.bf16.msra.mxu0 %v95
    %112 = vmatprep.subr.bf16.mxu0 0
    %113 = vmatpush1.bf16.msra.mxu0 %v94
    %114 = vmatprep.subr.bf16.mxu0 0
    %115 = vmatpush1.bf16.msra.mxu0 %v93
    %116 = vmatprep.subr.bf16.mxu0 0
    %117 = vmatpush1.bf16.msra.mxu0 %v92
    %118 = vmatprep.subr.bf16.mxu0 0
    %119 = vmatpush1.bf16.msra.mxu0 %v91
    %120 = vmatprep.subr.bf16.mxu0 0
    %121 = vmatpush1.bf16.msra.mxu0 %v90
    %122 = vmatprep.subr.bf16.mxu0 0
    %123 = vmatpush2.bf16.msra.mxu0 0
    %124 = vmatprep.subr.bf16.mxu0 0
    %125 = vmatpush2.bf16.msra.mxu0 0
    %126 = vmatprep.subr.bf16.mxu0 0
    %127 = vmatpush2.bf16.msra.mxu0 0
    %128 = vmatprep.subr.bf16.mxu0 0
    %129 = vmatpush2.bf16.msra.mxu0 0
    %130 = vmatprep.subr.bf16.mxu0 0
    %131 = vmatpush2.bf16.msra.mxu0 0
    %132 = vmatprep.subr.bf16.mxu0 0
    %133 = vmatpush2.bf16.msra.mxu0 0
    %134 = vmatprep.subr.bf16.mxu0 0
    %135 = vmatpush2.bf16.msra.mxu0 0
    %136 = vmatprep.subr.bf16.mxu0 0
    %137 = vmatpush2.bf16.msra.mxu0 0
    %138 = vmatprep.mubr.bf16.mxu0 0
    %139 = vmatmul.mubr.bf16.gmra.mxu0 %v41
    %v140 = vpop.f32.mrf.mxu0
    %v141 = vadd.f32 0.0, %v140
    %v142 = vpop.f32.mrf.mxu0
    %v143 = vpop.f32.mrf.mxu0
    %v144 = vpop.f32.mrf.mxu0
    %145 = vdwg.mxu0
    %v146 = vld [vmem:[%s3] sm:$0x3f]
    %v147 = vsel %vm25, %v141, -inf
    %148 = vmax.xlane.f32.xlu0 %v147
    %v149 = vpop.xlane.xlu0 %148
    %v150 = vsub.f32 %v141, %v149
    %v151 = vmul.f32 %v150, 1.442695
    %v152 = vpow.pop %v151
    %v153 = vsel %vm25, %v152, 0.0
    %154 = vadd.xlane.f32.xlu0 %v153
    %v155 = vpop.xlane.xlu0 %154
    %v156 = vlog2.pop %v155
    %v157 = vmul.f32 %v156, 0.6931472
    %v158 = vadd.f32 %v157, %v149
    %v159 = vlaneseq
    %v160 = vand.u32 %v159, 127
    %161 = vset.pattern.permute.xlu0 0
    %162 = vperm.xlu0 %161, %v146
    %v163 = vpop.permute.xlu0 %162
    %vm164 = vcmp.eq.s32.totalorder %v160, %v163
    %v165 = vsel %vm164, %v141, 0.0
    %v166 = vsel %vm25, %v165, 0.0
    %167 = vadd.xlane.f32.xlu0 %v166
    %v168 = vpop.xlane.xlu0 %167
    %vm169 = vcmp.ne.s32.totalorder %v146, 4294967196
    %v170 = vsel %vm169, 1, 0
    %v171 = vcvt.s32.f32 %v170
    %v172 = vsub.f32 %v158, %v168
    %v173 = vmul.f32 %v172, %v171
    %vm174 = vcmask 5120
    %v175 = vsel %vm174, %v173, 0.0
    %v176 = vrot.slane %v175, 4
    %v177 = vadd.f32 %v175, %v176
    %v178 = vrot.slane %v177, 2
    %v179 = vadd.f32 %v177, %v178
    %v180 = vrot.slane %v179, 1
    %v181 = vadd.f32 %v179, %v180
    %vm182 = vcmask 0
    %183 = vst.msk [vmem:[#allocation2] sm:$0x1] %vm182, %v181
    %v184 = vsel %vm174, %v171, 0.0
    %v185 = vrot.slane %v184, 4
    %v186 = vadd.f32 %v184, %v185
    %v187 = vrot.slane %v186, 2
    %v188 = vadd.f32 %v186, %v187
    %v189 = vrot.slane %v188, 1
    %v190 = vadd.f32 %v188, %v189
    %191 = vst.msk [vmem:[#allocation4] sm:$0x1] %vm182, %v190
    // Predicated region
    $region18: #{t5_model_loss.11} parent=1 // pred_check
      _
    $region19: #{t5_model_loss.11} parent=1 // pred_check_branch
      %193 = sbr.rel (0) target = $region21
    $region20: #{t5_model_loss.11} parent=1 // pred_region
      %s195 = ssub.s32 16, 16
      %196 = vsyncadd [#allocation3], %s195
      %s198 = sshll.u32 [#allocation2], 4
      %s199 = int_to_ptr.vmem [resolvable:$true] %s198
      %201 = dma.vmem_to_hbm [thread:$0]  %s199, 16, %s4, [#allocation3]
    $region21: #{t5_model_loss.11} parent=1 // pred_fallthru
      _
    // Predicated region
    $region22: #{t5_model_loss.11} parent=1 // pred_check
      _
    $region23: #{t5_model_loss.11} parent=1 // pred_check_branch
      %203 = sbr.rel (0) target = $region25
    $region24: #{t5_model_loss.11} parent=1 // pred_region
      %s205 = ssub.s32 16, 16
      %206 = vsyncadd [#allocation5], %s205
      %s208 = sshll.u32 [#allocation4], 4
      %s209 = int_to_ptr.vmem [resolvable:$true] %s208
      %211 = dma.vmem_to_hbm [thread:$0]  %s209, 16, %s5, [#allocation5]
    $region25: #{t5_model_loss.11} parent=1 // pred_fallthru
      _
    // Predicated region
    $region26: #{t5_model_loss.11} parent=1 // pred_check
      _
    $region27: #{t5_model_loss.11} parent=1 // pred_check_branch
      %213 = sbr.rel (0) target = $region29
    $region28: #{t5_model_loss.11} parent=1 // pred_region
      %214 = dma.done [#allocation3], 16
    $region29: #{t5_model_loss.11} parent=1 // pred_fallthru
      _
    // Predicated region
    $region30: #{t5_model_loss.11} parent=1 // pred_check
      _
    $region31: #{t5_model_loss.11} parent=1 // pred_check_branch
      %216 = sbr.rel (0) target = $region33
    $region32: #{t5_model_loss.11} parent=1 // pred_region
      %217 = dma.done [#allocation5], 16
    $region33: #{t5_model_loss.11} parent=1 // pred_fallthru
      _
    %218 = vsyncpa [#allocation3], 1
    %219 = vsyncpa [#allocation5], 1

// kernel: t5_model_loss.10
$region0: #{t5_model_loss.10}
  #allocation0 [shape = 'u32[]', space=smem, size = 0x4, offset = 0x4, fixed_abs, tag = 'smem constant byte address 0x4 - core index']
  #allocation1 [shape = 'u32[144,128]{1,0:T(1,128)}', space=vmem, size = 0x12000, scoped, tag = 'internal scratch']
  %s0 = inlined_call_operand.vmem [shape: f32[6,128], index: 0, kind: input, shape index: {}]
  %s1 = inlined_call_operand.vmem [shape: f32[1,128], index: 1, kind: input, shape index: {}]
  %s2 = inlined_call_operand.vmem [shape: bf16[128,512], index: 2, kind: input, shape index: {}]
  %s3 = inlined_call_operand.vmem [shape: bf16[256,128], index: 3, kind: input, shape index: {}]
  %s4 = inlined_call_operand.vmem [shape: f32[6,128], index: 4, kind: output, shape index: {}]
  %s5 = sld [smem:[#allocation0]]
  $region26: #{t5_model_loss.10} parent=0
    _
  %s7 = ssub.s32 1, %s5
  %s8 = scalar_select 0, %s7, %s5
  // Predicated region
  $region2: #{t5_model_loss.10} parent=0 // pred_check
    _
  $region3: #{t5_model_loss.10} parent=0 // pred_check_branch
    %10 = sbr.rel (0) target = $region5
  $region4: #{t5_model_loss.10} parent=0 // pred_region
    _
  $region5: #{t5_model_loss.10} parent=0 // pred_fallthru
    _
  // Predicated region
  $region6: #{t5_model_loss.10} parent=0 // pred_check
    _
  $region7: #{t5_model_loss.10} parent=0 // pred_check_branch
    %12 = sbr.rel (0) target = $region9
  $region8: #{t5_model_loss.10} parent=0 // pred_region
    _
  $region9: #{t5_model_loss.10} parent=0 // pred_fallthru
    _
  // Predicated region
  $region10: #{t5_model_loss.10} parent=0 // pred_check
    _
  $region11: #{t5_model_loss.10} parent=0 // pred_check_branch
    %14 = sbr.rel (0) target = $region13
  $region12: #{t5_model_loss.10} parent=0 // pred_region
    _
  $region13: #{t5_model_loss.10} parent=0 // pred_fallthru
    _
  // Predicated region
  $region14: #{t5_model_loss.10} parent=0 // pred_check
    _
  $region15: #{t5_model_loss.10} parent=0 // pred_check_branch
    %16 = sbr.rel (0) target = $region17
  $region16: #{t5_model_loss.10} parent=0 // pred_region
    _
  $region17: #{t5_model_loss.10} parent=0 // pred_fallthru
    _
  %v18 = vld [vmem:[%s0] sm:$0x3f]
  %v19 = vld [vmem:[%s1] sm:$0x1]
  %v20 = vmul.f32 %v18, %v18
  %vm21 = vcmask 1045504
  %v22 = vsel %vm21, %v20, 0.0
  %23 = vadd.xlane.f32.xlu0 %v22
  %v24 = vpop.xlane.xlu0 %23
  %v25 = vrcp.pop 128.0
  %v26 = vmul.f32 %v24, %v25
  %v27 = vadd.f32 %v26, 1e-06
  %v28 = vrsqrt.pop %v27
  %v29 = vmul.f32 %v18, %v28
  %v31 = vlaneseq
  %v32 = vshrl.u32 %v31, 7
  %v33 = vsub.s32 0, %v32
  %v34 = vrot.slane %v19, %v33
  %v36 = vmul.f32 %v29, %v34
  %v37 = vpack.c.bf16 %v36, %v36
  %v38 = vld [vmem:[%s2] sm:$0xff]
  %v39 = vld [vmem:[%s2 + $0x8] sm:$0xff]
  %v40 = vld [vmem:[%s2 + $0x10] sm:$0xff]
  %v41 = vld [vmem:[%s2 + $0x18] sm:$0xff]
  %v42 = vld [vmem:[%s2 + $0x20] sm:$0xff]
  %v43 = vld [vmem:[%s2 + $0x28] sm:$0xff]
  %v44 = vld [vmem:[%s2 + $0x30] sm:$0xff]
  %v45 = vld [vmem:[%s2 + $0x38] sm:$0xff]
  %v46 = vld [vmem:[%s2 + $0x40] sm:$0xff]
  %v47 = vld [vmem:[%s2 + $0x48] sm:$0xff]
  %v48 = vld [vmem:[%s2 + $0x50] sm:$0xff]
  %v49 = vld [vmem:[%s2 + $0x58] sm:$0xff]
  %v50 = vld [vmem:[%s2 + $0x60] sm:$0xff]
  %v51 = vld [vmem:[%s2 + $0x68] sm:$0xff]
  %v52 = vld [vmem:[%s2 + $0x70] sm:$0xff]
  %v53 = vld [vmem:[%s2 + $0x78] sm:$0xff]
  %v54 = vld [vmem:[%s2 + $0x80] sm:$0xff]
  %v55 = vld [vmem:[%s2 + $0x88] sm:$0xff]
  %v56 = vld [vmem:[%s2 + $0x90] sm:$0xff]
  %v57 = vld [vmem:[%s2 + $0x98] sm:$0xff]
  %v58 = vld [vmem:[%s2 + $0xa0] sm:$0xff]
  %v59 = vld [vmem:[%s2 + $0xa8] sm:$0xff]
  %v60 = vld [vmem:[%s2 + $0xb0] sm:$0xff]
  %v61 = vld [vmem:[%s2 + $0xb8] sm:$0xff]
  %v62 = vld [vmem:[%s2 + $0xc0] sm:$0xff]
  %v63 = vld [vmem:[%s2 + $0xc8] sm:$0xff]
  %v64 = vld [vmem:[%s2 + $0xd0] sm:$0xff]
  %v65 = vld [vmem:[%s2 + $0xd8] sm:$0xff]
  %v66 = vld [vmem:[%s2 + $0xe0] sm:$0xff]
  %v67 = vld [vmem:[%s2 + $0xe8] sm:$0xff]
  %v68 = vld [vmem:[%s2 + $0xf0] sm:$0xff]
  %v69 = vld [vmem:[%s2 + $0xf8] sm:$0xff]
  %v102 = vunpack.c.l.b16 %v38
  %v103 = vunpack.c.h.b16 %v38
  %v104 = vunpack.c.l.b16 %v39
  %v105 = vunpack.c.h.b16 %v39
  %v106 = vunpack.c.l.b16 %v40
  %v107 = vunpack.c.h.b16 %v40
  %v108 = vunpack.c.l.b16 %v41
  %v109 = vunpack.c.h.b16 %v41
  %v110 = vunpack.c.l.b16 %v42
  %v111 = vunpack.c.h.b16 %v42
  %v112 = vunpack.c.l.b16 %v43
  %v113 = vunpack.c.h.b16 %v43
  %v114 = vunpack.c.l.b16 %v44
  %v115 = vunpack.c.h.b16 %v44
  %v116 = vunpack.c.l.b16 %v45
  %v117 = vunpack.c.h.b16 %v45
  %v118 = vunpack.c.l.b16 %v46
  %v119 = vunpack.c.h.b16 %v46
  %v120 = vunpack.c.l.b16 %v47
  %v121 = vunpack.c.h.b16 %v47
  %v122 = vunpack.c.l.b16 %v48
  %v123 = vunpack.c.h.b16 %v48
  %v124 = vunpack.c.l.b16 %v49
  %v125 = vunpack.c.h.b16 %v49
  %v126 = vunpack.c.l.b16 %v50
  %v127 = vunpack.c.h.b16 %v50
  %v128 = vunpack.c.l.b16 %v51
  %v129 = vunpack.c.h.b16 %v51
  %v130 = vunpack.c.l.b16 %v52
  %v131 = vunpack.c.h.b16 %v52
  %v132 = vunpack.c.l.b16 %v53
  %v133 = vunpack.c.h.b16 %v53
  %v134 = vunpack.c.l.b16 %v54
  %v135 = vunpack.c.h.b16 %v54
  %v136 = vunpack.c.l.b16 %v55
  %v137 = vunpack.c.h.b16 %v55
  %v138 = vunpack.c.l.b16 %v56
  %v139 = vunpack.c.h.b16 %v56
  %v140 = vunpack.c.l.b16 %v57
  %v141 = vunpack.c.h.b16 %v57
  %v142 = vunpack.c.l.b16 %v58
  %v143 = vunpack.c.h.b16 %v58
  %v144 = vunpack.c.l.b16 %v59
  %v145 = vunpack.c.h.b16 %v59
  %v146 = vunpack.c.l.b16 %v60
  %v147 = vunpack.c.h.b16 %v60
  %v148 = vunpack.c.l.b16 %v61
  %v149 = vunpack.c.h.b16 %v61
  %v150 = vunpack.c.l.b16 %v62
  %v151 = vunpack.c.h.b16 %v62
  %v152 = vunpack.c.l.b16 %v63
  %v153 = vunpack.c.h.b16 %v63
  %v154 = vunpack.c.l.b16 %v64
  %v155 = vunpack.c.h.b16 %v64
  %v156 = vunpack.c.l.b16 %v65
  %v157 = vunpack.c.h.b16 %v65
  %v158 = vunpack.c.l.b16 %v66
  %v159 = vunpack.c.h.b16 %v66
  %v160 = vunpack.c.l.b16 %v67
  %v161 = vunpack.c.h.b16 %v67
  %v162 = vunpack.c.l.b16 %v68
  %v163 = vunpack.c.h.b16 %v68
  %v164 = vunpack.c.l.b16 %v69
  %v165 = vunpack.c.h.b16 %v69
  %v166 = vpack.c.b16 %v106, %v102
  %v167 = vpack.c.b16 %v107, %v103
  %v168 = vpack.c.b16 %v108, %v104
  %v169 = vpack.c.b16 %v109, %v105
  %v170 = vpack.c.b16 %v114, %v110
  %v171 = vpack.c.b16 %v115, %v111
  %v172 = vpack.c.b16 %v116, %v112
  %v173 = vpack.c.b16 %v117, %v113
  %v174 = vpack.c.b16 %v122, %v118
  %v175 = vpack.c.b16 %v123, %v119
  %v176 = vpack.c.b16 %v124, %v120
  %v177 = vpack.c.b16 %v125, %v121
  %v178 = vpack.c.b16 %v130, %v126
  %v179 = vpack.c.b16 %v131, %v127
  %v180 = vpack.c.b16 %v132, %v128
  %v181 = vpack.c.b16 %v133, %v129
  %v182 = vpack.c.b16 %v138, %v134
  %v183 = vpack.c.b16 %v139, %v135
  %v184 = vpack.c.b16 %v140, %v136
  %v185 = vpack.c.b16 %v141, %v137
  %v186 = vpack.c.b16 %v146, %v142
  %v187 = vpack.c.b16 %v147, %v143
  %v188 = vpack.c.b16 %v148, %v144
  %v189 = vpack.c.b16 %v149, %v145
  %v190 = vpack.c.b16 %v154, %v150
  %v191 = vpack.c.b16 %v155, %v151
  %v192 = vpack.c.b16 %v156, %v152
  %v193 = vpack.c.b16 %v157, %v153
  %v194 = vpack.c.b16 %v162, %v158
  %v195 = vpack.c.b16 %v163, %v159
  %v196 = vpack.c.b16 %v164, %v160
  %v197 = vpack.c.b16 %v165, %v161
  %230 = vmatprep.subr.bf16.mxu0 %v195
  %231 = vmatpush1.bf16.msra.mxu0 %v194
  %232 = vmatprep.subr.bf16.mxu0 %v191
  %233 = vmatpush1.bf16.msra.mxu0 %v190
  %234 = vmatprep.subr.bf16.mxu0 %v187
  %235 = vmatpush1.bf16.msra.mxu0 %v186
  %236 = vmatprep.subr.bf16.mxu0 %v183
  %237 = vmatpush1.bf16.msra.mxu0 %v182
  %238 = vmatprep.subr.bf16.mxu0 %v179
  %239 = vmatpush1.bf16.msra.mxu0 %v178
  %240 = vmatprep.subr.bf16.mxu0 %v175
  %241 = vmatpush1.bf16.msra.mxu0 %v174
  %242 = vmatprep.subr.bf16.mxu0 %v171
  %243 = vmatpush1.bf16.msra.mxu0 %v170
  %244 = vmatprep.subr.bf16.mxu0 %v167
  %245 = vmatpush1.bf16.msra.mxu0 %v166
  %246 = vmatprep.subr.bf16.mxu0 0
  %247 = vmatpush2.bf16.msra.mxu0 0
  %248 = vmatprep.subr.bf16.mxu0 0
  %249 = vmatpush2.bf16.msra.mxu0 0
  %250 = vmatprep.subr.bf16.mxu0 0
  %251 = vmatpush2.bf16.msra.mxu0 0
  %252 = vmatprep.subr.bf16.mxu0 0
  %253 = vmatpush2.bf16.msra.mxu0 0
  %254 = vmatprep.subr.bf16.mxu0 0
  %255 = vmatpush2.bf16.msra.mxu0 0
  %256 = vmatprep.subr.bf16.mxu0 0
  %257 = vmatpush2.bf16.msra.mxu0 0
  %258 = vmatprep.subr.bf16.mxu0 0
  %259 = vmatpush2.bf16.msra.mxu0 0
  %260 = vmatprep.subr.bf16.mxu0 0
  %261 = vmatpush2.bf16.msra.mxu0 0
  %262 = vmatprep.mubr.bf16.mxu0 0
  %263 = vmatmul.mubr.bf16.gmra.mxu0 %v37
  %v264 = vpop.f32.mrf.mxu0
  %v265 = vadd.f32 0.0, %v264
  %v266 = vpop.f32.mrf.mxu0
  %v267 = vadd.f32 0.0, %v266
  %v268 = vpop.f32.mrf.mxu0
  %v269 = vpop.f32.mrf.mxu0
  %270 = vdwg.mxu0
  %271 = vmatprep.subr.bf16.mxu0 %v197
  %272 = vmatpush1.bf16.msra.mxu0 %v196
  %273 = vmatprep.subr.bf16.mxu0 %v193
  %274 = vmatpush1.bf16.msra.mxu0 %v192
  %275 = vmatprep.subr.bf16.mxu0 %v189
  %276 = vmatpush1.bf16.msra.mxu0 %v188
  %277 = vmatprep.subr.bf16.mxu0 %v185
  %278 = vmatpush1.bf16.msra.mxu0 %v184
  %279 = vmatprep.subr.bf16.mxu0 %v181
  %280 = vmatpush1.bf16.msra.mxu0 %v180
  %281 = vmatprep.subr.bf16.mxu0 %v177
  %282 = vmatpush1.bf16.msra.mxu0 %v176
  %283 = vmatprep.subr.bf16.mxu0 %v173
  %284 = vmatpush1.bf16.msra.mxu0 %v172
  %285 = vmatprep.subr.bf16.mxu0 %v169
  %286 = vmatpush1.bf16.msra.mxu0 %v168
  %287 = vmatprep.subr.bf16.mxu0 0
  %288 = vmatpush2.bf16.msra.mxu0 0
  %289 = vmatprep.subr.bf16.mxu0 0
  %290 = vmatpush2.bf16.msra.mxu0 0
  %291 = vmatprep.subr.bf16.mxu0 0
  %292 = vmatpush2.bf16.msra.mxu0 0
  %293 = vmatprep.subr.bf16.mxu0 0
  %294 = vmatpush2.bf16.msra.mxu0 0
  %295 = vmatprep.subr.bf16.mxu0 0
  %296 = vmatpush2.bf16.msra.mxu0 0
  %297 = vmatprep.subr.bf16.mxu0 0
  %298 = vmatpush2.bf16.msra.mxu0 0
  %299 = vmatprep.subr.bf16.mxu0 0
  %300 = vmatpush2.bf16.msra.mxu0 0
  %301 = vmatprep.subr.bf16.mxu0 0
  %302 = vmatpush2.bf16.msra.mxu0 0
  %303 = vmatprep.mubr.bf16.mxu0 0
  %304 = vmatmul.mubr.bf16.gmra.mxu0 %v37
  %v305 = vpop.f32.mrf.mxu0
  %v306 = vadd.f32 0.0, %v305
  %v307 = vpop.f32.mrf.mxu0
  %v308 = vadd.f32 0.0, %v307
  %v309 = vpop.f32.mrf.mxu0
  %v310 = vpop.f32.mrf.mxu0
  %311 = vdwg.mxu0
  %v312 = vmul.f32 %v265, %v265
  %v313 = vmul.f32 %v267, %v267
  %v314 = vmul.f32 %v265, %v312
  %v315 = vmul.f32 %v267, %v313
  %v316 = vmul.f32 %v314, 0.044715
  %v317 = vmul.f32 %v315, 0.044715
  %v318 = vadd.f32 %v265, %v316
  %v319 = vadd.f32 %v267, %v317
  %v320 = vmul.f32 %v318, 0.7978846
  %v321 = vmul.f32 %v319, 0.7978846
  %v322 = vtanh.pop %v320
  %v323 = vtanh.pop %v321
  %v324 = vadd.f32 %v322, 1.0
  %v325 = vadd.f32 %v323, 1.0
  %v326 = vmul.f32 %v324, 0.5
  %v327 = vmul.f32 %v325, 0.5
  %v328 = vmul.f32 %v265, %v326
  %v329 = vmul.f32 %v267, %v327
  %v330 = vmul.f32 %v328, %v306
  %v331 = vmul.f32 %v329, %v308
  %v332 = vpack.c.bf16 %v330, %v330
  %v333 = vpack.c.bf16 %v331, %v331
  %v334 = vld [vmem:[%s3] sm:$0xf]
  %v335 = vld [vmem:[%s3 + $0x4] sm:$0xf]
  %v336 = vld [vmem:[%s3 + $0x8] sm:$0xf]
  %v337 = vld [vmem:[%s3 + $0xc] sm:$0xf]
  %v338 = vld [vmem:[%s3 + $0x10] sm:$0xf]
  %v339 = vld [vmem:[%s3 + $0x14] sm:$0xf]
  %v340 = vld [vmem:[%s3 + $0x18] sm:$0xf]
  %v341 = vld [vmem:[%s3 + $0x1c] sm:$0xf]
  %v342 = vld [vmem:[%s3 + $0x20] sm:$0xf]
  %v343 = vld [vmem:[%s3 + $0x24] sm:$0xf]
  %v344 = vld [vmem:[%s3 + $0x28] sm:$0xf]
  %v345 = vld [vmem:[%s3 + $0x2c] sm:$0xf]
  %v346 = vld [vmem:[%s3 + $0x30] sm:$0xf]
  %v347 = vld [vmem:[%s3 + $0x34] sm:$0xf]
  %v348 = vld [vmem:[%s3 + $0x38] sm:$0xf]
  %v349 = vld [vmem:[%s3 + $0x3c] sm:$0xf]
  %v350 = vld [vmem:[%s3 + $0x40] sm:$0xf]
  %v351 = vld [vmem:[%s3 + $0x44] sm:$0xf]
  %v352 = vld [vmem:[%s3 + $0x48] sm:$0xf]
  %v353 = vld [vmem:[%s3 + $0x4c] sm:$0xf]
  %v354 = vld [vmem:[%s3 + $0x50] sm:$0xf]
  %v355 = vld [vmem:[%s3 + $0x54] sm:$0xf]
  %v356 = vld [vmem:[%s3 + $0x58] sm:$0xf]
  %v357 = vld [vmem:[%s3 + $0x5c] sm:$0xf]
  %v358 = vld [vmem:[%s3 + $0x60] sm:$0xf]
  %v359 = vld [vmem:[%s3 + $0x64] sm:$0xf]
  %v360 = vld [vmem:[%s3 + $0x68] sm:$0xf]
  %v361 = vld [vmem:[%s3 + $0x6c] sm:$0xf]
  %v362 = vld [vmem:[%s3 + $0x70] sm:$0xf]
  %v363 = vld [vmem:[%s3 + $0x74] sm:$0xf]
  %v364 = vld [vmem:[%s3 + $0x78] sm:$0xf]
  %v365 = vld [vmem:[%s3 + $0x7c] sm:$0xf]
  %v398 = vunpack.c.l.b16 %v334
  %v399 = vunpack.c.l.b16 %v335
  %v400 = vunpack.c.l.b16 %v336
  %v401 = vunpack.c.l.b16 %v337
  %v402 = vunpack.c.l.b16 %v338
  %v403 = vunpack.c.l.b16 %v339
  %v404 = vunpack.c.l.b16 %v340
  %v405 = vunpack.c.l.b16 %v341
  %v406 = vunpack.c.l.b16 %v342
  %v407 = vunpack.c.l.b16 %v343
  %v408 = vunpack.c.l.b16 %v344
  %v409 = vunpack.c.l.b16 %v345
  %v410 = vunpack.c.l.b16 %v346
  %v411 = vunpack.c.l.b16 %v347
  %v412 = vunpack.c.l.b16 %v348
  %v413 = vunpack.c.l.b16 %v349
  %v414 = vunpack.c.l.b16 %v350
  %v415 = vunpack.c.l.b16 %v351
  %v416 = vunpack.c.l.b16 %v352
  %v417 = vunpack.c.l.b16 %v353
  %v418 = vunpack.c.l.b16 %v354
  %v419 = vunpack.c.l.b16 %v355
  %v420 = vunpack.c.l.b16 %v356
  %v421 = vunpack.c.l.b16 %v357
  %v422 = vunpack.c.l.b16 %v358
  %v423 = vunpack.c.l.b16 %v359
  %v424 = vunpack.c.l.b16 %v360
  %v425 = vunpack.c.l.b16 %v361
  %v426 = vunpack.c.l.b16 %v362
  %v427 = vunpack.c.l.b16 %v363
  %v428 = vunpack.c.l.b16 %v364
  %v429 = vunpack.c.l.b16 %v365
  %v430 = vpack.c.b16 %v399, %v398
  %v431 = vpack.c.b16 %v401, %v400
  %v432 = vpack.c.b16 %v403, %v402
  %v433 = vpack.c.b16 %v405, %v404
  %v434 = vpack.c.b16 %v407, %v406
  %v435 = vpack.c.b16 %v409, %v408
  %v436 = vpack.c.b16 %v411, %v410
  %v437 = vpack.c.b16 %v413, %v412
  %v438 = vpack.c.b16 %v415, %v414
  %v439 = vpack.c.b16 %v417, %v416
  %v440 = vpack.c.b16 %v419, %v418
  %v441 = vpack.c.b16 %v421, %v420
  %v442 = vpack.c.b16 %v423, %v422
  %v443 = vpack.c.b16 %v425, %v424
  %v444 = vpack.c.b16 %v427, %v426
  %v445 = vpack.c.b16 %v429, %v428
  %462 = vmatprep.subr.bf16.mxu0 0
  %463 = vmatpush1.bf16.msra.mxu0 %v437
  %464 = vmatprep.subr.bf16.mxu0 0
  %465 = vmatpush1.bf16.msra.mxu0 %v436
  %466 = vmatprep.subr.bf16.mxu0 0
  %467 = vmatpush1.bf16.msra.mxu0 %v435
  %468 = vmatprep.subr.bf16.mxu0 0
  %469 = vmatpush1.bf16.msra.mxu0 %v434
  %470 = vmatprep.subr.bf16.mxu0 0
  %471 = vmatpush1.bf16.msra.mxu0 %v433
  %472 = vmatprep.subr.bf16.mxu0 0
  %473 = vmatpush1.bf16.msra.mxu0 %v432
  %474 = vmatprep.subr.bf16.mxu0 0
  %475 = vmatpush1.bf16.msra.mxu0 %v431
  %476 = vmatprep.subr.bf16.mxu0 0
  %477 = vmatpush1.bf16.msra.mxu0 %v430
  %478 = vmatprep.subr.bf16.mxu0 0
  %479 = vmatpush2.bf16.msra.mxu0 %v445
  %480 = vmatprep.subr.bf16.mxu0 0
  %481 = vmatpush2.bf16.msra.mxu0 %v444
  %482 = vmatprep.subr.bf16.mxu0 0
  %483 = vmatpush2.bf16.msra.mxu0 %v443
  %484 = vmatprep.subr.bf16.mxu0 0
  %485 = vmatpush2.bf16.msra.mxu0 %v442
  %486 = vmatprep.subr.bf16.mxu0 0
  %487 = vmatpush2.bf16.msra.mxu0 %v441
  %488 = vmatprep.subr.bf16.mxu0 0
  %489 = vmatpush2.bf16.msra.mxu0 %v440
  %490 = vmatprep.subr.bf16.mxu0 0
  %491 = vmatpush2.bf16.msra.mxu0 %v439
  %492 = vmatprep.subr.bf16.mxu0 0
  %493 = vmatpush2.bf16.msra.mxu0 %v438
  %494 = vmatprep.mubr.bf16.mxu0 %v333
  %495 = vmatmul.mubr.bf16.gmra.mxu0 %v332
  %v496 = vpop.f32.mrf.mxu0
  %v497 = vadd.f32 0.0, %v496
  %v498 = vpop.f32.mrf.mxu0
  %v499 = vpop.f32.mrf.mxu0
  %v500 = vpop.f32.mrf.mxu0
  %501 = vdwg.mxu0
  %v502 = vadd.f32 %v18, %v497
  %503 = vst [vmem:[%s4] sm:$0x3f] %v502
  // Predicated region
  $region18: #{t5_model_loss.10} parent=0 // pred_check
    _
  $region19: #{t5_model_loss.10} parent=0 // pred_check_branch
    %505 = sbr.rel (0) target = $region21
  $region20: #{t5_model_loss.10} parent=0 // pred_region
    _
  $region21: #{t5_model_loss.10} parent=0 // pred_fallthru
    _
  // Predicated region
  $region22: #{t5_model_loss.10} parent=0 // pred_check
    _
  $region23: #{t5_model_loss.10} parent=0 // pred_check_branch
    %507 = sbr.rel (0) target = $region25
  $region24: #{t5_model_loss.10} parent=0 // pred_region
    _
  $region25: #{t5_model_loss.10} parent=0 // pred_fallthru
    _

</llo_original>
